<compile_context>
chip_gen: v6e
topology: v6e:2x2x1
jax: 0.10.0
libtpu: 0.0.40
codegen_flags: <defaults>
</compile_context>

<pallas_src>
import jax
import jax.numpy as jnp
from jax.experimental import pallas as pl
from jax.experimental.pallas import tpu as pltpu


def rb_kernel(x_ref, w1_ref, b1_ref, w2_ref, b2_ref, o_ref, xpad, ypad):
    # x_ref : (1, C, H, W)     one batch element (VMEM block)
    # w*_ref: (C*C*9,) float32 SMEM, flattened OIHW (row-major)
    # b*_ref: (C,)     float32 SMEM
    # o_ref : (1, C, H, W)
    # xpad, ypad : (C, H+2, W+2) float32 VMEM scratch (zero halo)
    C, Hp, Wp = xpad.shape
    H, W = Hp - 2, Wp - 2

    # Zero the halo scratches each grid step (cheap, and safe even when the
    # batch axis is sharded across TensorCores), then write the interior.
    xpad[...] = jnp.zeros_like(xpad)
    ypad[...] = jnp.zeros_like(ypad)
    xpad[:, 1:H + 1, 1:W + 1] = x_ref[0].astype(jnp.float32)

    def conv3x3(src_ref, w_ref, b_ref):
        # 'valid' 3x3 conv over the zero-padded scratch, VPU shift-MAC.
        # Returns a list of C arrays of shape (H, W) in f32 (bias included).
        accs = [jnp.full((H, W), b_ref[co], dtype=jnp.float32) for co in range(C)]
        for ci in range(C):
            for dy in range(3):
                for dx in range(3):
                    patch = src_ref[ci, dy:dy + H, dx:dx + W]       # (H, W) f32
                    for co in range(C):
                        wv = w_ref[((co * C + ci) * 3 + dy) * 3 + dx]
                        accs[co] = accs[co] + wv * patch
        return accs

    # conv01 + LeakyReLU(0.1) -> interior of ypad (halo stays zero)
    y = conv3x3(xpad, w1_ref, b1_ref)
    for co in range(C):
        a = y[co]
        ypad[co, 1:H + 1, 1:W + 1] = jnp.where(a >= 0.0, a, 0.1 * a)

    # conv02 + residual add, write output in the input dtype
    z = conv3x3(ypad, w2_ref, b2_ref)
    for co in range(C):
        res = x_ref[0, co].astype(jnp.float32)
        o_ref[0, co] = (z[co] + res).astype(o_ref.dtype)


@jax.jit
def rb_forward(x, w1, b1, w2, b2):
    """x: (B, C, H, W); w*: (C, C, 3, 3) OIHW; b*: (C,)  -- PyTorch conventions."""
    B, C, H, W = x.shape

    w1_flat = w1.astype(jnp.float32).reshape(-1)     # OIHW row-major -> (C*C*9,)
    w2_flat = w2.astype(jnp.float32).reshape(-1)
    b1_f = b1.astype(jnp.float32)
    b2_f = b2.astype(jnp.float32)

    smem = pl.BlockSpec(memory_space=pltpu.MemorySpace.SMEM)

    return pl.pallas_call(
        rb_kernel,
        out_shape=jax.ShapeDtypeStruct((B, C, H, W), x.dtype),
        grid_spec=pltpu.PrefetchScalarGridSpec(
            num_scalar_prefetch=0,
            grid=(B,),
            in_specs=[
                pl.BlockSpec((1, C, H, W), lambda b: (b, 0, 0, 0)),
                smem, smem, smem, smem,
            ],
            out_specs=pl.BlockSpec((1, C, H, W), lambda b: (b, 0, 0, 0)),
            scratch_shapes=[
                pltpu.VMEM((C, H + 2, W + 2), jnp.float32),   # padded input
                pltpu.VMEM((C, H + 2, W + 2), jnp.float32),   # padded activation
            ],
        ),
        compiler_params=pltpu.CompilerParams(
            dimension_semantics=("parallel",),
        ),
    )(x, w1_flat, b1_f, w2_flat, b2_f)


def rb_reference(x, w1, b1, w2, b2):
    """Pure-JAX reference mirroring the PyTorch forward exactly (NCHW)."""
    def conv(inp, w, b):
        y = jax.lax.conv_general_dilated(
            inp, w, window_strides=(1, 1), padding=((1, 1), (1, 1)),
            dimension_numbers=("NCHW", "OIHW", "NCHW"))
        return y + b.reshape(1, -1, 1, 1)

    y = conv(x, w1, b1)
    y = jnp.where(y >= 0.0, y, 0.1 * y)            # LeakyReLU(0.1)
    y = conv(y, w2, b2)
    return y + x


if __name__ == "__main__":
    B, C, H, W = 2, 4, 16, 16
    key = jax.random.PRNGKey(0)
    kx, kw1, kb1, kw2, kb2 = jax.random.split(key, 5)

    x = jax.random.normal(kx, (B, C, H, W), dtype=jnp.float32)

    # Deterministic synthetic parameters (shapes from nn.Conv2d(channel, channel, 3, 1, 1))
    fan_in = C * 3 * 3
    scale = 1.0 / (fan_in ** 0.5)
    w1 = jax.random.uniform(kw1, (C, C, 3, 3), jnp.float32, -scale, scale)
    b1 = jax.random.uniform(kb1, (C,), jnp.float32, -scale, scale)
    w2 = jax.random.uniform(kw2, (C, C, 3, 3), jnp.float32, -scale, scale)
    b2 = jax.random.uniform(kb2, (C,), jnp.float32, -scale, scale)

    out = jax.block_until_ready(rb_forward(x, w1, b1, w2, b2))

    ref = rb_reference(x, w1, b1, w2, b2)
    assert out.shape == ref.shape == (B, C, H, W)
    err = float(jnp.max(jnp.abs(out - ref)))
    assert err < 1e-4, f"Pallas RB output mismatch vs reference: {err}"

    print("KERNEL_OK")
</pallas_src>

<mosaic_0001>
module attributes {stable_mosaic.version = 11 : i64} {
  func.func @rb_kernel(%arg0: i32, %arg1: memref<1x4x16x16xf32, #tpu.memory_space<vmem>>, %arg2: memref<144xf32, #tpu.memory_space<smem>>, %arg3: memref<4xf32, #tpu.memory_space<smem>>, %arg4: memref<144xf32, #tpu.memory_space<smem>>, %arg5: memref<4xf32, #tpu.memory_space<smem>>, %arg6: memref<1x4x16x16xf32, #tpu.memory_space<vmem>>, %arg7: memref<4x18x18xf32, #tpu.memory_space<vmem>>, %arg8: memref<4x18x18xf32, #tpu.memory_space<vmem>>) attributes {dimension_semantics = [#tpu.dimension_semantics<parallel>], iteration_bounds = array<i64: 2>, scalar_prefetch = 0 : i64, scratch_operands = 2 : i64, tpu.core_type = #tpu.core_type<tc>, window_params = [{transform_indices = @transform_0, window_bounds = array<i64: 1, 4, 16, 16>}, {transform_indices = @transform_1, window_bounds = array<i64: 144>}, {transform_indices = @transform_2, window_bounds = array<i64: 4>}, {transform_indices = @transform_3, window_bounds = array<i64: 144>}, {transform_indices = @transform_4, window_bounds = array<i64: 4>}, {transform_indices = @transform_5, window_bounds = array<i64: 1, 4, 16, 16>}]} {
    %cst = arith.constant 0.000000e+00 : f32
    %0 = vector.broadcast %cst : f32 to vector<4x18x18xf32>
    %c0 = arith.constant 0 : index
    %c0_0 = arith.constant 0 : index
    %c0_1 = arith.constant 0 : index
    %1 = vector.load %arg7[%c0, %c0_0, %c0_1] : memref<4x18x18xf32, #tpu.memory_space<vmem>>, vector<4x18x18xf32>
    tpu.vector_store %arg7[%c0, %c0_0, %c0_1], %0 {strides = array<i32>} : memref<4x18x18xf32, #tpu.memory_space<vmem>>, vector<4x18x18xf32>,
    %cst_2 = arith.constant 0.000000e+00 : f32
    %2 = vector.broadcast %cst_2 : f32 to vector<4x18x18xf32>
    %c0_3 = arith.constant 0 : index
    %c0_4 = arith.constant 0 : index
    %c0_5 = arith.constant 0 : index
    %3 = vector.load %arg8[%c0_3, %c0_4, %c0_5] : memref<4x18x18xf32, #tpu.memory_space<vmem>>, vector<4x18x18xf32>
    tpu.vector_store %arg8[%c0_3, %c0_4, %c0_5], %2 {strides = array<i32>} : memref<4x18x18xf32, #tpu.memory_space<vmem>>, vector<4x18x18xf32>,
    %c0_6 = arith.constant 0 : index
    %c0_7 = arith.constant 0 : index
    %c0_8 = arith.constant 0 : index
    %c0_9 = arith.constant 0 : index
    %4 = vector.load %arg1[%c0_6, %c0_7, %c0_8, %c0_9] : memref<1x4x16x16xf32, #tpu.memory_space<vmem>>, vector<1x4x16x16xf32>
    %5 = vector.shape_cast %4 : vector<1x4x16x16xf32> to vector<4x16x16xf32>
    %c0_10 = arith.constant 0 : index
    %c1 = arith.constant 1 : index
    %c1_11 = arith.constant 1 : index
    %6 = vector.load %arg7[%c0_10, %c1, %c1_11] : memref<4x18x18xf32, #tpu.memory_space<vmem>>, vector<4x16x16xf32>
    tpu.vector_store %arg7[%c0_10, %c1, %c1_11], %5 {strides = array<i32>} : memref<4x18x18xf32, #tpu.memory_space<vmem>>, vector<4x16x16xf32>,
    %c0_12 = arith.constant 0 : index
    %7 = memref.load %arg3[%c0_12] : memref<4xf32, #tpu.memory_space<smem>>
    %8 = vector.broadcast %7 : f32 to vector<16x16xf32>
    %c1_13 = arith.constant 1 : index
    %9 = memref.load %arg3[%c1_13] : memref<4xf32, #tpu.memory_space<smem>>
    %10 = vector.broadcast %9 : f32 to vector<16x16xf32>
    %c2 = arith.constant 2 : index
    %11 = memref.load %arg3[%c2] : memref<4xf32, #tpu.memory_space<smem>>
    %12 = vector.broadcast %11 : f32 to vector<16x16xf32>
    %c3 = arith.constant 3 : index
    %13 = memref.load %arg3[%c3] : memref<4xf32, #tpu.memory_space<smem>>
    %14 = vector.broadcast %13 : f32 to vector<16x16xf32>
    %c0_14 = arith.constant 0 : index
    %c0_15 = arith.constant 0 : index
    %c0_16 = arith.constant 0 : index
    %15 = vector.load %arg7[%c0_14, %c0_15, %c0_16] : memref<4x18x18xf32, #tpu.memory_space<vmem>>, vector<1x16x16xf32>
    %16 = vector.shape_cast %15 : vector<1x16x16xf32> to vector<16x16xf32>
    %c0_17 = arith.constant 0 : index
    %17 = memref.load %arg2[%c0_17] : memref<144xf32, #tpu.memory_space<smem>>
    %18 = vector.broadcast %17 : f32 to vector<16x16xf32>
    %19 = arith.mulf %18, %16 : vector<16x16xf32>
    %20 = arith.addf %8, %19 : vector<16x16xf32>
    %c36 = arith.constant 36 : index
    %21 = memref.load %arg2[%c36] : memref<144xf32, #tpu.memory_space<smem>>
    %22 = vector.broadcast %21 : f32 to vector<16x16xf32>
    %23 = arith.mulf %22, %16 : vector<16x16xf32>
    %24 = arith.addf %10, %23 : vector<16x16xf32>
    %c72 = arith.constant 72 : index
    %25 = memref.load %arg2[%c72] : memref<144xf32, #tpu.memory_space<smem>>
    %26 = vector.broadcast %25 : f32 to vector<16x16xf32>
    %27 = arith.mulf %26, %16 : vector<16x16xf32>
    %28 = arith.addf %12, %27 : vector<16x16xf32>
    %c108 = arith.constant 108 : index
    %29 = memref.load %arg2[%c108] : memref<144xf32, #tpu.memory_space<smem>>
    %30 = vector.broadcast %29 : f32 to vector<16x16xf32>
    %31 = arith.mulf %30, %16 : vector<16x16xf32>
    %32 = arith.addf %14, %31 : vector<16x16xf32>
    %c0_18 = arith.constant 0 : index
    %c0_19 = arith.constant 0 : index
    %c1_20 = arith.constant 1 : index
    %33 = vector.load %arg7[%c0_18, %c0_19, %c1_20] : memref<4x18x18xf32, #tpu.memory_space<vmem>>, vector<1x16x16xf32>
    %34 = vector.shape_cast %33 : vector<1x16x16xf32> to vector<16x16xf32>
    %c1_21 = arith.constant 1 : index
    %35 = memref.load %arg2[%c1_21] : memref<144xf32, #tpu.memory_space<smem>>
    %36 = vector.broadcast %35 : f32 to vector<16x16xf32>
    %37 = arith.mulf %36, %34 : vector<16x16xf32>
    %38 = arith.addf %20, %37 : vector<16x16xf32>
    %c37 = arith.constant 37 : index
    %39 = memref.load %arg2[%c37] : memref<144xf32, #tpu.memory_space<smem>>
    %40 = vector.broadcast %39 : f32 to vector<16x16xf32>
    %41 = arith.mulf %40, %34 : vector<16x16xf32>
    %42 = arith.addf %24, %41 : vector<16x16xf32>
    %c73 = arith.constant 73 : index
    %43 = memref.load %arg2[%c73] : memref<144xf32, #tpu.memory_space<smem>>
    %44 = vector.broadcast %43 : f32 to vector<16x16xf32>
    %45 = arith.mulf %44, %34 : vector<16x16xf32>
    %46 = arith.addf %28, %45 : vector<16x16xf32>
    %c109 = arith.constant 109 : index
    %47 = memref.load %arg2[%c109] : memref<144xf32, #tpu.memory_space<smem>>
    %48 = vector.broadcast %47 : f32 to vector<16x16xf32>
    %49 = arith.mulf %48, %34 : vector<16x16xf32>
    %50 = arith.addf %32, %49 : vector<16x16xf32>
    %c0_22 = arith.constant 0 : index
    %c0_23 = arith.constant 0 : index
    %c2_24 = arith.constant 2 : index
    %51 = vector.load %arg7[%c0_22, %c0_23, %c2_24] : memref<4x18x18xf32, #tpu.memory_space<vmem>>, vector<1x16x16xf32>
    %52 = vector.shape_cast %51 : vector<1x16x16xf32> to vector<16x16xf32>
    %c2_25 = arith.constant 2 : index
    %53 = memref.load %arg2[%c2_25] : memref<144xf32, #tpu.memory_space<smem>>
    %54 = vector.broadcast %53 : f32 to vector<16x16xf32>
    %55 = arith.mulf %54, %52 : vector<16x16xf32>
    %56 = arith.addf %38, %55 : vector<16x16xf32>
    %c38 = arith.constant 38 : index
    %57 = memref.load %arg2[%c38] : memref<144xf32, #tpu.memory_space<smem>>
    %58 = vector.broadcast %57 : f32 to vector<16x16xf32>
    %59 = arith.mulf %58, %52 : vector<16x16xf32>
    %60 = arith.addf %42, %59 : vector<16x16xf32>
    %c74 = arith.constant 74 : index
    %61 = memref.load %arg2[%c74] : memref<144xf32, #tpu.memory_space<smem>>
    %62 = vector.broadcast %61 : f32 to vector<16x16xf32>
    %63 = arith.mulf %62, %52 : vector<16x16xf32>
    %64 = arith.addf %46, %63 : vector<16x16xf32>
    %c110 = arith.constant 110 : index
    %65 = memref.load %arg2[%c110] : memref<144xf32, #tpu.memory_space<smem>>
    %66 = vector.broadcast %65 : f32 to vector<16x16xf32>
    %67 = arith.mulf %66, %52 : vector<16x16xf32>
    %68 = arith.addf %50, %67 : vector<16x16xf32>
    %c0_26 = arith.constant 0 : index
    %c1_27 = arith.constant 1 : index
    %c0_28 = arith.constant 0 : index
    %69 = vector.load %arg7[%c0_26, %c1_27, %c0_28] : memref<4x18x18xf32, #tpu.memory_space<vmem>>, vector<1x16x16xf32>
    %70 = vector.shape_cast %69 : vector<1x16x16xf32> to vector<16x16xf32>
    %c3_29 = arith.constant 3 : index
    %71 = memref.load %arg2[%c3_29] : memref<144xf32, #tpu.memory_space<smem>>
    %72 = vector.broadcast %71 : f32 to vector<16x16xf32>
    %73 = arith.mulf %72, %70 : vector<16x16xf32>
    %74 = arith.addf %56, %73 : vector<16x16xf32>
    %c39 = arith.constant 39 : index
    %75 = memref.load %arg2[%c39] : memref<144xf32, #tpu.memory_space<smem>>
    %76 = vector.broadcast %75 : f32 to vector<16x16xf32>
    %77 = arith.mulf %76, %70 : vector<16x16xf32>
    %78 = arith.addf %60, %77 : vector<16x16xf32>
    %c75 = arith.constant 75 : index
    %79 = memref.load %arg2[%c75] : memref<144xf32, #tpu.memory_space<smem>>
    %80 = vector.broadcast %79 : f32 to vector<16x16xf32>
    %81 = arith.mulf %80, %70 : vector<16x16xf32>
    %82 = arith.addf %64, %81 : vector<16x16xf32>
    %c111 = arith.constant 111 : index
    %83 = memref.load %arg2[%c111] : memref<144xf32, #tpu.memory_space<smem>>
    %84 = vector.broadcast %83 : f32 to vector<16x16xf32>
    %85 = arith.mulf %84, %70 : vector<16x16xf32>
    %86 = arith.addf %68, %85 : vector<16x16xf32>
    %c0_30 = arith.constant 0 : index
    %c1_31 = arith.constant 1 : index
    %c1_32 = arith.constant 1 : index
    %87 = vector.load %arg7[%c0_30, %c1_31, %c1_32] : memref<4x18x18xf32, #tpu.memory_space<vmem>>, vector<1x16x16xf32>
    %88 = vector.shape_cast %87 : vector<1x16x16xf32> to vector<16x16xf32>
    %c4 = arith.constant 4 : index
    %89 = memref.load %arg2[%c4] : memref<144xf32, #tpu.memory_space<smem>>
    %90 = vector.broadcast %89 : f32 to vector<16x16xf32>
    %91 = arith.mulf %90, %88 : vector<16x16xf32>
    %92 = arith.addf %74, %91 : vector<16x16xf32>
    %c40 = arith.constant 40 : index
    %93 = memref.load %arg2[%c40] : memref<144xf32, #tpu.memory_space<smem>>
    %94 = vector.broadcast %93 : f32 to vector<16x16xf32>
    %95 = arith.mulf %94, %88 : vector<16x16xf32>
    %96 = arith.addf %78, %95 : vector<16x16xf32>
    %c76 = arith.constant 76 : index
    %97 = memref.load %arg2[%c76] : memref<144xf32, #tpu.memory_space<smem>>
    %98 = vector.broadcast %97 : f32 to vector<16x16xf32>
    %99 = arith.mulf %98, %88 : vector<16x16xf32>
    %100 = arith.addf %82, %99 : vector<16x16xf32>
    %c112 = arith.constant 112 : index
    %101 = memref.load %arg2[%c112] : memref<144xf32, #tpu.memory_space<smem>>
    %102 = vector.broadcast %101 : f32 to vector<16x16xf32>
    %103 = arith.mulf %102, %88 : vector<16x16xf32>
    %104 = arith.addf %86, %103 : vector<16x16xf32>
    %c0_33 = arith.constant 0 : index
    %c1_34 = arith.constant 1 : index
    %c2_35 = arith.constant 2 : index
    %105 = vector.load %arg7[%c0_33, %c1_34, %c2_35] : memref<4x18x18xf32, #tpu.memory_space<vmem>>, vector<1x16x16xf32>
    %106 = vector.shape_cast %105 : vector<1x16x16xf32> to vector<16x16xf32>
    %c5 = arith.constant 5 : index
    %107 = memref.load %arg2[%c5] : memref<144xf32, #tpu.memory_space<smem>>
    %108 = vector.broadcast %107 : f32 to vector<16x16xf32>
    %109 = arith.mulf %108, %106 : vector<16x16xf32>
    %110 = arith.addf %92, %109 : vector<16x16xf32>
    %c41 = arith.constant 41 : index
    %111 = memref.load %arg2[%c41] : memref<144xf32, #tpu.memory_space<smem>>
    %112 = vector.broadcast %111 : f32 to vector<16x16xf32>
    %113 = arith.mulf %112, %106 : vector<16x16xf32>
    %114 = arith.addf %96, %113 : vector<16x16xf32>
    %c77 = arith.constant 77 : index
    %115 = memref.load %arg2[%c77] : memref<144xf32, #tpu.memory_space<smem>>
    %116 = vector.broadcast %115 : f32 to vector<16x16xf32>
    %117 = arith.mulf %116, %106 : vector<16x16xf32>
    %118 = arith.addf %100, %117 : vector<16x16xf32>
    %c113 = arith.constant 113 : index
    %119 = memref.load %arg2[%c113] : memref<144xf32, #tpu.memory_space<smem>>
    %120 = vector.broadcast %119 : f32 to vector<16x16xf32>
    %121 = arith.mulf %120, %106 : vector<16x16xf32>
    %122 = arith.addf %104, %121 : vector<16x16xf32>
    %c0_36 = arith.constant 0 : index
    %c2_37 = arith.constant 2 : index
    %c0_38 = arith.constant 0 : index
    %123 = vector.load %arg7[%c0_36, %c2_37, %c0_38] : memref<4x18x18xf32, #tpu.memory_space<vmem>>, vector<1x16x16xf32>
    %124 = vector.shape_cast %123 : vector<1x16x16xf32> to vector<16x16xf32>
    %c6 = arith.constant 6 : index
    %125 = memref.load %arg2[%c6] : memref<144xf32, #tpu.memory_space<smem>>
    %126 = vector.broadcast %125 : f32 to vector<16x16xf32>
    %127 = arith.mulf %126, %124 : vector<16x16xf32>
    %128 = arith.addf %110, %127 : vector<16x16xf32>
    %c42 = arith.constant 42 : index
    %129 = memref.load %arg2[%c42] : memref<144xf32, #tpu.memory_space<smem>>
    %130 = vector.broadcast %129 : f32 to vector<16x16xf32>
    %131 = arith.mulf %130, %124 : vector<16x16xf32>
    %132 = arith.addf %114, %131 : vector<16x16xf32>
    %c78 = arith.constant 78 : index
    %133 = memref.load %arg2[%c78] : memref<144xf32, #tpu.memory_space<smem>>
    %134 = vector.broadcast %133 : f32 to vector<16x16xf32>
    %135 = arith.mulf %134, %124 : vector<16x16xf32>
    %136 = arith.addf %118, %135 : vector<16x16xf32>
    %c114 = arith.constant 114 : index
    %137 = memref.load %arg2[%c114] : memref<144xf32, #tpu.memory_space<smem>>
    %138 = vector.broadcast %137 : f32 to vector<16x16xf32>
    %139 = arith.mulf %138, %124 : vector<16x16xf32>
    %140 = arith.addf %122, %139 : vector<16x16xf32>
    %c0_39 = arith.constant 0 : index
    %c2_40 = arith.constant 2 : index
    %c1_41 = arith.constant 1 : index
    %141 = vector.load %arg7[%c0_39, %c2_40, %c1_41] : memref<4x18x18xf32, #tpu.memory_space<vmem>>, vector<1x16x16xf32>
    %142 = vector.shape_cast %141 : vector<1x16x16xf32> to vector<16x16xf32>
    %c7 = arith.constant 7 : index
    %143 = memref.load %arg2[%c7] : memref<144xf32, #tpu.memory_space<smem>>
    %144 = vector.broadcast %143 : f32 to vector<16x16xf32>
    %145 = arith.mulf %144, %142 : vector<16x16xf32>
    %146 = arith.addf %128, %145 : vector<16x16xf32>
    %c43 = arith.constant 43 : index
    %147 = memref.load %arg2[%c43] : memref<144xf32, #tpu.memory_space<smem>>
    %148 = vector.broadcast %147 : f32 to vector<16x16xf32>
    %149 = arith.mulf %148, %142 : vector<16x16xf32>
    %150 = arith.addf %132, %149 : vector<16x16xf32>
    %c79 = arith.constant 79 : index
    %151 = memref.load %arg2[%c79] : memref<144xf32, #tpu.memory_space<smem>>
    %152 = vector.broadcast %151 : f32 to vector<16x16xf32>
    %153 = arith.mulf %152, %142 : vector<16x16xf32>
    %154 = arith.addf %136, %153 : vector<16x16xf32>
    %c115 = arith.constant 115 : index
    %155 = memref.load %arg2[%c115] : memref<144xf32, #tpu.memory_space<smem>>
    %156 = vector.broadcast %155 : f32 to vector<16x16xf32>
    %157 = arith.mulf %156, %142 : vector<16x16xf32>
    %158 = arith.addf %140, %157 : vector<16x16xf32>
    %c0_42 = arith.constant 0 : index
    %c2_43 = arith.constant 2 : index
    %c2_44 = arith.constant 2 : index
    %159 = vector.load %arg7[%c0_42, %c2_43, %c2_44] : memref<4x18x18xf32, #tpu.memory_space<vmem>>, vector<1x16x16xf32>
    %160 = vector.shape_cast %159 : vector<1x16x16xf32> to vector<16x16xf32>
    %c8 = arith.constant 8 : index
    %161 = memref.load %arg2[%c8] : memref<144xf32, #tpu.memory_space<smem>>
    %162 = vector.broadcast %161 : f32 to vector<16x16xf32>
    %163 = arith.mulf %162, %160 : vector<16x16xf32>
    %164 = arith.addf %146, %163 : vector<16x16xf32>
    %c44 = arith.constant 44 : index
    %165 = memref.load %arg2[%c44] : memref<144xf32, #tpu.memory_space<smem>>
    %166 = vector.broadcast %165 : f32 to vector<16x16xf32>
    %167 = arith.mulf %166, %160 : vector<16x16xf32>
    %168 = arith.addf %150, %167 : vector<16x16xf32>
    %c80 = arith.constant 80 : index
    %169 = memref.load %arg2[%c80] : memref<144xf32, #tpu.memory_space<smem>>
    %170 = vector.broadcast %169 : f32 to vector<16x16xf32>
    %171 = arith.mulf %170, %160 : vector<16x16xf32>
    %172 = arith.addf %154, %171 : vector<16x16xf32>
    %c116 = arith.constant 116 : index
    %173 = memref.load %arg2[%c116] : memref<144xf32, #tpu.memory_space<smem>>
    %174 = vector.broadcast %173 : f32 to vector<16x16xf32>
    %175 = arith.mulf %174, %160 : vector<16x16xf32>
    %176 = arith.addf %158, %175 : vector<16x16xf32>
    %c1_45 = arith.constant 1 : index
    %c0_46 = arith.constant 0 : index
    %c0_47 = arith.constant 0 : index
    %177 = vector.load %arg7[%c1_45, %c0_46, %c0_47] : memref<4x18x18xf32, #tpu.memory_space<vmem>>, vector<1x16x16xf32>
    %178 = vector.shape_cast %177 : vector<1x16x16xf32> to vector<16x16xf32>
    %c9 = arith.constant 9 : index
    %179 = memref.load %arg2[%c9] : memref<144xf32, #tpu.memory_space<smem>>
    %180 = vector.broadcast %179 : f32 to vector<16x16xf32>
    %181 = arith.mulf %180, %178 : vector<16x16xf32>
    %182 = arith.addf %164, %181 : vector<16x16xf32>
    %c45 = arith.constant 45 : index
    %183 = memref.load %arg2[%c45] : memref<144xf32, #tpu.memory_space<smem>>
    %184 = vector.broadcast %183 : f32 to vector<16x16xf32>
    %185 = arith.mulf %184, %178 : vector<16x16xf32>
    %186 = arith.addf %168, %185 : vector<16x16xf32>
    %c81 = arith.constant 81 : index
    %187 = memref.load %arg2[%c81] : memref<144xf32, #tpu.memory_space<smem>>
    %188 = vector.broadcast %187 : f32 to vector<16x16xf32>
    %189 = arith.mulf %188, %178 : vector<16x16xf32>
    %190 = arith.addf %172, %189 : vector<16x16xf32>
    %c117 = arith.constant 117 : index
    %191 = memref.load %arg2[%c117] : memref<144xf32, #tpu.memory_space<smem>>
    %192 = vector.broadcast %191 : f32 to vector<16x16xf32>
    %193 = arith.mulf %192, %178 : vector<16x16xf32>
    %194 = arith.addf %176, %193 : vector<16x16xf32>
    %c1_48 = arith.constant 1 : index
    %c0_49 = arith.constant 0 : index
    %c1_50 = arith.constant 1 : index
    %195 = vector.load %arg7[%c1_48, %c0_49, %c1_50] : memref<4x18x18xf32, #tpu.memory_space<vmem>>, vector<1x16x16xf32>
    %196 = vector.shape_cast %195 : vector<1x16x16xf32> to vector<16x16xf32>
    %c10 = arith.constant 10 : index
    %197 = memref.load %arg2[%c10] : memref<144xf32, #tpu.memory_space<smem>>
    %198 = vector.broadcast %197 : f32 to vector<16x16xf32>
    %199 = arith.mulf %198, %196 : vector<16x16xf32>
    %200 = arith.addf %182, %199 : vector<16x16xf32>
    %c46 = arith.constant 46 : index
    %201 = memref.load %arg2[%c46] : memref<144xf32, #tpu.memory_space<smem>>
    %202 = vector.broadcast %201 : f32 to vector<16x16xf32>
    %203 = arith.mulf %202, %196 : vector<16x16xf32>
    %204 = arith.addf %186, %203 : vector<16x16xf32>
    %c82 = arith.constant 82 : index
    %205 = memref.load %arg2[%c82] : memref<144xf32, #tpu.memory_space<smem>>
    %206 = vector.broadcast %205 : f32 to vector<16x16xf32>
    %207 = arith.mulf %206, %196 : vector<16x16xf32>
    %208 = arith.addf %190, %207 : vector<16x16xf32>
    %c118 = arith.constant 118 : index
    %209 = memref.load %arg2[%c118] : memref<144xf32, #tpu.memory_space<smem>>
    %210 = vector.broadcast %209 : f32 to vector<16x16xf32>
    %211 = arith.mulf %210, %196 : vector<16x16xf32>
    %212 = arith.addf %194, %211 : vector<16x16xf32>
    %c1_51 = arith.constant 1 : index
    %c0_52 = arith.constant 0 : index
    %c2_53 = arith.constant 2 : index
    %213 = vector.load %arg7[%c1_51, %c0_52, %c2_53] : memref<4x18x18xf32, #tpu.memory_space<vmem>>, vector<1x16x16xf32>
    %214 = vector.shape_cast %213 : vector<1x16x16xf32> to vector<16x16xf32>
    %c11 = arith.constant 11 : index
    %215 = memref.load %arg2[%c11] : memref<144xf32, #tpu.memory_space<smem>>
    %216 = vector.broadcast %215 : f32 to vector<16x16xf32>
    %217 = arith.mulf %216, %214 : vector<16x16xf32>
    %218 = arith.addf %200, %217 : vector<16x16xf32>
    %c47 = arith.constant 47 : index
    %219 = memref.load %arg2[%c47] : memref<144xf32, #tpu.memory_space<smem>>
    %220 = vector.broadcast %219 : f32 to vector<16x16xf32>
    %221 = arith.mulf %220, %214 : vector<16x16xf32>
    %222 = arith.addf %204, %221 : vector<16x16xf32>
    %c83 = arith.constant 83 : index
    %223 = memref.load %arg2[%c83] : memref<144xf32, #tpu.memory_space<smem>>
    %224 = vector.broadcast %223 : f32 to vector<16x16xf32>
    %225 = arith.mulf %224, %214 : vector<16x16xf32>
    %226 = arith.addf %208, %225 : vector<16x16xf32>
    %c119 = arith.constant 119 : index
    %227 = memref.load %arg2[%c119] : memref<144xf32, #tpu.memory_space<smem>>
    %228 = vector.broadcast %227 : f32 to vector<16x16xf32>
    %229 = arith.mulf %228, %214 : vector<16x16xf32>
    %230 = arith.addf %212, %229 : vector<16x16xf32>
    %c1_54 = arith.constant 1 : index
    %c1_55 = arith.constant 1 : index
    %c0_56 = arith.constant 0 : index
    %231 = vector.load %arg7[%c1_54, %c1_55, %c0_56] : memref<4x18x18xf32, #tpu.memory_space<vmem>>, vector<1x16x16xf32>
    %232 = vector.shape_cast %231 : vector<1x16x16xf32> to vector<16x16xf32>
    %c12 = arith.constant 12 : index
    %233 = memref.load %arg2[%c12] : memref<144xf32, #tpu.memory_space<smem>>
    %234 = vector.broadcast %233 : f32 to vector<16x16xf32>
    %235 = arith.mulf %234, %232 : vector<16x16xf32>
    %236 = arith.addf %218, %235 : vector<16x16xf32>
    %c48 = arith.constant 48 : index
    %237 = memref.load %arg2[%c48] : memref<144xf32, #tpu.memory_space<smem>>
    %238 = vector.broadcast %237 : f32 to vector<16x16xf32>
    %239 = arith.mulf %238, %232 : vector<16x16xf32>
    %240 = arith.addf %222, %239 : vector<16x16xf32>
    %c84 = arith.constant 84 : index
    %241 = memref.load %arg2[%c84] : memref<144xf32, #tpu.memory_space<smem>>
    %242 = vector.broadcast %241 : f32 to vector<16x16xf32>
    %243 = arith.mulf %242, %232 : vector<16x16xf32>
    %244 = arith.addf %226, %243 : vector<16x16xf32>
    %c120 = arith.constant 120 : index
    %245 = memref.load %arg2[%c120] : memref<144xf32, #tpu.memory_space<smem>>
    %246 = vector.broadcast %245 : f32 to vector<16x16xf32>
    %247 = arith.mulf %246, %232 : vector<16x16xf32>
    %248 = arith.addf %230, %247 : vector<16x16xf32>
    %c1_57 = arith.constant 1 : index
    %c1_58 = arith.constant 1 : index
    %c1_59 = arith.constant 1 : index
    %249 = vector.load %arg7[%c1_57, %c1_58, %c1_59] : memref<4x18x18xf32, #tpu.memory_space<vmem>>, vector<1x16x16xf32>
    %250 = vector.shape_cast %249 : vector<1x16x16xf32> to vector<16x16xf32>
    %c13 = arith.constant 13 : index
    %251 = memref.load %arg2[%c13] : memref<144xf32, #tpu.memory_space<smem>>
    %252 = vector.broadcast %251 : f32 to vector<16x16xf32>
    %253 = arith.mulf %252, %250 : vector<16x16xf32>
    %254 = arith.addf %236, %253 : vector<16x16xf32>
    %c49 = arith.constant 49 : index
    %255 = memref.load %arg2[%c49] : memref<144xf32, #tpu.memory_space<smem>>
    %256 = vector.broadcast %255 : f32 to vector<16x16xf32>
    %257 = arith.mulf %256, %250 : vector<16x16xf32>
    %258 = arith.addf %240, %257 : vector<16x16xf32>
    %c85 = arith.constant 85 : index
    %259 = memref.load %arg2[%c85] : memref<144xf32, #tpu.memory_space<smem>>
    %260 = vector.broadcast %259 : f32 to vector<16x16xf32>
    %261 = arith.mulf %260, %250 : vector<16x16xf32>
    %262 = arith.addf %244, %261 : vector<16x16xf32>
    %c121 = arith.constant 121 : index
    %263 = memref.load %arg2[%c121] : memref<144xf32, #tpu.memory_space<smem>>
    %264 = vector.broadcast %263 : f32 to vector<16x16xf32>
    %265 = arith.mulf %264, %250 : vector<16x16xf32>
    %266 = arith.addf %248, %265 : vector<16x16xf32>
    %c1_60 = arith.constant 1 : index
    %c1_61 = arith.constant 1 : index
    %c2_62 = arith.constant 2 : index
    %267 = vector.load %arg7[%c1_60, %c1_61, %c2_62] : memref<4x18x18xf32, #tpu.memory_space<vmem>>, vector<1x16x16xf32>
    %268 = vector.shape_cast %267 : vector<1x16x16xf32> to vector<16x16xf32>
    %c14 = arith.constant 14 : index
    %269 = memref.load %arg2[%c14] : memref<144xf32, #tpu.memory_space<smem>>
    %270 = vector.broadcast %269 : f32 to vector<16x16xf32>
    %271 = arith.mulf %270, %268 : vector<16x16xf32>
    %272 = arith.addf %254, %271 : vector<16x16xf32>
    %c50 = arith.constant 50 : index
    %273 = memref.load %arg2[%c50] : memref<144xf32, #tpu.memory_space<smem>>
    %274 = vector.broadcast %273 : f32 to vector<16x16xf32>
    %275 = arith.mulf %274, %268 : vector<16x16xf32>
    %276 = arith.addf %258, %275 : vector<16x16xf32>
    %c86 = arith.constant 86 : index
    %277 = memref.load %arg2[%c86] : memref<144xf32, #tpu.memory_space<smem>>
    %278 = vector.broadcast %277 : f32 to vector<16x16xf32>
    %279 = arith.mulf %278, %268 : vector<16x16xf32>
    %280 = arith.addf %262, %279 : vector<16x16xf32>
    %c122 = arith.constant 122 : index
    %281 = memref.load %arg2[%c122] : memref<144xf32, #tpu.memory_space<smem>>
    %282 = vector.broadcast %281 : f32 to vector<16x16xf32>
    %283 = arith.mulf %282, %268 : vector<16x16xf32>
    %284 = arith.addf %266, %283 : vector<16x16xf32>
    %c1_63 = arith.constant 1 : index
    %c2_64 = arith.constant 2 : index
    %c0_65 = arith.constant 0 : index
    %285 = vector.load %arg7[%c1_63, %c2_64, %c0_65] : memref<4x18x18xf32, #tpu.memory_space<vmem>>, vector<1x16x16xf32>
    %286 = vector.shape_cast %285 : vector<1x16x16xf32> to vector<16x16xf32>
    %c15 = arith.constant 15 : index
    %287 = memref.load %arg2[%c15] : memref<144xf32, #tpu.memory_space<smem>>
    %288 = vector.broadcast %287 : f32 to vector<16x16xf32>
    %289 = arith.mulf %288, %286 : vector<16x16xf32>
    %290 = arith.addf %272, %289 : vector<16x16xf32>
    %c51 = arith.constant 51 : index
    %291 = memref.load %arg2[%c51] : memref<144xf32, #tpu.memory_space<smem>>
    %292 = vector.broadcast %291 : f32 to vector<16x16xf32>
    %293 = arith.mulf %292, %286 : vector<16x16xf32>
    %294 = arith.addf %276, %293 : vector<16x16xf32>
    %c87 = arith.constant 87 : index
    %295 = memref.load %arg2[%c87] : memref<144xf32, #tpu.memory_space<smem>>
    %296 = vector.broadcast %295 : f32 to vector<16x16xf32>
    %297 = arith.mulf %296, %286 : vector<16x16xf32>
    %298 = arith.addf %280, %297 : vector<16x16xf32>
    %c123 = arith.constant 123 : index
    %299 = memref.load %arg2[%c123] : memref<144xf32, #tpu.memory_space<smem>>
    %300 = vector.broadcast %299 : f32 to vector<16x16xf32>
    %301 = arith.mulf %300, %286 : vector<16x16xf32>
    %302 = arith.addf %284, %301 : vector<16x16xf32>
    %c1_66 = arith.constant 1 : index
    %c2_67 = arith.constant 2 : index
    %c1_68 = arith.constant 1 : index
    %303 = vector.load %arg7[%c1_66, %c2_67, %c1_68] : memref<4x18x18xf32, #tpu.memory_space<vmem>>, vector<1x16x16xf32>
    %304 = vector.shape_cast %303 : vector<1x16x16xf32> to vector<16x16xf32>
    %c16 = arith.constant 16 : index
    %305 = memref.load %arg2[%c16] : memref<144xf32, #tpu.memory_space<smem>>
    %306 = vector.broadcast %305 : f32 to vector<16x16xf32>
    %307 = arith.mulf %306, %304 : vector<16x16xf32>
    %308 = arith.addf %290, %307 : vector<16x16xf32>
    %c52 = arith.constant 52 : index
    %309 = memref.load %arg2[%c52] : memref<144xf32, #tpu.memory_space<smem>>
    %310 = vector.broadcast %309 : f32 to vector<16x16xf32>
    %311 = arith.mulf %310, %304 : vector<16x16xf32>
    %312 = arith.addf %294, %311 : vector<16x16xf32>
    %c88 = arith.constant 88 : index
    %313 = memref.load %arg2[%c88] : memref<144xf32, #tpu.memory_space<smem>>
    %314 = vector.broadcast %313 : f32 to vector<16x16xf32>
    %315 = arith.mulf %314, %304 : vector<16x16xf32>
    %316 = arith.addf %298, %315 : vector<16x16xf32>
    %c124 = arith.constant 124 : index
    %317 = memref.load %arg2[%c124] : memref<144xf32, #tpu.memory_space<smem>>
    %318 = vector.broadcast %317 : f32 to vector<16x16xf32>
    %319 = arith.mulf %318, %304 : vector<16x16xf32>
    %320 = arith.addf %302, %319 : vector<16x16xf32>
    %c1_69 = arith.constant 1 : index
    %c2_70 = arith.constant 2 : index
    %c2_71 = arith.constant 2 : index
    %321 = vector.load %arg7[%c1_69, %c2_70, %c2_71] : memref<4x18x18xf32, #tpu.memory_space<vmem>>, vector<1x16x16xf32>
    %322 = vector.shape_cast %321 : vector<1x16x16xf32> to vector<16x16xf32>
    %c17 = arith.constant 17 : index
    %323 = memref.load %arg2[%c17] : memref<144xf32, #tpu.memory_space<smem>>
    %324 = vector.broadcast %323 : f32 to vector<16x16xf32>
    %325 = arith.mulf %324, %322 : vector<16x16xf32>
    %326 = arith.addf %308, %325 : vector<16x16xf32>
    %c53 = arith.constant 53 : index
    %327 = memref.load %arg2[%c53] : memref<144xf32, #tpu.memory_space<smem>>
    %328 = vector.broadcast %327 : f32 to vector<16x16xf32>
    %329 = arith.mulf %328, %322 : vector<16x16xf32>
    %330 = arith.addf %312, %329 : vector<16x16xf32>
    %c89 = arith.constant 89 : index
    %331 = memref.load %arg2[%c89] : memref<144xf32, #tpu.memory_space<smem>>
    %332 = vector.broadcast %331 : f32 to vector<16x16xf32>
    %333 = arith.mulf %332, %322 : vector<16x16xf32>
    %334 = arith.addf %316, %333 : vector<16x16xf32>
    %c125 = arith.constant 125 : index
    %335 = memref.load %arg2[%c125] : memref<144xf32, #tpu.memory_space<smem>>
    %336 = vector.broadcast %335 : f32 to vector<16x16xf32>
    %337 = arith.mulf %336, %322 : vector<16x16xf32>
    %338 = arith.addf %320, %337 : vector<16x16xf32>
    %c2_72 = arith.constant 2 : index
    %c0_73 = arith.constant 0 : index
    %c0_74 = arith.constant 0 : index
    %339 = vector.load %arg7[%c2_72, %c0_73, %c0_74] : memref<4x18x18xf32, #tpu.memory_space<vmem>>, vector<1x16x16xf32>
    %340 = vector.shape_cast %339 : vector<1x16x16xf32> to vector<16x16xf32>
    %c18 = arith.constant 18 : index
    %341 = memref.load %arg2[%c18] : memref<144xf32, #tpu.memory_space<smem>>
    %342 = vector.broadcast %341 : f32 to vector<16x16xf32>
    %343 = arith.mulf %342, %340 : vector<16x16xf32>
    %344 = arith.addf %326, %343 : vector<16x16xf32>
    %c54 = arith.constant 54 : index
    %345 = memref.load %arg2[%c54] : memref<144xf32, #tpu.memory_space<smem>>
    %346 = vector.broadcast %345 : f32 to vector<16x16xf32>
    %347 = arith.mulf %346, %340 : vector<16x16xf32>
    %348 = arith.addf %330, %347 : vector<16x16xf32>
    %c90 = arith.constant 90 : index
    %349 = memref.load %arg2[%c90] : memref<144xf32, #tpu.memory_space<smem>>
    %350 = vector.broadcast %349 : f32 to vector<16x16xf32>
    %351 = arith.mulf %350, %340 : vector<16x16xf32>
    %352 = arith.addf %334, %351 : vector<16x16xf32>
    %c126 = arith.constant 126 : index
    %353 = memref.load %arg2[%c126] : memref<144xf32, #tpu.memory_space<smem>>
    %354 = vector.broadcast %353 : f32 to vector<16x16xf32>
    %355 = arith.mulf %354, %340 : vector<16x16xf32>
    %356 = arith.addf %338, %355 : vector<16x16xf32>
    %c2_75 = arith.constant 2 : index
    %c0_76 = arith.constant 0 : index
    %c1_77 = arith.constant 1 : index
    %357 = vector.load %arg7[%c2_75, %c0_76, %c1_77] : memref<4x18x18xf32, #tpu.memory_space<vmem>>, vector<1x16x16xf32>
    %358 = vector.shape_cast %357 : vector<1x16x16xf32> to vector<16x16xf32>
    %c19 = arith.constant 19 : index
    %359 = memref.load %arg2[%c19] : memref<144xf32, #tpu.memory_space<smem>>
    %360 = vector.broadcast %359 : f32 to vector<16x16xf32>
    %361 = arith.mulf %360, %358 : vector<16x16xf32>
    %362 = arith.addf %344, %361 : vector<16x16xf32>
    %c55 = arith.constant 55 : index
    %363 = memref.load %arg2[%c55] : memref<144xf32, #tpu.memory_space<smem>>
    %364 = vector.broadcast %363 : f32 to vector<16x16xf32>
    %365 = arith.mulf %364, %358 : vector<16x16xf32>
    %366 = arith.addf %348, %365 : vector<16x16xf32>
    %c91 = arith.constant 91 : index
    %367 = memref.load %arg2[%c91] : memref<144xf32, #tpu.memory_space<smem>>
    %368 = vector.broadcast %367 : f32 to vector<16x16xf32>
    %369 = arith.mulf %368, %358 : vector<16x16xf32>
    %370 = arith.addf %352, %369 : vector<16x16xf32>
    %c127 = arith.constant 127 : index
    %371 = memref.load %arg2[%c127] : memref<144xf32, #tpu.memory_space<smem>>
    %372 = vector.broadcast %371 : f32 to vector<16x16xf32>
    %373 = arith.mulf %372, %358 : vector<16x16xf32>
    %374 = arith.addf %356, %373 : vector<16x16xf32>
    %c2_78 = arith.constant 2 : index
    %c0_79 = arith.constant 0 : index
    %c2_80 = arith.constant 2 : index
    %375 = vector.load %arg7[%c2_78, %c0_79, %c2_80] : memref<4x18x18xf32, #tpu.memory_space<vmem>>, vector<1x16x16xf32>
    %376 = vector.shape_cast %375 : vector<1x16x16xf32> to vector<16x16xf32>
    %c20 = arith.constant 20 : index
    %377 = memref.load %arg2[%c20] : memref<144xf32, #tpu.memory_space<smem>>
    %378 = vector.broadcast %377 : f32 to vector<16x16xf32>
    %379 = arith.mulf %378, %376 : vector<16x16xf32>
    %380 = arith.addf %362, %379 : vector<16x16xf32>
    %c56 = arith.constant 56 : index
    %381 = memref.load %arg2[%c56] : memref<144xf32, #tpu.memory_space<smem>>
    %382 = vector.broadcast %381 : f32 to vector<16x16xf32>
    %383 = arith.mulf %382, %376 : vector<16x16xf32>
    %384 = arith.addf %366, %383 : vector<16x16xf32>
    %c92 = arith.constant 92 : index
    %385 = memref.load %arg2[%c92] : memref<144xf32, #tpu.memory_space<smem>>
    %386 = vector.broadcast %385 : f32 to vector<16x16xf32>
    %387 = arith.mulf %386, %376 : vector<16x16xf32>
    %388 = arith.addf %370, %387 : vector<16x16xf32>
    %c128 = arith.constant 128 : index
    %389 = memref.load %arg2[%c128] : memref<144xf32, #tpu.memory_space<smem>>
    %390 = vector.broadcast %389 : f32 to vector<16x16xf32>
    %391 = arith.mulf %390, %376 : vector<16x16xf32>
    %392 = arith.addf %374, %391 : vector<16x16xf32>
    %c2_81 = arith.constant 2 : index
    %c1_82 = arith.constant 1 : index
    %c0_83 = arith.constant 0 : index
    %393 = vector.load %arg7[%c2_81, %c1_82, %c0_83] : memref<4x18x18xf32, #tpu.memory_space<vmem>>, vector<1x16x16xf32>
    %394 = vector.shape_cast %393 : vector<1x16x16xf32> to vector<16x16xf32>
    %c21 = arith.constant 21 : index
    %395 = memref.load %arg2[%c21] : memref<144xf32, #tpu.memory_space<smem>>
    %396 = vector.broadcast %395 : f32 to vector<16x16xf32>
    %397 = arith.mulf %396, %394 : vector<16x16xf32>
    %398 = arith.addf %380, %397 : vector<16x16xf32>
    %c57 = arith.constant 57 : index
    %399 = memref.load %arg2[%c57] : memref<144xf32, #tpu.memory_space<smem>>
    %400 = vector.broadcast %399 : f32 to vector<16x16xf32>
    %401 = arith.mulf %400, %394 : vector<16x16xf32>
    %402 = arith.addf %384, %401 : vector<16x16xf32>
    %c93 = arith.constant 93 : index
    %403 = memref.load %arg2[%c93] : memref<144xf32, #tpu.memory_space<smem>>
    %404 = vector.broadcast %403 : f32 to vector<16x16xf32>
    %405 = arith.mulf %404, %394 : vector<16x16xf32>
    %406 = arith.addf %388, %405 : vector<16x16xf32>
    %c129 = arith.constant 129 : index
    %407 = memref.load %arg2[%c129] : memref<144xf32, #tpu.memory_space<smem>>
    %408 = vector.broadcast %407 : f32 to vector<16x16xf32>
    %409 = arith.mulf %408, %394 : vector<16x16xf32>
    %410 = arith.addf %392, %409 : vector<16x16xf32>
    %c2_84 = arith.constant 2 : index
    %c1_85 = arith.constant 1 : index
    %c1_86 = arith.constant 1 : index
    %411 = vector.load %arg7[%c2_84, %c1_85, %c1_86] : memref<4x18x18xf32, #tpu.memory_space<vmem>>, vector<1x16x16xf32>
    %412 = vector.shape_cast %411 : vector<1x16x16xf32> to vector<16x16xf32>
    %c22 = arith.constant 22 : index
    %413 = memref.load %arg2[%c22] : memref<144xf32, #tpu.memory_space<smem>>
    %414 = vector.broadcast %413 : f32 to vector<16x16xf32>
    %415 = arith.mulf %414, %412 : vector<16x16xf32>
    %416 = arith.addf %398, %415 : vector<16x16xf32>
    %c58 = arith.constant 58 : index
    %417 = memref.load %arg2[%c58] : memref<144xf32, #tpu.memory_space<smem>>
    %418 = vector.broadcast %417 : f32 to vector<16x16xf32>
    %419 = arith.mulf %418, %412 : vector<16x16xf32>
    %420 = arith.addf %402, %419 : vector<16x16xf32>
    %c94 = arith.constant 94 : index
    %421 = memref.load %arg2[%c94] : memref<144xf32, #tpu.memory_space<smem>>
    %422 = vector.broadcast %421 : f32 to vector<16x16xf32>
    %423 = arith.mulf %422, %412 : vector<16x16xf32>
    %424 = arith.addf %406, %423 : vector<16x16xf32>
    %c130 = arith.constant 130 : index
    %425 = memref.load %arg2[%c130] : memref<144xf32, #tpu.memory_space<smem>>
    %426 = vector.broadcast %425 : f32 to vector<16x16xf32>
    %427 = arith.mulf %426, %412 : vector<16x16xf32>
    %428 = arith.addf %410, %427 : vector<16x16xf32>
    %c2_87 = arith.constant 2 : index
    %c1_88 = arith.constant 1 : index
    %c2_89 = arith.constant 2 : index
    %429 = vector.load %arg7[%c2_87, %c1_88, %c2_89] : memref<4x18x18xf32, #tpu.memory_space<vmem>>, vector<1x16x16xf32>
    %430 = vector.shape_cast %429 : vector<1x16x16xf32> to vector<16x16xf32>
    %c23 = arith.constant 23 : index
    %431 = memref.load %arg2[%c23] : memref<144xf32, #tpu.memory_space<smem>>
    %432 = vector.broadcast %431 : f32 to vector<16x16xf32>
    %433 = arith.mulf %432, %430 : vector<16x16xf32>
    %434 = arith.addf %416, %433 : vector<16x16xf32>
    %c59 = arith.constant 59 : index
    %435 = memref.load %arg2[%c59] : memref<144xf32, #tpu.memory_space<smem>>
    %436 = vector.broadcast %435 : f32 to vector<16x16xf32>
    %437 = arith.mulf %436, %430 : vector<16x16xf32>
    %438 = arith.addf %420, %437 : vector<16x16xf32>
    %c95 = arith.constant 95 : index
    %439 = memref.load %arg2[%c95] : memref<144xf32, #tpu.memory_space<smem>>
    %440 = vector.broadcast %439 : f32 to vector<16x16xf32>
    %441 = arith.mulf %440, %430 : vector<16x16xf32>
    %442 = arith.addf %424, %441 : vector<16x16xf32>
    %c131 = arith.constant 131 : index
    %443 = memref.load %arg2[%c131] : memref<144xf32, #tpu.memory_space<smem>>
    %444 = vector.broadcast %443 : f32 to vector<16x16xf32>
    %445 = arith.mulf %444, %430 : vector<16x16xf32>
    %446 = arith.addf %428, %445 : vector<16x16xf32>
    %c2_90 = arith.constant 2 : index
    %c2_91 = arith.constant 2 : index
    %c0_92 = arith.constant 0 : index
    %447 = vector.load %arg7[%c2_90, %c2_91, %c0_92] : memref<4x18x18xf32, #tpu.memory_space<vmem>>, vector<1x16x16xf32>
    %448 = vector.shape_cast %447 : vector<1x16x16xf32> to vector<16x16xf32>
    %c24 = arith.constant 24 : index
    %449 = memref.load %arg2[%c24] : memref<144xf32, #tpu.memory_space<smem>>
    %450 = vector.broadcast %449 : f32 to vector<16x16xf32>
    %451 = arith.mulf %450, %448 : vector<16x16xf32>
    %452 = arith.addf %434, %451 : vector<16x16xf32>
    %c60 = arith.constant 60 : index
    %453 = memref.load %arg2[%c60] : memref<144xf32, #tpu.memory_space<smem>>
    %454 = vector.broadcast %453 : f32 to vector<16x16xf32>
    %455 = arith.mulf %454, %448 : vector<16x16xf32>
    %456 = arith.addf %438, %455 : vector<16x16xf32>
    %c96 = arith.constant 96 : index
    %457 = memref.load %arg2[%c96] : memref<144xf32, #tpu.memory_space<smem>>
    %458 = vector.broadcast %457 : f32 to vector<16x16xf32>
    %459 = arith.mulf %458, %448 : vector<16x16xf32>
    %460 = arith.addf %442, %459 : vector<16x16xf32>
    %c132 = arith.constant 132 : index
    %461 = memref.load %arg2[%c132] : memref<144xf32, #tpu.memory_space<smem>>
    %462 = vector.broadcast %461 : f32 to vector<16x16xf32>
    %463 = arith.mulf %462, %448 : vector<16x16xf32>
    %464 = arith.addf %446, %463 : vector<16x16xf32>
    %c2_93 = arith.constant 2 : index
    %c2_94 = arith.constant 2 : index
    %c1_95 = arith.constant 1 : index
    %465 = vector.load %arg7[%c2_93, %c2_94, %c1_95] : memref<4x18x18xf32, #tpu.memory_space<vmem>>, vector<1x16x16xf32>
    %466 = vector.shape_cast %465 : vector<1x16x16xf32> to vector<16x16xf32>
    %c25 = arith.constant 25 : index
    %467 = memref.load %arg2[%c25] : memref<144xf32, #tpu.memory_space<smem>>
    %468 = vector.broadcast %467 : f32 to vector<16x16xf32>
    %469 = arith.mulf %468, %466 : vector<16x16xf32>
    %470 = arith.addf %452, %469 : vector<16x16xf32>
    %c61 = arith.constant 61 : index
    %471 = memref.load %arg2[%c61] : memref<144xf32, #tpu.memory_space<smem>>
    %472 = vector.broadcast %471 : f32 to vector<16x16xf32>
    %473 = arith.mulf %472, %466 : vector<16x16xf32>
    %474 = arith.addf %456, %473 : vector<16x16xf32>
    %c97 = arith.constant 97 : index
    %475 = memref.load %arg2[%c97] : memref<144xf32, #tpu.memory_space<smem>>
    %476 = vector.broadcast %475 : f32 to vector<16x16xf32>
    %477 = arith.mulf %476, %466 : vector<16x16xf32>
    %478 = arith.addf %460, %477 : vector<16x16xf32>
    %c133 = arith.constant 133 : index
    %479 = memref.load %arg2[%c133] : memref<144xf32, #tpu.memory_space<smem>>
    %480 = vector.broadcast %479 : f32 to vector<16x16xf32>
    %481 = arith.mulf %480, %466 : vector<16x16xf32>
    %482 = arith.addf %464, %481 : vector<16x16xf32>
    %c2_96 = arith.constant 2 : index
    %c2_97 = arith.constant 2 : index
    %c2_98 = arith.constant 2 : index
    %483 = vector.load %arg7[%c2_96, %c2_97, %c2_98] : memref<4x18x18xf32, #tpu.memory_space<vmem>>, vector<1x16x16xf32>
    %484 = vector.shape_cast %483 : vector<1x16x16xf32> to vector<16x16xf32>
    %c26 = arith.constant 26 : index
    %485 = memref.load %arg2[%c26] : memref<144xf32, #tpu.memory_space<smem>>
    %486 = vector.broadcast %485 : f32 to vector<16x16xf32>
    %487 = arith.mulf %486, %484 : vector<16x16xf32>
    %488 = arith.addf %470, %487 : vector<16x16xf32>
    %c62 = arith.constant 62 : index
    %489 = memref.load %arg2[%c62] : memref<144xf32, #tpu.memory_space<smem>>
    %490 = vector.broadcast %489 : f32 to vector<16x16xf32>
    %491 = arith.mulf %490, %484 : vector<16x16xf32>
    %492 = arith.addf %474, %491 : vector<16x16xf32>
    %c98 = arith.constant 98 : index
    %493 = memref.load %arg2[%c98] : memref<144xf32, #tpu.memory_space<smem>>
    %494 = vector.broadcast %493 : f32 to vector<16x16xf32>
    %495 = arith.mulf %494, %484 : vector<16x16xf32>
    %496 = arith.addf %478, %495 : vector<16x16xf32>
    %c134 = arith.constant 134 : index
    %497 = memref.load %arg2[%c134] : memref<144xf32, #tpu.memory_space<smem>>
    %498 = vector.broadcast %497 : f32 to vector<16x16xf32>
    %499 = arith.mulf %498, %484 : vector<16x16xf32>
    %500 = arith.addf %482, %499 : vector<16x16xf32>
    %c3_99 = arith.constant 3 : index
    %c0_100 = arith.constant 0 : index
    %c0_101 = arith.constant 0 : index
    %501 = vector.load %arg7[%c3_99, %c0_100, %c0_101] : memref<4x18x18xf32, #tpu.memory_space<vmem>>, vector<1x16x16xf32>
    %502 = vector.shape_cast %501 : vector<1x16x16xf32> to vector<16x16xf32>
    %c27 = arith.constant 27 : index
    %503 = memref.load %arg2[%c27] : memref<144xf32, #tpu.memory_space<smem>>
    %504 = vector.broadcast %503 : f32 to vector<16x16xf32>
    %505 = arith.mulf %504, %502 : vector<16x16xf32>
    %506 = arith.addf %488, %505 : vector<16x16xf32>
    %c63 = arith.constant 63 : index
    %507 = memref.load %arg2[%c63] : memref<144xf32, #tpu.memory_space<smem>>
    %508 = vector.broadcast %507 : f32 to vector<16x16xf32>
    %509 = arith.mulf %508, %502 : vector<16x16xf32>
    %510 = arith.addf %492, %509 : vector<16x16xf32>
    %c99 = arith.constant 99 : index
    %511 = memref.load %arg2[%c99] : memref<144xf32, #tpu.memory_space<smem>>
    %512 = vector.broadcast %511 : f32 to vector<16x16xf32>
    %513 = arith.mulf %512, %502 : vector<16x16xf32>
    %514 = arith.addf %496, %513 : vector<16x16xf32>
    %c135 = arith.constant 135 : index
    %515 = memref.load %arg2[%c135] : memref<144xf32, #tpu.memory_space<smem>>
    %516 = vector.broadcast %515 : f32 to vector<16x16xf32>
    %517 = arith.mulf %516, %502 : vector<16x16xf32>
    %518 = arith.addf %500, %517 : vector<16x16xf32>
    %c3_102 = arith.constant 3 : index
    %c0_103 = arith.constant 0 : index
    %c1_104 = arith.constant 1 : index
    %519 = vector.load %arg7[%c3_102, %c0_103, %c1_104] : memref<4x18x18xf32, #tpu.memory_space<vmem>>, vector<1x16x16xf32>
    %520 = vector.shape_cast %519 : vector<1x16x16xf32> to vector<16x16xf32>
    %c28 = arith.constant 28 : index
    %521 = memref.load %arg2[%c28] : memref<144xf32, #tpu.memory_space<smem>>
    %522 = vector.broadcast %521 : f32 to vector<16x16xf32>
    %523 = arith.mulf %522, %520 : vector<16x16xf32>
    %524 = arith.addf %506, %523 : vector<16x16xf32>
    %c64 = arith.constant 64 : index
    %525 = memref.load %arg2[%c64] : memref<144xf32, #tpu.memory_space<smem>>
    %526 = vector.broadcast %525 : f32 to vector<16x16xf32>
    %527 = arith.mulf %526, %520 : vector<16x16xf32>
    %528 = arith.addf %510, %527 : vector<16x16xf32>
    %c100 = arith.constant 100 : index
    %529 = memref.load %arg2[%c100] : memref<144xf32, #tpu.memory_space<smem>>
    %530 = vector.broadcast %529 : f32 to vector<16x16xf32>
    %531 = arith.mulf %530, %520 : vector<16x16xf32>
    %532 = arith.addf %514, %531 : vector<16x16xf32>
    %c136 = arith.constant 136 : index
    %533 = memref.load %arg2[%c136] : memref<144xf32, #tpu.memory_space<smem>>
    %534 = vector.broadcast %533 : f32 to vector<16x16xf32>
    %535 = arith.mulf %534, %520 : vector<16x16xf32>
    %536 = arith.addf %518, %535 : vector<16x16xf32>
    %c3_105 = arith.constant 3 : index
    %c0_106 = arith.constant 0 : index
    %c2_107 = arith.constant 2 : index
    %537 = vector.load %arg7[%c3_105, %c0_106, %c2_107] : memref<4x18x18xf32, #tpu.memory_space<vmem>>, vector<1x16x16xf32>
    %538 = vector.shape_cast %537 : vector<1x16x16xf32> to vector<16x16xf32>
    %c29 = arith.constant 29 : index
    %539 = memref.load %arg2[%c29] : memref<144xf32, #tpu.memory_space<smem>>
    %540 = vector.broadcast %539 : f32 to vector<16x16xf32>
    %541 = arith.mulf %540, %538 : vector<16x16xf32>
    %542 = arith.addf %524, %541 : vector<16x16xf32>
    %c65 = arith.constant 65 : index
    %543 = memref.load %arg2[%c65] : memref<144xf32, #tpu.memory_space<smem>>
    %544 = vector.broadcast %543 : f32 to vector<16x16xf32>
    %545 = arith.mulf %544, %538 : vector<16x16xf32>
    %546 = arith.addf %528, %545 : vector<16x16xf32>
    %c101 = arith.constant 101 : index
    %547 = memref.load %arg2[%c101] : memref<144xf32, #tpu.memory_space<smem>>
    %548 = vector.broadcast %547 : f32 to vector<16x16xf32>
    %549 = arith.mulf %548, %538 : vector<16x16xf32>
    %550 = arith.addf %532, %549 : vector<16x16xf32>
    %c137 = arith.constant 137 : index
    %551 = memref.load %arg2[%c137] : memref<144xf32, #tpu.memory_space<smem>>
    %552 = vector.broadcast %551 : f32 to vector<16x16xf32>
    %553 = arith.mulf %552, %538 : vector<16x16xf32>
    %554 = arith.addf %536, %553 : vector<16x16xf32>
    %c3_108 = arith.constant 3 : index
    %c1_109 = arith.constant 1 : index
    %c0_110 = arith.constant 0 : index
    %555 = vector.load %arg7[%c3_108, %c1_109, %c0_110] : memref<4x18x18xf32, #tpu.memory_space<vmem>>, vector<1x16x16xf32>
    %556 = vector.shape_cast %555 : vector<1x16x16xf32> to vector<16x16xf32>
    %c30 = arith.constant 30 : index
    %557 = memref.load %arg2[%c30] : memref<144xf32, #tpu.memory_space<smem>>
    %558 = vector.broadcast %557 : f32 to vector<16x16xf32>
    %559 = arith.mulf %558, %556 : vector<16x16xf32>
    %560 = arith.addf %542, %559 : vector<16x16xf32>
    %c66 = arith.constant 66 : index
    %561 = memref.load %arg2[%c66] : memref<144xf32, #tpu.memory_space<smem>>
    %562 = vector.broadcast %561 : f32 to vector<16x16xf32>
    %563 = arith.mulf %562, %556 : vector<16x16xf32>
    %564 = arith.addf %546, %563 : vector<16x16xf32>
    %c102 = arith.constant 102 : index
    %565 = memref.load %arg2[%c102] : memref<144xf32, #tpu.memory_space<smem>>
    %566 = vector.broadcast %565 : f32 to vector<16x16xf32>
    %567 = arith.mulf %566, %556 : vector<16x16xf32>
    %568 = arith.addf %550, %567 : vector<16x16xf32>
    %c138 = arith.constant 138 : index
    %569 = memref.load %arg2[%c138] : memref<144xf32, #tpu.memory_space<smem>>
    %570 = vector.broadcast %569 : f32 to vector<16x16xf32>
    %571 = arith.mulf %570, %556 : vector<16x16xf32>
    %572 = arith.addf %554, %571 : vector<16x16xf32>
    %c3_111 = arith.constant 3 : index
    %c1_112 = arith.constant 1 : index
    %c1_113 = arith.constant 1 : index
    %573 = vector.load %arg7[%c3_111, %c1_112, %c1_113] : memref<4x18x18xf32, #tpu.memory_space<vmem>>, vector<1x16x16xf32>
    %574 = vector.shape_cast %573 : vector<1x16x16xf32> to vector<16x16xf32>
    %c31 = arith.constant 31 : index
    %575 = memref.load %arg2[%c31] : memref<144xf32, #tpu.memory_space<smem>>
    %576 = vector.broadcast %575 : f32 to vector<16x16xf32>
    %577 = arith.mulf %576, %574 : vector<16x16xf32>
    %578 = arith.addf %560, %577 : vector<16x16xf32>
    %c67 = arith.constant 67 : index
    %579 = memref.load %arg2[%c67] : memref<144xf32, #tpu.memory_space<smem>>
    %580 = vector.broadcast %579 : f32 to vector<16x16xf32>
    %581 = arith.mulf %580, %574 : vector<16x16xf32>
    %582 = arith.addf %564, %581 : vector<16x16xf32>
    %c103 = arith.constant 103 : index
    %583 = memref.load %arg2[%c103] : memref<144xf32, #tpu.memory_space<smem>>
    %584 = vector.broadcast %583 : f32 to vector<16x16xf32>
    %585 = arith.mulf %584, %574 : vector<16x16xf32>
    %586 = arith.addf %568, %585 : vector<16x16xf32>
    %c139 = arith.constant 139 : index
    %587 = memref.load %arg2[%c139] : memref<144xf32, #tpu.memory_space<smem>>
    %588 = vector.broadcast %587 : f32 to vector<16x16xf32>
    %589 = arith.mulf %588, %574 : vector<16x16xf32>
    %590 = arith.addf %572, %589 : vector<16x16xf32>
    %c3_114 = arith.constant 3 : index
    %c1_115 = arith.constant 1 : index
    %c2_116 = arith.constant 2 : index
    %591 = vector.load %arg7[%c3_114, %c1_115, %c2_116] : memref<4x18x18xf32, #tpu.memory_space<vmem>>, vector<1x16x16xf32>
    %592 = vector.shape_cast %591 : vector<1x16x16xf32> to vector<16x16xf32>
    %c32 = arith.constant 32 : index
    %593 = memref.load %arg2[%c32] : memref<144xf32, #tpu.memory_space<smem>>
    %594 = vector.broadcast %593 : f32 to vector<16x16xf32>
    %595 = arith.mulf %594, %592 : vector<16x16xf32>
    %596 = arith.addf %578, %595 : vector<16x16xf32>
    %c68 = arith.constant 68 : index
    %597 = memref.load %arg2[%c68] : memref<144xf32, #tpu.memory_space<smem>>
    %598 = vector.broadcast %597 : f32 to vector<16x16xf32>
    %599 = arith.mulf %598, %592 : vector<16x16xf32>
    %600 = arith.addf %582, %599 : vector<16x16xf32>
    %c104 = arith.constant 104 : index
    %601 = memref.load %arg2[%c104] : memref<144xf32, #tpu.memory_space<smem>>
    %602 = vector.broadcast %601 : f32 to vector<16x16xf32>
    %603 = arith.mulf %602, %592 : vector<16x16xf32>
    %604 = arith.addf %586, %603 : vector<16x16xf32>
    %c140 = arith.constant 140 : index
    %605 = memref.load %arg2[%c140] : memref<144xf32, #tpu.memory_space<smem>>
    %606 = vector.broadcast %605 : f32 to vector<16x16xf32>
    %607 = arith.mulf %606, %592 : vector<16x16xf32>
    %608 = arith.addf %590, %607 : vector<16x16xf32>
    %c3_117 = arith.constant 3 : index
    %c2_118 = arith.constant 2 : index
    %c0_119 = arith.constant 0 : index
    %609 = vector.load %arg7[%c3_117, %c2_118, %c0_119] : memref<4x18x18xf32, #tpu.memory_space<vmem>>, vector<1x16x16xf32>
    %610 = vector.shape_cast %609 : vector<1x16x16xf32> to vector<16x16xf32>
    %c33 = arith.constant 33 : index
    %611 = memref.load %arg2[%c33] : memref<144xf32, #tpu.memory_space<smem>>
    %612 = vector.broadcast %611 : f32 to vector<16x16xf32>
    %613 = arith.mulf %612, %610 : vector<16x16xf32>
    %614 = arith.addf %596, %613 : vector<16x16xf32>
    %c69 = arith.constant 69 : index
    %615 = memref.load %arg2[%c69] : memref<144xf32, #tpu.memory_space<smem>>
    %616 = vector.broadcast %615 : f32 to vector<16x16xf32>
    %617 = arith.mulf %616, %610 : vector<16x16xf32>
    %618 = arith.addf %600, %617 : vector<16x16xf32>
    %c105 = arith.constant 105 : index
    %619 = memref.load %arg2[%c105] : memref<144xf32, #tpu.memory_space<smem>>
    %620 = vector.broadcast %619 : f32 to vector<16x16xf32>
    %621 = arith.mulf %620, %610 : vector<16x16xf32>
    %622 = arith.addf %604, %621 : vector<16x16xf32>
    %c141 = arith.constant 141 : index
    %623 = memref.load %arg2[%c141] : memref<144xf32, #tpu.memory_space<smem>>
    %624 = vector.broadcast %623 : f32 to vector<16x16xf32>
    %625 = arith.mulf %624, %610 : vector<16x16xf32>
    %626 = arith.addf %608, %625 : vector<16x16xf32>
    %c3_120 = arith.constant 3 : index
    %c2_121 = arith.constant 2 : index
    %c1_122 = arith.constant 1 : index
    %627 = vector.load %arg7[%c3_120, %c2_121, %c1_122] : memref<4x18x18xf32, #tpu.memory_space<vmem>>, vector<1x16x16xf32>
    %628 = vector.shape_cast %627 : vector<1x16x16xf32> to vector<16x16xf32>
    %c34 = arith.constant 34 : index
    %629 = memref.load %arg2[%c34] : memref<144xf32, #tpu.memory_space<smem>>
    %630 = vector.broadcast %629 : f32 to vector<16x16xf32>
    %631 = arith.mulf %630, %628 : vector<16x16xf32>
    %632 = arith.addf %614, %631 : vector<16x16xf32>
    %c70 = arith.constant 70 : index
    %633 = memref.load %arg2[%c70] : memref<144xf32, #tpu.memory_space<smem>>
    %634 = vector.broadcast %633 : f32 to vector<16x16xf32>
    %635 = arith.mulf %634, %628 : vector<16x16xf32>
    %636 = arith.addf %618, %635 : vector<16x16xf32>
    %c106 = arith.constant 106 : index
    %637 = memref.load %arg2[%c106] : memref<144xf32, #tpu.memory_space<smem>>
    %638 = vector.broadcast %637 : f32 to vector<16x16xf32>
    %639 = arith.mulf %638, %628 : vector<16x16xf32>
    %640 = arith.addf %622, %639 : vector<16x16xf32>
    %c142 = arith.constant 142 : index
    %641 = memref.load %arg2[%c142] : memref<144xf32, #tpu.memory_space<smem>>
    %642 = vector.broadcast %641 : f32 to vector<16x16xf32>
    %643 = arith.mulf %642, %628 : vector<16x16xf32>
    %644 = arith.addf %626, %643 : vector<16x16xf32>
    %c3_123 = arith.constant 3 : index
    %c2_124 = arith.constant 2 : index
    %c2_125 = arith.constant 2 : index
    %645 = vector.load %arg7[%c3_123, %c2_124, %c2_125] : memref<4x18x18xf32, #tpu.memory_space<vmem>>, vector<1x16x16xf32>
    %646 = vector.shape_cast %645 : vector<1x16x16xf32> to vector<16x16xf32>
    %c35 = arith.constant 35 : index
    %647 = memref.load %arg2[%c35] : memref<144xf32, #tpu.memory_space<smem>>
    %648 = vector.broadcast %647 : f32 to vector<16x16xf32>
    %649 = arith.mulf %648, %646 : vector<16x16xf32>
    %650 = arith.addf %632, %649 : vector<16x16xf32>
    %c71 = arith.constant 71 : index
    %651 = memref.load %arg2[%c71] : memref<144xf32, #tpu.memory_space<smem>>
    %652 = vector.broadcast %651 : f32 to vector<16x16xf32>
    %653 = arith.mulf %652, %646 : vector<16x16xf32>
    %654 = arith.addf %636, %653 : vector<16x16xf32>
    %c107 = arith.constant 107 : index
    %655 = memref.load %arg2[%c107] : memref<144xf32, #tpu.memory_space<smem>>
    %656 = vector.broadcast %655 : f32 to vector<16x16xf32>
    %657 = arith.mulf %656, %646 : vector<16x16xf32>
    %658 = arith.addf %640, %657 : vector<16x16xf32>
    %c143 = arith.constant 143 : index
    %659 = memref.load %arg2[%c143] : memref<144xf32, #tpu.memory_space<smem>>
    %660 = vector.broadcast %659 : f32 to vector<16x16xf32>
    %661 = arith.mulf %660, %646 : vector<16x16xf32>
    %662 = arith.addf %644, %661 : vector<16x16xf32>
    %cst_126 = arith.constant 0.000000e+00 : f32
    %663 = vector.broadcast %cst_126 : f32 to vector<16x16xf32>
    %664 = arith.cmpf oge, %650, %663 : vector<16x16xf32>
    %cst_127 = arith.constant 1.000000e-01 : f32
    %665 = vector.broadcast %cst_127 : f32 to vector<16x16xf32>
    %666 = arith.mulf %665, %650 : vector<16x16xf32>
    %667 = arith.select %664, %650, %666 : vector<16x16xi1>, vector<16x16xf32>
    %c0_128 = arith.constant 0 : index
    %c1_129 = arith.constant 1 : index
    %c1_130 = arith.constant 1 : index
    %668 = vector.load %arg8[%c0_128, %c1_129, %c1_130] : memref<4x18x18xf32, #tpu.memory_space<vmem>>, vector<1x16x16xf32>
    %669 = vector.shape_cast %668 : vector<1x16x16xf32> to vector<16x16xf32>
    %670 = vector.shape_cast %667 : vector<16x16xf32> to vector<1x16x16xf32>
    tpu.vector_store %arg8[%c0_128, %c1_129, %c1_130], %670 {strides = array<i32>} : memref<4x18x18xf32, #tpu.memory_space<vmem>>, vector<1x16x16xf32>,
    %cst_131 = arith.constant 0.000000e+00 : f32
    %671 = vector.broadcast %cst_131 : f32 to vector<16x16xf32>
    %672 = arith.cmpf oge, %654, %671 : vector<16x16xf32>
    %cst_132 = arith.constant 1.000000e-01 : f32
    %673 = vector.broadcast %cst_132 : f32 to vector<16x16xf32>
    %674 = arith.mulf %673, %654 : vector<16x16xf32>
    %675 = arith.select %672, %654, %674 : vector<16x16xi1>, vector<16x16xf32>
    %c1_133 = arith.constant 1 : index
    %c1_134 = arith.constant 1 : index
    %c1_135 = arith.constant 1 : index
    %676 = vector.load %arg8[%c1_133, %c1_134, %c1_135] : memref<4x18x18xf32, #tpu.memory_space<vmem>>, vector<1x16x16xf32>
    %677 = vector.shape_cast %676 : vector<1x16x16xf32> to vector<16x16xf32>
    %678 = vector.shape_cast %675 : vector<16x16xf32> to vector<1x16x16xf32>
    tpu.vector_store %arg8[%c1_133, %c1_134, %c1_135], %678 {strides = array<i32>} : memref<4x18x18xf32, #tpu.memory_space<vmem>>, vector<1x16x16xf32>,
    %cst_136 = arith.constant 0.000000e+00 : f32
    %679 = vector.broadcast %cst_136 : f32 to vector<16x16xf32>
    %680 = arith.cmpf oge, %658, %679 : vector<16x16xf32>
    %cst_137 = arith.constant 1.000000e-01 : f32
    %681 = vector.broadcast %cst_137 : f32 to vector<16x16xf32>
    %682 = arith.mulf %681, %658 : vector<16x16xf32>
    %683 = arith.select %680, %658, %682 : vector<16x16xi1>, vector<16x16xf32>
    %c2_138 = arith.constant 2 : index
    %c1_139 = arith.constant 1 : index
    %c1_140 = arith.constant 1 : index
    %684 = vector.load %arg8[%c2_138, %c1_139, %c1_140] : memref<4x18x18xf32, #tpu.memory_space<vmem>>, vector<1x16x16xf32>
    %685 = vector.shape_cast %684 : vector<1x16x16xf32> to vector<16x16xf32>
    %686 = vector.shape_cast %683 : vector<16x16xf32> to vector<1x16x16xf32>
    tpu.vector_store %arg8[%c2_138, %c1_139, %c1_140], %686 {strides = array<i32>} : memref<4x18x18xf32, #tpu.memory_space<vmem>>, vector<1x16x16xf32>,
    %cst_141 = arith.constant 0.000000e+00 : f32
    %687 = vector.broadcast %cst_141 : f32 to vector<16x16xf32>
    %688 = arith.cmpf oge, %662, %687 : vector<16x16xf32>
    %cst_142 = arith.constant 1.000000e-01 : f32
    %689 = vector.broadcast %cst_142 : f32 to vector<16x16xf32>
    %690 = arith.mulf %689, %662 : vector<16x16xf32>
    %691 = arith.select %688, %662, %690 : vector<16x16xi1>, vector<16x16xf32>
    %c3_143 = arith.constant 3 : index
    %c1_144 = arith.constant 1 : index
    %c1_145 = arith.constant 1 : index
    %692 = vector.load %arg8[%c3_143, %c1_144, %c1_145] : memref<4x18x18xf32, #tpu.memory_space<vmem>>, vector<1x16x16xf32>
    %693 = vector.shape_cast %692 : vector<1x16x16xf32> to vector<16x16xf32>
    %694 = vector.shape_cast %691 : vector<16x16xf32> to vector<1x16x16xf32>
    tpu.vector_store %arg8[%c3_143, %c1_144, %c1_145], %694 {strides = array<i32>} : memref<4x18x18xf32, #tpu.memory_space<vmem>>, vector<1x16x16xf32>,
    %c0_146 = arith.constant 0 : index
    %695 = memref.load %arg5[%c0_146] : memref<4xf32, #tpu.memory_space<smem>>
    %696 = vector.broadcast %695 : f32 to vector<16x16xf32>
    %c1_147 = arith.constant 1 : index
    %697 = memref.load %arg5[%c1_147] : memref<4xf32, #tpu.memory_space<smem>>
    %698 = vector.broadcast %697 : f32 to vector<16x16xf32>
    %c2_148 = arith.constant 2 : index
    %699 = memref.load %arg5[%c2_148] : memref<4xf32, #tpu.memory_space<smem>>
    %700 = vector.broadcast %699 : f32 to vector<16x16xf32>
    %c3_149 = arith.constant 3 : index
    %701 = memref.load %arg5[%c3_149] : memref<4xf32, #tpu.memory_space<smem>>
    %702 = vector.broadcast %701 : f32 to vector<16x16xf32>
    %c0_150 = arith.constant 0 : index
    %c0_151 = arith.constant 0 : index
    %c0_152 = arith.constant 0 : index
    %703 = vector.load %arg8[%c0_150, %c0_151, %c0_152] : memref<4x18x18xf32, #tpu.memory_space<vmem>>, vector<1x16x16xf32>
    %704 = vector.shape_cast %703 : vector<1x16x16xf32> to vector<16x16xf32>
    %c0_153 = arith.constant 0 : index
    %705 = memref.load %arg4[%c0_153] : memref<144xf32, #tpu.memory_space<smem>>
    %706 = vector.broadcast %705 : f32 to vector<16x16xf32>
    %707 = arith.mulf %706, %704 : vector<16x16xf32>
    %708 = arith.addf %696, %707 : vector<16x16xf32>
    %c36_154 = arith.constant 36 : index
    %709 = memref.load %arg4[%c36_154] : memref<144xf32, #tpu.memory_space<smem>>
    %710 = vector.broadcast %709 : f32 to vector<16x16xf32>
    %711 = arith.mulf %710, %704 : vector<16x16xf32>
    %712 = arith.addf %698, %711 : vector<16x16xf32>
    %c72_155 = arith.constant 72 : index
    %713 = memref.load %arg4[%c72_155] : memref<144xf32, #tpu.memory_space<smem>>
    %714 = vector.broadcast %713 : f32 to vector<16x16xf32>
    %715 = arith.mulf %714, %704 : vector<16x16xf32>
    %716 = arith.addf %700, %715 : vector<16x16xf32>
    %c108_156 = arith.constant 108 : index
    %717 = memref.load %arg4[%c108_156] : memref<144xf32, #tpu.memory_space<smem>>
    %718 = vector.broadcast %717 : f32 to vector<16x16xf32>
    %719 = arith.mulf %718, %704 : vector<16x16xf32>
    %720 = arith.addf %702, %719 : vector<16x16xf32>
    %c0_157 = arith.constant 0 : index
    %c0_158 = arith.constant 0 : index
    %c1_159 = arith.constant 1 : index
    %721 = vector.load %arg8[%c0_157, %c0_158, %c1_159] : memref<4x18x18xf32, #tpu.memory_space<vmem>>, vector<1x16x16xf32>
    %722 = vector.shape_cast %721 : vector<1x16x16xf32> to vector<16x16xf32>
    %c1_160 = arith.constant 1 : index
    %723 = memref.load %arg4[%c1_160] : memref<144xf32, #tpu.memory_space<smem>>
    %724 = vector.broadcast %723 : f32 to vector<16x16xf32>
    %725 = arith.mulf %724, %722 : vector<16x16xf32>
    %726 = arith.addf %708, %725 : vector<16x16xf32>
    %c37_161 = arith.constant 37 : index
    %727 = memref.load %arg4[%c37_161] : memref<144xf32, #tpu.memory_space<smem>>
    %728 = vector.broadcast %727 : f32 to vector<16x16xf32>
    %729 = arith.mulf %728, %722 : vector<16x16xf32>
    %730 = arith.addf %712, %729 : vector<16x16xf32>
    %c73_162 = arith.constant 73 : index
    %731 = memref.load %arg4[%c73_162] : memref<144xf32, #tpu.memory_space<smem>>
    %732 = vector.broadcast %731 : f32 to vector<16x16xf32>
    %733 = arith.mulf %732, %722 : vector<16x16xf32>
    %734 = arith.addf %716, %733 : vector<16x16xf32>
    %c109_163 = arith.constant 109 : index
    %735 = memref.load %arg4[%c109_163] : memref<144xf32, #tpu.memory_space<smem>>
    %736 = vector.broadcast %735 : f32 to vector<16x16xf32>
    %737 = arith.mulf %736, %722 : vector<16x16xf32>
    %738 = arith.addf %720, %737 : vector<16x16xf32>
    %c0_164 = arith.constant 0 : index
    %c0_165 = arith.constant 0 : index
    %c2_166 = arith.constant 2 : index
    %739 = vector.load %arg8[%c0_164, %c0_165, %c2_166] : memref<4x18x18xf32, #tpu.memory_space<vmem>>, vector<1x16x16xf32>
    %740 = vector.shape_cast %739 : vector<1x16x16xf32> to vector<16x16xf32>
    %c2_167 = arith.constant 2 : index
    %741 = memref.load %arg4[%c2_167] : memref<144xf32, #tpu.memory_space<smem>>
    %742 = vector.broadcast %741 : f32 to vector<16x16xf32>
    %743 = arith.mulf %742, %740 : vector<16x16xf32>
    %744 = arith.addf %726, %743 : vector<16x16xf32>
    %c38_168 = arith.constant 38 : index
    %745 = memref.load %arg4[%c38_168] : memref<144xf32, #tpu.memory_space<smem>>
    %746 = vector.broadcast %745 : f32 to vector<16x16xf32>
    %747 = arith.mulf %746, %740 : vector<16x16xf32>
    %748 = arith.addf %730, %747 : vector<16x16xf32>
    %c74_169 = arith.constant 74 : index
    %749 = memref.load %arg4[%c74_169] : memref<144xf32, #tpu.memory_space<smem>>
    %750 = vector.broadcast %749 : f32 to vector<16x16xf32>
    %751 = arith.mulf %750, %740 : vector<16x16xf32>
    %752 = arith.addf %734, %751 : vector<16x16xf32>
    %c110_170 = arith.constant 110 : index
    %753 = memref.load %arg4[%c110_170] : memref<144xf32, #tpu.memory_space<smem>>
    %754 = vector.broadcast %753 : f32 to vector<16x16xf32>
    %755 = arith.mulf %754, %740 : vector<16x16xf32>
    %756 = arith.addf %738, %755 : vector<16x16xf32>
    %c0_171 = arith.constant 0 : index
    %c1_172 = arith.constant 1 : index
    %c0_173 = arith.constant 0 : index
    %757 = vector.load %arg8[%c0_171, %c1_172, %c0_173] : memref<4x18x18xf32, #tpu.memory_space<vmem>>, vector<1x16x16xf32>
    %758 = vector.shape_cast %757 : vector<1x16x16xf32> to vector<16x16xf32>
    %c3_174 = arith.constant 3 : index
    %759 = memref.load %arg4[%c3_174] : memref<144xf32, #tpu.memory_space<smem>>
    %760 = vector.broadcast %759 : f32 to vector<16x16xf32>
    %761 = arith.mulf %760, %758 : vector<16x16xf32>
    %762 = arith.addf %744, %761 : vector<16x16xf32>
    %c39_175 = arith.constant 39 : index
    %763 = memref.load %arg4[%c39_175] : memref<144xf32, #tpu.memory_space<smem>>
    %764 = vector.broadcast %763 : f32 to vector<16x16xf32>
    %765 = arith.mulf %764, %758 : vector<16x16xf32>
    %766 = arith.addf %748, %765 : vector<16x16xf32>
    %c75_176 = arith.constant 75 : index
    %767 = memref.load %arg4[%c75_176] : memref<144xf32, #tpu.memory_space<smem>>
    %768 = vector.broadcast %767 : f32 to vector<16x16xf32>
    %769 = arith.mulf %768, %758 : vector<16x16xf32>
    %770 = arith.addf %752, %769 : vector<16x16xf32>
    %c111_177 = arith.constant 111 : index
    %771 = memref.load %arg4[%c111_177] : memref<144xf32, #tpu.memory_space<smem>>
    %772 = vector.broadcast %771 : f32 to vector<16x16xf32>
    %773 = arith.mulf %772, %758 : vector<16x16xf32>
    %774 = arith.addf %756, %773 : vector<16x16xf32>
    %c0_178 = arith.constant 0 : index
    %c1_179 = arith.constant 1 : index
    %c1_180 = arith.constant 1 : index
    %775 = vector.load %arg8[%c0_178, %c1_179, %c1_180] : memref<4x18x18xf32, #tpu.memory_space<vmem>>, vector<1x16x16xf32>
    %776 = vector.shape_cast %775 : vector<1x16x16xf32> to vector<16x16xf32>
    %c4_181 = arith.constant 4 : index
    %777 = memref.load %arg4[%c4_181] : memref<144xf32, #tpu.memory_space<smem>>
    %778 = vector.broadcast %777 : f32 to vector<16x16xf32>
    %779 = arith.mulf %778, %776 : vector<16x16xf32>
    %780 = arith.addf %762, %779 : vector<16x16xf32>
    %c40_182 = arith.constant 40 : index
    %781 = memref.load %arg4[%c40_182] : memref<144xf32, #tpu.memory_space<smem>>
    %782 = vector.broadcast %781 : f32 to vector<16x16xf32>
    %783 = arith.mulf %782, %776 : vector<16x16xf32>
    %784 = arith.addf %766, %783 : vector<16x16xf32>
    %c76_183 = arith.constant 76 : index
    %785 = memref.load %arg4[%c76_183] : memref<144xf32, #tpu.memory_space<smem>>
    %786 = vector.broadcast %785 : f32 to vector<16x16xf32>
    %787 = arith.mulf %786, %776 : vector<16x16xf32>
    %788 = arith.addf %770, %787 : vector<16x16xf32>
    %c112_184 = arith.constant 112 : index
    %789 = memref.load %arg4[%c112_184] : memref<144xf32, #tpu.memory_space<smem>>
    %790 = vector.broadcast %789 : f32 to vector<16x16xf32>
    %791 = arith.mulf %790, %776 : vector<16x16xf32>
    %792 = arith.addf %774, %791 : vector<16x16xf32>
    %c0_185 = arith.constant 0 : index
    %c1_186 = arith.constant 1 : index
    %c2_187 = arith.constant 2 : index
    %793 = vector.load %arg8[%c0_185, %c1_186, %c2_187] : memref<4x18x18xf32, #tpu.memory_space<vmem>>, vector<1x16x16xf32>
    %794 = vector.shape_cast %793 : vector<1x16x16xf32> to vector<16x16xf32>
    %c5_188 = arith.constant 5 : index
    %795 = memref.load %arg4[%c5_188] : memref<144xf32, #tpu.memory_space<smem>>
    %796 = vector.broadcast %795 : f32 to vector<16x16xf32>
    %797 = arith.mulf %796, %794 : vector<16x16xf32>
    %798 = arith.addf %780, %797 : vector<16x16xf32>
    %c41_189 = arith.constant 41 : index
    %799 = memref.load %arg4[%c41_189] : memref<144xf32, #tpu.memory_space<smem>>
    %800 = vector.broadcast %799 : f32 to vector<16x16xf32>
    %801 = arith.mulf %800, %794 : vector<16x16xf32>
    %802 = arith.addf %784, %801 : vector<16x16xf32>
    %c77_190 = arith.constant 77 : index
    %803 = memref.load %arg4[%c77_190] : memref<144xf32, #tpu.memory_space<smem>>
    %804 = vector.broadcast %803 : f32 to vector<16x16xf32>
    %805 = arith.mulf %804, %794 : vector<16x16xf32>
    %806 = arith.addf %788, %805 : vector<16x16xf32>
    %c113_191 = arith.constant 113 : index
    %807 = memref.load %arg4[%c113_191] : memref<144xf32, #tpu.memory_space<smem>>
    %808 = vector.broadcast %807 : f32 to vector<16x16xf32>
    %809 = arith.mulf %808, %794 : vector<16x16xf32>
    %810 = arith.addf %792, %809 : vector<16x16xf32>
    %c0_192 = arith.constant 0 : index
    %c2_193 = arith.constant 2 : index
    %c0_194 = arith.constant 0 : index
    %811 = vector.load %arg8[%c0_192, %c2_193, %c0_194] : memref<4x18x18xf32, #tpu.memory_space<vmem>>, vector<1x16x16xf32>
    %812 = vector.shape_cast %811 : vector<1x16x16xf32> to vector<16x16xf32>
    %c6_195 = arith.constant 6 : index
    %813 = memref.load %arg4[%c6_195] : memref<144xf32, #tpu.memory_space<smem>>
    %814 = vector.broadcast %813 : f32 to vector<16x16xf32>
    %815 = arith.mulf %814, %812 : vector<16x16xf32>
    %816 = arith.addf %798, %815 : vector<16x16xf32>
    %c42_196 = arith.constant 42 : index
    %817 = memref.load %arg4[%c42_196] : memref<144xf32, #tpu.memory_space<smem>>
    %818 = vector.broadcast %817 : f32 to vector<16x16xf32>
    %819 = arith.mulf %818, %812 : vector<16x16xf32>
    %820 = arith.addf %802, %819 : vector<16x16xf32>
    %c78_197 = arith.constant 78 : index
    %821 = memref.load %arg4[%c78_197] : memref<144xf32, #tpu.memory_space<smem>>
    %822 = vector.broadcast %821 : f32 to vector<16x16xf32>
    %823 = arith.mulf %822, %812 : vector<16x16xf32>
    %824 = arith.addf %806, %823 : vector<16x16xf32>
    %c114_198 = arith.constant 114 : index
    %825 = memref.load %arg4[%c114_198] : memref<144xf32, #tpu.memory_space<smem>>
    %826 = vector.broadcast %825 : f32 to vector<16x16xf32>
    %827 = arith.mulf %826, %812 : vector<16x16xf32>
    %828 = arith.addf %810, %827 : vector<16x16xf32>
    %c0_199 = arith.constant 0 : index
    %c2_200 = arith.constant 2 : index
    %c1_201 = arith.constant 1 : index
    %829 = vector.load %arg8[%c0_199, %c2_200, %c1_201] : memref<4x18x18xf32, #tpu.memory_space<vmem>>, vector<1x16x16xf32>
    %830 = vector.shape_cast %829 : vector<1x16x16xf32> to vector<16x16xf32>
    %c7_202 = arith.constant 7 : index
    %831 = memref.load %arg4[%c7_202] : memref<144xf32, #tpu.memory_space<smem>>
    %832 = vector.broadcast %831 : f32 to vector<16x16xf32>
    %833 = arith.mulf %832, %830 : vector<16x16xf32>
    %834 = arith.addf %816, %833 : vector<16x16xf32>
    %c43_203 = arith.constant 43 : index
    %835 = memref.load %arg4[%c43_203] : memref<144xf32, #tpu.memory_space<smem>>
    %836 = vector.broadcast %835 : f32 to vector<16x16xf32>
    %837 = arith.mulf %836, %830 : vector<16x16xf32>
    %838 = arith.addf %820, %837 : vector<16x16xf32>
    %c79_204 = arith.constant 79 : index
    %839 = memref.load %arg4[%c79_204] : memref<144xf32, #tpu.memory_space<smem>>
    %840 = vector.broadcast %839 : f32 to vector<16x16xf32>
    %841 = arith.mulf %840, %830 : vector<16x16xf32>
    %842 = arith.addf %824, %841 : vector<16x16xf32>
    %c115_205 = arith.constant 115 : index
    %843 = memref.load %arg4[%c115_205] : memref<144xf32, #tpu.memory_space<smem>>
    %844 = vector.broadcast %843 : f32 to vector<16x16xf32>
    %845 = arith.mulf %844, %830 : vector<16x16xf32>
    %846 = arith.addf %828, %845 : vector<16x16xf32>
    %c0_206 = arith.constant 0 : index
    %c2_207 = arith.constant 2 : index
    %c2_208 = arith.constant 2 : index
    %847 = vector.load %arg8[%c0_206, %c2_207, %c2_208] : memref<4x18x18xf32, #tpu.memory_space<vmem>>, vector<1x16x16xf32>
    %848 = vector.shape_cast %847 : vector<1x16x16xf32> to vector<16x16xf32>
    %c8_209 = arith.constant 8 : index
    %849 = memref.load %arg4[%c8_209] : memref<144xf32, #tpu.memory_space<smem>>
    %850 = vector.broadcast %849 : f32 to vector<16x16xf32>
    %851 = arith.mulf %850, %848 : vector<16x16xf32>
    %852 = arith.addf %834, %851 : vector<16x16xf32>
    %c44_210 = arith.constant 44 : index
    %853 = memref.load %arg4[%c44_210] : memref<144xf32, #tpu.memory_space<smem>>
    %854 = vector.broadcast %853 : f32 to vector<16x16xf32>
    %855 = arith.mulf %854, %848 : vector<16x16xf32>
    %856 = arith.addf %838, %855 : vector<16x16xf32>
    %c80_211 = arith.constant 80 : index
    %857 = memref.load %arg4[%c80_211] : memref<144xf32, #tpu.memory_space<smem>>
    %858 = vector.broadcast %857 : f32 to vector<16x16xf32>
    %859 = arith.mulf %858, %848 : vector<16x16xf32>
    %860 = arith.addf %842, %859 : vector<16x16xf32>
    %c116_212 = arith.constant 116 : index
    %861 = memref.load %arg4[%c116_212] : memref<144xf32, #tpu.memory_space<smem>>
    %862 = vector.broadcast %861 : f32 to vector<16x16xf32>
    %863 = arith.mulf %862, %848 : vector<16x16xf32>
    %864 = arith.addf %846, %863 : vector<16x16xf32>
    %c1_213 = arith.constant 1 : index
    %c0_214 = arith.constant 0 : index
    %c0_215 = arith.constant 0 : index
    %865 = vector.load %arg8[%c1_213, %c0_214, %c0_215] : memref<4x18x18xf32, #tpu.memory_space<vmem>>, vector<1x16x16xf32>
    %866 = vector.shape_cast %865 : vector<1x16x16xf32> to vector<16x16xf32>
    %c9_216 = arith.constant 9 : index
    %867 = memref.load %arg4[%c9_216] : memref<144xf32, #tpu.memory_space<smem>>
    %868 = vector.broadcast %867 : f32 to vector<16x16xf32>
    %869 = arith.mulf %868, %866 : vector<16x16xf32>
    %870 = arith.addf %852, %869 : vector<16x16xf32>
    %c45_217 = arith.constant 45 : index
    %871 = memref.load %arg4[%c45_217] : memref<144xf32, #tpu.memory_space<smem>>
    %872 = vector.broadcast %871 : f32 to vector<16x16xf32>
    %873 = arith.mulf %872, %866 : vector<16x16xf32>
    %874 = arith.addf %856, %873 : vector<16x16xf32>
    %c81_218 = arith.constant 81 : index
    %875 = memref.load %arg4[%c81_218] : memref<144xf32, #tpu.memory_space<smem>>
    %876 = vector.broadcast %875 : f32 to vector<16x16xf32>
    %877 = arith.mulf %876, %866 : vector<16x16xf32>
    %878 = arith.addf %860, %877 : vector<16x16xf32>
    %c117_219 = arith.constant 117 : index
    %879 = memref.load %arg4[%c117_219] : memref<144xf32, #tpu.memory_space<smem>>
    %880 = vector.broadcast %879 : f32 to vector<16x16xf32>
    %881 = arith.mulf %880, %866 : vector<16x16xf32>
    %882 = arith.addf %864, %881 : vector<16x16xf32>
    %c1_220 = arith.constant 1 : index
    %c0_221 = arith.constant 0 : index
    %c1_222 = arith.constant 1 : index
    %883 = vector.load %arg8[%c1_220, %c0_221, %c1_222] : memref<4x18x18xf32, #tpu.memory_space<vmem>>, vector<1x16x16xf32>
    %884 = vector.shape_cast %883 : vector<1x16x16xf32> to vector<16x16xf32>
    %c10_223 = arith.constant 10 : index
    %885 = memref.load %arg4[%c10_223] : memref<144xf32, #tpu.memory_space<smem>>
    %886 = vector.broadcast %885 : f32 to vector<16x16xf32>
    %887 = arith.mulf %886, %884 : vector<16x16xf32>
    %888 = arith.addf %870, %887 : vector<16x16xf32>
    %c46_224 = arith.constant 46 : index
    %889 = memref.load %arg4[%c46_224] : memref<144xf32, #tpu.memory_space<smem>>
    %890 = vector.broadcast %889 : f32 to vector<16x16xf32>
    %891 = arith.mulf %890, %884 : vector<16x16xf32>
    %892 = arith.addf %874, %891 : vector<16x16xf32>
    %c82_225 = arith.constant 82 : index
    %893 = memref.load %arg4[%c82_225] : memref<144xf32, #tpu.memory_space<smem>>
    %894 = vector.broadcast %893 : f32 to vector<16x16xf32>
    %895 = arith.mulf %894, %884 : vector<16x16xf32>
    %896 = arith.addf %878, %895 : vector<16x16xf32>
    %c118_226 = arith.constant 118 : index
    %897 = memref.load %arg4[%c118_226] : memref<144xf32, #tpu.memory_space<smem>>
    %898 = vector.broadcast %897 : f32 to vector<16x16xf32>
    %899 = arith.mulf %898, %884 : vector<16x16xf32>
    %900 = arith.addf %882, %899 : vector<16x16xf32>
    %c1_227 = arith.constant 1 : index
    %c0_228 = arith.constant 0 : index
    %c2_229 = arith.constant 2 : index
    %901 = vector.load %arg8[%c1_227, %c0_228, %c2_229] : memref<4x18x18xf32, #tpu.memory_space<vmem>>, vector<1x16x16xf32>
    %902 = vector.shape_cast %901 : vector<1x16x16xf32> to vector<16x16xf32>
    %c11_230 = arith.constant 11 : index
    %903 = memref.load %arg4[%c11_230] : memref<144xf32, #tpu.memory_space<smem>>
    %904 = vector.broadcast %903 : f32 to vector<16x16xf32>
    %905 = arith.mulf %904, %902 : vector<16x16xf32>
    %906 = arith.addf %888, %905 : vector<16x16xf32>
    %c47_231 = arith.constant 47 : index
    %907 = memref.load %arg4[%c47_231] : memref<144xf32, #tpu.memory_space<smem>>
    %908 = vector.broadcast %907 : f32 to vector<16x16xf32>
    %909 = arith.mulf %908, %902 : vector<16x16xf32>
    %910 = arith.addf %892, %909 : vector<16x16xf32>
    %c83_232 = arith.constant 83 : index
    %911 = memref.load %arg4[%c83_232] : memref<144xf32, #tpu.memory_space<smem>>
    %912 = vector.broadcast %911 : f32 to vector<16x16xf32>
    %913 = arith.mulf %912, %902 : vector<16x16xf32>
    %914 = arith.addf %896, %913 : vector<16x16xf32>
    %c119_233 = arith.constant 119 : index
    %915 = memref.load %arg4[%c119_233] : memref<144xf32, #tpu.memory_space<smem>>
    %916 = vector.broadcast %915 : f32 to vector<16x16xf32>
    %917 = arith.mulf %916, %902 : vector<16x16xf32>
    %918 = arith.addf %900, %917 : vector<16x16xf32>
    %c1_234 = arith.constant 1 : index
    %c1_235 = arith.constant 1 : index
    %c0_236 = arith.constant 0 : index
    %919 = vector.load %arg8[%c1_234, %c1_235, %c0_236] : memref<4x18x18xf32, #tpu.memory_space<vmem>>, vector<1x16x16xf32>
    %920 = vector.shape_cast %919 : vector<1x16x16xf32> to vector<16x16xf32>
    %c12_237 = arith.constant 12 : index
    %921 = memref.load %arg4[%c12_237] : memref<144xf32, #tpu.memory_space<smem>>
    %922 = vector.broadcast %921 : f32 to vector<16x16xf32>
    %923 = arith.mulf %922, %920 : vector<16x16xf32>
    %924 = arith.addf %906, %923 : vector<16x16xf32>
    %c48_238 = arith.constant 48 : index
    %925 = memref.load %arg4[%c48_238] : memref<144xf32, #tpu.memory_space<smem>>
    %926 = vector.broadcast %925 : f32 to vector<16x16xf32>
    %927 = arith.mulf %926, %920 : vector<16x16xf32>
    %928 = arith.addf %910, %927 : vector<16x16xf32>
    %c84_239 = arith.constant 84 : index
    %929 = memref.load %arg4[%c84_239] : memref<144xf32, #tpu.memory_space<smem>>
    %930 = vector.broadcast %929 : f32 to vector<16x16xf32>
    %931 = arith.mulf %930, %920 : vector<16x16xf32>
    %932 = arith.addf %914, %931 : vector<16x16xf32>
    %c120_240 = arith.constant 120 : index
    %933 = memref.load %arg4[%c120_240] : memref<144xf32, #tpu.memory_space<smem>>
    %934 = vector.broadcast %933 : f32 to vector<16x16xf32>
    %935 = arith.mulf %934, %920 : vector<16x16xf32>
    %936 = arith.addf %918, %935 : vector<16x16xf32>
    %c1_241 = arith.constant 1 : index
    %c1_242 = arith.constant 1 : index
    %c1_243 = arith.constant 1 : index
    %937 = vector.load %arg8[%c1_241, %c1_242, %c1_243] : memref<4x18x18xf32, #tpu.memory_space<vmem>>, vector<1x16x16xf32>
    %938 = vector.shape_cast %937 : vector<1x16x16xf32> to vector<16x16xf32>
    %c13_244 = arith.constant 13 : index
    %939 = memref.load %arg4[%c13_244] : memref<144xf32, #tpu.memory_space<smem>>
    %940 = vector.broadcast %939 : f32 to vector<16x16xf32>
    %941 = arith.mulf %940, %938 : vector<16x16xf32>
    %942 = arith.addf %924, %941 : vector<16x16xf32>
    %c49_245 = arith.constant 49 : index
    %943 = memref.load %arg4[%c49_245] : memref<144xf32, #tpu.memory_space<smem>>
    %944 = vector.broadcast %943 : f32 to vector<16x16xf32>
    %945 = arith.mulf %944, %938 : vector<16x16xf32>
    %946 = arith.addf %928, %945 : vector<16x16xf32>
    %c85_246 = arith.constant 85 : index
    %947 = memref.load %arg4[%c85_246] : memref<144xf32, #tpu.memory_space<smem>>
    %948 = vector.broadcast %947 : f32 to vector<16x16xf32>
    %949 = arith.mulf %948, %938 : vector<16x16xf32>
    %950 = arith.addf %932, %949 : vector<16x16xf32>
    %c121_247 = arith.constant 121 : index
    %951 = memref.load %arg4[%c121_247] : memref<144xf32, #tpu.memory_space<smem>>
    %952 = vector.broadcast %951 : f32 to vector<16x16xf32>
    %953 = arith.mulf %952, %938 : vector<16x16xf32>
    %954 = arith.addf %936, %953 : vector<16x16xf32>
    %c1_248 = arith.constant 1 : index
    %c1_249 = arith.constant 1 : index
    %c2_250 = arith.constant 2 : index
    %955 = vector.load %arg8[%c1_248, %c1_249, %c2_250] : memref<4x18x18xf32, #tpu.memory_space<vmem>>, vector<1x16x16xf32>
    %956 = vector.shape_cast %955 : vector<1x16x16xf32> to vector<16x16xf32>
    %c14_251 = arith.constant 14 : index
    %957 = memref.load %arg4[%c14_251] : memref<144xf32, #tpu.memory_space<smem>>
    %958 = vector.broadcast %957 : f32 to vector<16x16xf32>
    %959 = arith.mulf %958, %956 : vector<16x16xf32>
    %960 = arith.addf %942, %959 : vector<16x16xf32>
    %c50_252 = arith.constant 50 : index
    %961 = memref.load %arg4[%c50_252] : memref<144xf32, #tpu.memory_space<smem>>
    %962 = vector.broadcast %961 : f32 to vector<16x16xf32>
    %963 = arith.mulf %962, %956 : vector<16x16xf32>
    %964 = arith.addf %946, %963 : vector<16x16xf32>
    %c86_253 = arith.constant 86 : index
    %965 = memref.load %arg4[%c86_253] : memref<144xf32, #tpu.memory_space<smem>>
    %966 = vector.broadcast %965 : f32 to vector<16x16xf32>
    %967 = arith.mulf %966, %956 : vector<16x16xf32>
    %968 = arith.addf %950, %967 : vector<16x16xf32>
    %c122_254 = arith.constant 122 : index
    %969 = memref.load %arg4[%c122_254] : memref<144xf32, #tpu.memory_space<smem>>
    %970 = vector.broadcast %969 : f32 to vector<16x16xf32>
    %971 = arith.mulf %970, %956 : vector<16x16xf32>
    %972 = arith.addf %954, %971 : vector<16x16xf32>
    %c1_255 = arith.constant 1 : index
    %c2_256 = arith.constant 2 : index
    %c0_257 = arith.constant 0 : index
    %973 = vector.load %arg8[%c1_255, %c2_256, %c0_257] : memref<4x18x18xf32, #tpu.memory_space<vmem>>, vector<1x16x16xf32>
    %974 = vector.shape_cast %973 : vector<1x16x16xf32> to vector<16x16xf32>
    %c15_258 = arith.constant 15 : index
    %975 = memref.load %arg4[%c15_258] : memref<144xf32, #tpu.memory_space<smem>>
    %976 = vector.broadcast %975 : f32 to vector<16x16xf32>
    %977 = arith.mulf %976, %974 : vector<16x16xf32>
    %978 = arith.addf %960, %977 : vector<16x16xf32>
    %c51_259 = arith.constant 51 : index
    %979 = memref.load %arg4[%c51_259] : memref<144xf32, #tpu.memory_space<smem>>
    %980 = vector.broadcast %979 : f32 to vector<16x16xf32>
    %981 = arith.mulf %980, %974 : vector<16x16xf32>
    %982 = arith.addf %964, %981 : vector<16x16xf32>
    %c87_260 = arith.constant 87 : index
    %983 = memref.load %arg4[%c87_260] : memref<144xf32, #tpu.memory_space<smem>>
    %984 = vector.broadcast %983 : f32 to vector<16x16xf32>
    %985 = arith.mulf %984, %974 : vector<16x16xf32>
    %986 = arith.addf %968, %985 : vector<16x16xf32>
    %c123_261 = arith.constant 123 : index
    %987 = memref.load %arg4[%c123_261] : memref<144xf32, #tpu.memory_space<smem>>
    %988 = vector.broadcast %987 : f32 to vector<16x16xf32>
    %989 = arith.mulf %988, %974 : vector<16x16xf32>
    %990 = arith.addf %972, %989 : vector<16x16xf32>
    %c1_262 = arith.constant 1 : index
    %c2_263 = arith.constant 2 : index
    %c1_264 = arith.constant 1 : index
    %991 = vector.load %arg8[%c1_262, %c2_263, %c1_264] : memref<4x18x18xf32, #tpu.memory_space<vmem>>, vector<1x16x16xf32>
    %992 = vector.shape_cast %991 : vector<1x16x16xf32> to vector<16x16xf32>
    %c16_265 = arith.constant 16 : index
    %993 = memref.load %arg4[%c16_265] : memref<144xf32, #tpu.memory_space<smem>>
    %994 = vector.broadcast %993 : f32 to vector<16x16xf32>
    %995 = arith.mulf %994, %992 : vector<16x16xf32>
    %996 = arith.addf %978, %995 : vector<16x16xf32>
    %c52_266 = arith.constant 52 : index
    %997 = memref.load %arg4[%c52_266] : memref<144xf32, #tpu.memory_space<smem>>
    %998 = vector.broadcast %997 : f32 to vector<16x16xf32>
    %999 = arith.mulf %998, %992 : vector<16x16xf32>
    %1000 = arith.addf %982, %999 : vector<16x16xf32>
    %c88_267 = arith.constant 88 : index
    %1001 = memref.load %arg4[%c88_267] : memref<144xf32, #tpu.memory_space<smem>>
    %1002 = vector.broadcast %1001 : f32 to vector<16x16xf32>
    %1003 = arith.mulf %1002, %992 : vector<16x16xf32>
    %1004 = arith.addf %986, %1003 : vector<16x16xf32>
    %c124_268 = arith.constant 124 : index
    %1005 = memref.load %arg4[%c124_268] : memref<144xf32, #tpu.memory_space<smem>>
    %1006 = vector.broadcast %1005 : f32 to vector<16x16xf32>
    %1007 = arith.mulf %1006, %992 : vector<16x16xf32>
    %1008 = arith.addf %990, %1007 : vector<16x16xf32>
    %c1_269 = arith.constant 1 : index
    %c2_270 = arith.constant 2 : index
    %c2_271 = arith.constant 2 : index
    %1009 = vector.load %arg8[%c1_269, %c2_270, %c2_271] : memref<4x18x18xf32, #tpu.memory_space<vmem>>, vector<1x16x16xf32>
    %1010 = vector.shape_cast %1009 : vector<1x16x16xf32> to vector<16x16xf32>
    %c17_272 = arith.constant 17 : index
    %1011 = memref.load %arg4[%c17_272] : memref<144xf32, #tpu.memory_space<smem>>
    %1012 = vector.broadcast %1011 : f32 to vector<16x16xf32>
    %1013 = arith.mulf %1012, %1010 : vector<16x16xf32>
    %1014 = arith.addf %996, %1013 : vector<16x16xf32>
    %c53_273 = arith.constant 53 : index
    %1015 = memref.load %arg4[%c53_273] : memref<144xf32, #tpu.memory_space<smem>>
    %1016 = vector.broadcast %1015 : f32 to vector<16x16xf32>
    %1017 = arith.mulf %1016, %1010 : vector<16x16xf32>
    %1018 = arith.addf %1000, %1017 : vector<16x16xf32>
    %c89_274 = arith.constant 89 : index
    %1019 = memref.load %arg4[%c89_274] : memref<144xf32, #tpu.memory_space<smem>>
    %1020 = vector.broadcast %1019 : f32 to vector<16x16xf32>
    %1021 = arith.mulf %1020, %1010 : vector<16x16xf32>
    %1022 = arith.addf %1004, %1021 : vector<16x16xf32>
    %c125_275 = arith.constant 125 : index
    %1023 = memref.load %arg4[%c125_275] : memref<144xf32, #tpu.memory_space<smem>>
    %1024 = vector.broadcast %1023 : f32 to vector<16x16xf32>
    %1025 = arith.mulf %1024, %1010 : vector<16x16xf32>
    %1026 = arith.addf %1008, %1025 : vector<16x16xf32>
    %c2_276 = arith.constant 2 : index
    %c0_277 = arith.constant 0 : index
    %c0_278 = arith.constant 0 : index
    %1027 = vector.load %arg8[%c2_276, %c0_277, %c0_278] : memref<4x18x18xf32, #tpu.memory_space<vmem>>, vector<1x16x16xf32>
    %1028 = vector.shape_cast %1027 : vector<1x16x16xf32> to vector<16x16xf32>
    %c18_279 = arith.constant 18 : index
    %1029 = memref.load %arg4[%c18_279] : memref<144xf32, #tpu.memory_space<smem>>
    %1030 = vector.broadcast %1029 : f32 to vector<16x16xf32>
    %1031 = arith.mulf %1030, %1028 : vector<16x16xf32>
    %1032 = arith.addf %1014, %1031 : vector<16x16xf32>
    %c54_280 = arith.constant 54 : index
    %1033 = memref.load %arg4[%c54_280] : memref<144xf32, #tpu.memory_space<smem>>
    %1034 = vector.broadcast %1033 : f32 to vector<16x16xf32>
    %1035 = arith.mulf %1034, %1028 : vector<16x16xf32>
    %1036 = arith.addf %1018, %1035 : vector<16x16xf32>
    %c90_281 = arith.constant 90 : index
    %1037 = memref.load %arg4[%c90_281] : memref<144xf32, #tpu.memory_space<smem>>
    %1038 = vector.broadcast %1037 : f32 to vector<16x16xf32>
    %1039 = arith.mulf %1038, %1028 : vector<16x16xf32>
    %1040 = arith.addf %1022, %1039 : vector<16x16xf32>
    %c126_282 = arith.constant 126 : index
    %1041 = memref.load %arg4[%c126_282] : memref<144xf32, #tpu.memory_space<smem>>
    %1042 = vector.broadcast %1041 : f32 to vector<16x16xf32>
    %1043 = arith.mulf %1042, %1028 : vector<16x16xf32>
    %1044 = arith.addf %1026, %1043 : vector<16x16xf32>
    %c2_283 = arith.constant 2 : index
    %c0_284 = arith.constant 0 : index
    %c1_285 = arith.constant 1 : index
    %1045 = vector.load %arg8[%c2_283, %c0_284, %c1_285] : memref<4x18x18xf32, #tpu.memory_space<vmem>>, vector<1x16x16xf32>
    %1046 = vector.shape_cast %1045 : vector<1x16x16xf32> to vector<16x16xf32>
    %c19_286 = arith.constant 19 : index
    %1047 = memref.load %arg4[%c19_286] : memref<144xf32, #tpu.memory_space<smem>>
    %1048 = vector.broadcast %1047 : f32 to vector<16x16xf32>
    %1049 = arith.mulf %1048, %1046 : vector<16x16xf32>
    %1050 = arith.addf %1032, %1049 : vector<16x16xf32>
    %c55_287 = arith.constant 55 : index
    %1051 = memref.load %arg4[%c55_287] : memref<144xf32, #tpu.memory_space<smem>>
    %1052 = vector.broadcast %1051 : f32 to vector<16x16xf32>
    %1053 = arith.mulf %1052, %1046 : vector<16x16xf32>
    %1054 = arith.addf %1036, %1053 : vector<16x16xf32>
    %c91_288 = arith.constant 91 : index
    %1055 = memref.load %arg4[%c91_288] : memref<144xf32, #tpu.memory_space<smem>>
    %1056 = vector.broadcast %1055 : f32 to vector<16x16xf32>
    %1057 = arith.mulf %1056, %1046 : vector<16x16xf32>
    %1058 = arith.addf %1040, %1057 : vector<16x16xf32>
    %c127_289 = arith.constant 127 : index
    %1059 = memref.load %arg4[%c127_289] : memref<144xf32, #tpu.memory_space<smem>>
    %1060 = vector.broadcast %1059 : f32 to vector<16x16xf32>
    %1061 = arith.mulf %1060, %1046 : vector<16x16xf32>
    %1062 = arith.addf %1044, %1061 : vector<16x16xf32>
    %c2_290 = arith.constant 2 : index
    %c0_291 = arith.constant 0 : index
    %c2_292 = arith.constant 2 : index
    %1063 = vector.load %arg8[%c2_290, %c0_291, %c2_292] : memref<4x18x18xf32, #tpu.memory_space<vmem>>, vector<1x16x16xf32>
    %1064 = vector.shape_cast %1063 : vector<1x16x16xf32> to vector<16x16xf32>
    %c20_293 = arith.constant 20 : index
    %1065 = memref.load %arg4[%c20_293] : memref<144xf32, #tpu.memory_space<smem>>
    %1066 = vector.broadcast %1065 : f32 to vector<16x16xf32>
    %1067 = arith.mulf %1066, %1064 : vector<16x16xf32>
    %1068 = arith.addf %1050, %1067 : vector<16x16xf32>
    %c56_294 = arith.constant 56 : index
    %1069 = memref.load %arg4[%c56_294] : memref<144xf32, #tpu.memory_space<smem>>
    %1070 = vector.broadcast %1069 : f32 to vector<16x16xf32>
    %1071 = arith.mulf %1070, %1064 : vector<16x16xf32>
    %1072 = arith.addf %1054, %1071 : vector<16x16xf32>
    %c92_295 = arith.constant 92 : index
    %1073 = memref.load %arg4[%c92_295] : memref<144xf32, #tpu.memory_space<smem>>
    %1074 = vector.broadcast %1073 : f32 to vector<16x16xf32>
    %1075 = arith.mulf %1074, %1064 : vector<16x16xf32>
    %1076 = arith.addf %1058, %1075 : vector<16x16xf32>
    %c128_296 = arith.constant 128 : index
    %1077 = memref.load %arg4[%c128_296] : memref<144xf32, #tpu.memory_space<smem>>
    %1078 = vector.broadcast %1077 : f32 to vector<16x16xf32>
    %1079 = arith.mulf %1078, %1064 : vector<16x16xf32>
    %1080 = arith.addf %1062, %1079 : vector<16x16xf32>
    %c2_297 = arith.constant 2 : index
    %c1_298 = arith.constant 1 : index
    %c0_299 = arith.constant 0 : index
    %1081 = vector.load %arg8[%c2_297, %c1_298, %c0_299] : memref<4x18x18xf32, #tpu.memory_space<vmem>>, vector<1x16x16xf32>
    %1082 = vector.shape_cast %1081 : vector<1x16x16xf32> to vector<16x16xf32>
    %c21_300 = arith.constant 21 : index
    %1083 = memref.load %arg4[%c21_300] : memref<144xf32, #tpu.memory_space<smem>>
    %1084 = vector.broadcast %1083 : f32 to vector<16x16xf32>
    %1085 = arith.mulf %1084, %1082 : vector<16x16xf32>
    %1086 = arith.addf %1068, %1085 : vector<16x16xf32>
    %c57_301 = arith.constant 57 : index
    %1087 = memref.load %arg4[%c57_301] : memref<144xf32, #tpu.memory_space<smem>>
    %1088 = vector.broadcast %1087 : f32 to vector<16x16xf32>
    %1089 = arith.mulf %1088, %1082 : vector<16x16xf32>
    %1090 = arith.addf %1072, %1089 : vector<16x16xf32>
    %c93_302 = arith.constant 93 : index
    %1091 = memref.load %arg4[%c93_302] : memref<144xf32, #tpu.memory_space<smem>>
    %1092 = vector.broadcast %1091 : f32 to vector<16x16xf32>
    %1093 = arith.mulf %1092, %1082 : vector<16x16xf32>
    %1094 = arith.addf %1076, %1093 : vector<16x16xf32>
    %c129_303 = arith.constant 129 : index
    %1095 = memref.load %arg4[%c129_303] : memref<144xf32, #tpu.memory_space<smem>>
    %1096 = vector.broadcast %1095 : f32 to vector<16x16xf32>
    %1097 = arith.mulf %1096, %1082 : vector<16x16xf32>
    %1098 = arith.addf %1080, %1097 : vector<16x16xf32>
    %c2_304 = arith.constant 2 : index
    %c1_305 = arith.constant 1 : index
    %c1_306 = arith.constant 1 : index
    %1099 = vector.load %arg8[%c2_304, %c1_305, %c1_306] : memref<4x18x18xf32, #tpu.memory_space<vmem>>, vector<1x16x16xf32>
    %1100 = vector.shape_cast %1099 : vector<1x16x16xf32> to vector<16x16xf32>
    %c22_307 = arith.constant 22 : index
    %1101 = memref.load %arg4[%c22_307] : memref<144xf32, #tpu.memory_space<smem>>
    %1102 = vector.broadcast %1101 : f32 to vector<16x16xf32>
    %1103 = arith.mulf %1102, %1100 : vector<16x16xf32>
    %1104 = arith.addf %1086, %1103 : vector<16x16xf32>
    %c58_308 = arith.constant 58 : index
    %1105 = memref.load %arg4[%c58_308] : memref<144xf32, #tpu.memory_space<smem>>
    %1106 = vector.broadcast %1105 : f32 to vector<16x16xf32>
    %1107 = arith.mulf %1106, %1100 : vector<16x16xf32>
    %1108 = arith.addf %1090, %1107 : vector<16x16xf32>
    %c94_309 = arith.constant 94 : index
    %1109 = memref.load %arg4[%c94_309] : memref<144xf32, #tpu.memory_space<smem>>
    %1110 = vector.broadcast %1109 : f32 to vector<16x16xf32>
    %1111 = arith.mulf %1110, %1100 : vector<16x16xf32>
    %1112 = arith.addf %1094, %1111 : vector<16x16xf32>
    %c130_310 = arith.constant 130 : index
    %1113 = memref.load %arg4[%c130_310] : memref<144xf32, #tpu.memory_space<smem>>
    %1114 = vector.broadcast %1113 : f32 to vector<16x16xf32>
    %1115 = arith.mulf %1114, %1100 : vector<16x16xf32>
    %1116 = arith.addf %1098, %1115 : vector<16x16xf32>
    %c2_311 = arith.constant 2 : index
    %c1_312 = arith.constant 1 : index
    %c2_313 = arith.constant 2 : index
    %1117 = vector.load %arg8[%c2_311, %c1_312, %c2_313] : memref<4x18x18xf32, #tpu.memory_space<vmem>>, vector<1x16x16xf32>
    %1118 = vector.shape_cast %1117 : vector<1x16x16xf32> to vector<16x16xf32>
    %c23_314 = arith.constant 23 : index
    %1119 = memref.load %arg4[%c23_314] : memref<144xf32, #tpu.memory_space<smem>>
    %1120 = vector.broadcast %1119 : f32 to vector<16x16xf32>
    %1121 = arith.mulf %1120, %1118 : vector<16x16xf32>
    %1122 = arith.addf %1104, %1121 : vector<16x16xf32>
    %c59_315 = arith.constant 59 : index
    %1123 = memref.load %arg4[%c59_315] : memref<144xf32, #tpu.memory_space<smem>>
    %1124 = vector.broadcast %1123 : f32 to vector<16x16xf32>
    %1125 = arith.mulf %1124, %1118 : vector<16x16xf32>
    %1126 = arith.addf %1108, %1125 : vector<16x16xf32>
    %c95_316 = arith.constant 95 : index
    %1127 = memref.load %arg4[%c95_316] : memref<144xf32, #tpu.memory_space<smem>>
    %1128 = vector.broadcast %1127 : f32 to vector<16x16xf32>
    %1129 = arith.mulf %1128, %1118 : vector<16x16xf32>
    %1130 = arith.addf %1112, %1129 : vector<16x16xf32>
    %c131_317 = arith.constant 131 : index
    %1131 = memref.load %arg4[%c131_317] : memref<144xf32, #tpu.memory_space<smem>>
    %1132 = vector.broadcast %1131 : f32 to vector<16x16xf32>
    %1133 = arith.mulf %1132, %1118 : vector<16x16xf32>
    %1134 = arith.addf %1116, %1133 : vector<16x16xf32>
    %c2_318 = arith.constant 2 : index
    %c2_319 = arith.constant 2 : index
    %c0_320 = arith.constant 0 : index
    %1135 = vector.load %arg8[%c2_318, %c2_319, %c0_320] : memref<4x18x18xf32, #tpu.memory_space<vmem>>, vector<1x16x16xf32>
    %1136 = vector.shape_cast %1135 : vector<1x16x16xf32> to vector<16x16xf32>
    %c24_321 = arith.constant 24 : index
    %1137 = memref.load %arg4[%c24_321] : memref<144xf32, #tpu.memory_space<smem>>
    %1138 = vector.broadcast %1137 : f32 to vector<16x16xf32>
    %1139 = arith.mulf %1138, %1136 : vector<16x16xf32>
    %1140 = arith.addf %1122, %1139 : vector<16x16xf32>
    %c60_322 = arith.constant 60 : index
    %1141 = memref.load %arg4[%c60_322] : memref<144xf32, #tpu.memory_space<smem>>
    %1142 = vector.broadcast %1141 : f32 to vector<16x16xf32>
    %1143 = arith.mulf %1142, %1136 : vector<16x16xf32>
    %1144 = arith.addf %1126, %1143 : vector<16x16xf32>
    %c96_323 = arith.constant 96 : index
    %1145 = memref.load %arg4[%c96_323] : memref<144xf32, #tpu.memory_space<smem>>
    %1146 = vector.broadcast %1145 : f32 to vector<16x16xf32>
    %1147 = arith.mulf %1146, %1136 : vector<16x16xf32>
    %1148 = arith.addf %1130, %1147 : vector<16x16xf32>
    %c132_324 = arith.constant 132 : index
    %1149 = memref.load %arg4[%c132_324] : memref<144xf32, #tpu.memory_space<smem>>
    %1150 = vector.broadcast %1149 : f32 to vector<16x16xf32>
    %1151 = arith.mulf %1150, %1136 : vector<16x16xf32>
    %1152 = arith.addf %1134, %1151 : vector<16x16xf32>
    %c2_325 = arith.constant 2 : index
    %c2_326 = arith.constant 2 : index
    %c1_327 = arith.constant 1 : index
    %1153 = vector.load %arg8[%c2_325, %c2_326, %c1_327] : memref<4x18x18xf32, #tpu.memory_space<vmem>>, vector<1x16x16xf32>
    %1154 = vector.shape_cast %1153 : vector<1x16x16xf32> to vector<16x16xf32>
    %c25_328 = arith.constant 25 : index
    %1155 = memref.load %arg4[%c25_328] : memref<144xf32, #tpu.memory_space<smem>>
    %1156 = vector.broadcast %1155 : f32 to vector<16x16xf32>
    %1157 = arith.mulf %1156, %1154 : vector<16x16xf32>
    %1158 = arith.addf %1140, %1157 : vector<16x16xf32>
    %c61_329 = arith.constant 61 : index
    %1159 = memref.load %arg4[%c61_329] : memref<144xf32, #tpu.memory_space<smem>>
    %1160 = vector.broadcast %1159 : f32 to vector<16x16xf32>
    %1161 = arith.mulf %1160, %1154 : vector<16x16xf32>
    %1162 = arith.addf %1144, %1161 : vector<16x16xf32>
    %c97_330 = arith.constant 97 : index
    %1163 = memref.load %arg4[%c97_330] : memref<144xf32, #tpu.memory_space<smem>>
    %1164 = vector.broadcast %1163 : f32 to vector<16x16xf32>
    %1165 = arith.mulf %1164, %1154 : vector<16x16xf32>
    %1166 = arith.addf %1148, %1165 : vector<16x16xf32>
    %c133_331 = arith.constant 133 : index
    %1167 = memref.load %arg4[%c133_331] : memref<144xf32, #tpu.memory_space<smem>>
    %1168 = vector.broadcast %1167 : f32 to vector<16x16xf32>
    %1169 = arith.mulf %1168, %1154 : vector<16x16xf32>
    %1170 = arith.addf %1152, %1169 : vector<16x16xf32>
    %c2_332 = arith.constant 2 : index
    %c2_333 = arith.constant 2 : index
    %c2_334 = arith.constant 2 : index
    %1171 = vector.load %arg8[%c2_332, %c2_333, %c2_334] : memref<4x18x18xf32, #tpu.memory_space<vmem>>, vector<1x16x16xf32>
    %1172 = vector.shape_cast %1171 : vector<1x16x16xf32> to vector<16x16xf32>
    %c26_335 = arith.constant 26 : index
    %1173 = memref.load %arg4[%c26_335] : memref<144xf32, #tpu.memory_space<smem>>
    %1174 = vector.broadcast %1173 : f32 to vector<16x16xf32>
    %1175 = arith.mulf %1174, %1172 : vector<16x16xf32>
    %1176 = arith.addf %1158, %1175 : vector<16x16xf32>
    %c62_336 = arith.constant 62 : index
    %1177 = memref.load %arg4[%c62_336] : memref<144xf32, #tpu.memory_space<smem>>
    %1178 = vector.broadcast %1177 : f32 to vector<16x16xf32>
    %1179 = arith.mulf %1178, %1172 : vector<16x16xf32>
    %1180 = arith.addf %1162, %1179 : vector<16x16xf32>
    %c98_337 = arith.constant 98 : index
    %1181 = memref.load %arg4[%c98_337] : memref<144xf32, #tpu.memory_space<smem>>
    %1182 = vector.broadcast %1181 : f32 to vector<16x16xf32>
    %1183 = arith.mulf %1182, %1172 : vector<16x16xf32>
    %1184 = arith.addf %1166, %1183 : vector<16x16xf32>
    %c134_338 = arith.constant 134 : index
    %1185 = memref.load %arg4[%c134_338] : memref<144xf32, #tpu.memory_space<smem>>
    %1186 = vector.broadcast %1185 : f32 to vector<16x16xf32>
    %1187 = arith.mulf %1186, %1172 : vector<16x16xf32>
    %1188 = arith.addf %1170, %1187 : vector<16x16xf32>
    %c3_339 = arith.constant 3 : index
    %c0_340 = arith.constant 0 : index
    %c0_341 = arith.constant 0 : index
    %1189 = vector.load %arg8[%c3_339, %c0_340, %c0_341] : memref<4x18x18xf32, #tpu.memory_space<vmem>>, vector<1x16x16xf32>
    %1190 = vector.shape_cast %1189 : vector<1x16x16xf32> to vector<16x16xf32>
    %c27_342 = arith.constant 27 : index
    %1191 = memref.load %arg4[%c27_342] : memref<144xf32, #tpu.memory_space<smem>>
    %1192 = vector.broadcast %1191 : f32 to vector<16x16xf32>
    %1193 = arith.mulf %1192, %1190 : vector<16x16xf32>
    %1194 = arith.addf %1176, %1193 : vector<16x16xf32>
    %c63_343 = arith.constant 63 : index
    %1195 = memref.load %arg4[%c63_343] : memref<144xf32, #tpu.memory_space<smem>>
    %1196 = vector.broadcast %1195 : f32 to vector<16x16xf32>
    %1197 = arith.mulf %1196, %1190 : vector<16x16xf32>
    %1198 = arith.addf %1180, %1197 : vector<16x16xf32>
    %c99_344 = arith.constant 99 : index
    %1199 = memref.load %arg4[%c99_344] : memref<144xf32, #tpu.memory_space<smem>>
    %1200 = vector.broadcast %1199 : f32 to vector<16x16xf32>
    %1201 = arith.mulf %1200, %1190 : vector<16x16xf32>
    %1202 = arith.addf %1184, %1201 : vector<16x16xf32>
    %c135_345 = arith.constant 135 : index
    %1203 = memref.load %arg4[%c135_345] : memref<144xf32, #tpu.memory_space<smem>>
    %1204 = vector.broadcast %1203 : f32 to vector<16x16xf32>
    %1205 = arith.mulf %1204, %1190 : vector<16x16xf32>
    %1206 = arith.addf %1188, %1205 : vector<16x16xf32>
    %c3_346 = arith.constant 3 : index
    %c0_347 = arith.constant 0 : index
    %c1_348 = arith.constant 1 : index
    %1207 = vector.load %arg8[%c3_346, %c0_347, %c1_348] : memref<4x18x18xf32, #tpu.memory_space<vmem>>, vector<1x16x16xf32>
    %1208 = vector.shape_cast %1207 : vector<1x16x16xf32> to vector<16x16xf32>
    %c28_349 = arith.constant 28 : index
    %1209 = memref.load %arg4[%c28_349] : memref<144xf32, #tpu.memory_space<smem>>
    %1210 = vector.broadcast %1209 : f32 to vector<16x16xf32>
    %1211 = arith.mulf %1210, %1208 : vector<16x16xf32>
    %1212 = arith.addf %1194, %1211 : vector<16x16xf32>
    %c64_350 = arith.constant 64 : index
    %1213 = memref.load %arg4[%c64_350] : memref<144xf32, #tpu.memory_space<smem>>
    %1214 = vector.broadcast %1213 : f32 to vector<16x16xf32>
    %1215 = arith.mulf %1214, %1208 : vector<16x16xf32>
    %1216 = arith.addf %1198, %1215 : vector<16x16xf32>
    %c100_351 = arith.constant 100 : index
    %1217 = memref.load %arg4[%c100_351] : memref<144xf32, #tpu.memory_space<smem>>
    %1218 = vector.broadcast %1217 : f32 to vector<16x16xf32>
    %1219 = arith.mulf %1218, %1208 : vector<16x16xf32>
    %1220 = arith.addf %1202, %1219 : vector<16x16xf32>
    %c136_352 = arith.constant 136 : index
    %1221 = memref.load %arg4[%c136_352] : memref<144xf32, #tpu.memory_space<smem>>
    %1222 = vector.broadcast %1221 : f32 to vector<16x16xf32>
    %1223 = arith.mulf %1222, %1208 : vector<16x16xf32>
    %1224 = arith.addf %1206, %1223 : vector<16x16xf32>
    %c3_353 = arith.constant 3 : index
    %c0_354 = arith.constant 0 : index
    %c2_355 = arith.constant 2 : index
    %1225 = vector.load %arg8[%c3_353, %c0_354, %c2_355] : memref<4x18x18xf32, #tpu.memory_space<vmem>>, vector<1x16x16xf32>
    %1226 = vector.shape_cast %1225 : vector<1x16x16xf32> to vector<16x16xf32>
    %c29_356 = arith.constant 29 : index
    %1227 = memref.load %arg4[%c29_356] : memref<144xf32, #tpu.memory_space<smem>>
    %1228 = vector.broadcast %1227 : f32 to vector<16x16xf32>
    %1229 = arith.mulf %1228, %1226 : vector<16x16xf32>
    %1230 = arith.addf %1212, %1229 : vector<16x16xf32>
    %c65_357 = arith.constant 65 : index
    %1231 = memref.load %arg4[%c65_357] : memref<144xf32, #tpu.memory_space<smem>>
    %1232 = vector.broadcast %1231 : f32 to vector<16x16xf32>
    %1233 = arith.mulf %1232, %1226 : vector<16x16xf32>
    %1234 = arith.addf %1216, %1233 : vector<16x16xf32>
    %c101_358 = arith.constant 101 : index
    %1235 = memref.load %arg4[%c101_358] : memref<144xf32, #tpu.memory_space<smem>>
    %1236 = vector.broadcast %1235 : f32 to vector<16x16xf32>
    %1237 = arith.mulf %1236, %1226 : vector<16x16xf32>
    %1238 = arith.addf %1220, %1237 : vector<16x16xf32>
    %c137_359 = arith.constant 137 : index
    %1239 = memref.load %arg4[%c137_359] : memref<144xf32, #tpu.memory_space<smem>>
    %1240 = vector.broadcast %1239 : f32 to vector<16x16xf32>
    %1241 = arith.mulf %1240, %1226 : vector<16x16xf32>
    %1242 = arith.addf %1224, %1241 : vector<16x16xf32>
    %c3_360 = arith.constant 3 : index
    %c1_361 = arith.constant 1 : index
    %c0_362 = arith.constant 0 : index
    %1243 = vector.load %arg8[%c3_360, %c1_361, %c0_362] : memref<4x18x18xf32, #tpu.memory_space<vmem>>, vector<1x16x16xf32>
    %1244 = vector.shape_cast %1243 : vector<1x16x16xf32> to vector<16x16xf32>
    %c30_363 = arith.constant 30 : index
    %1245 = memref.load %arg4[%c30_363] : memref<144xf32, #tpu.memory_space<smem>>
    %1246 = vector.broadcast %1245 : f32 to vector<16x16xf32>
    %1247 = arith.mulf %1246, %1244 : vector<16x16xf32>
    %1248 = arith.addf %1230, %1247 : vector<16x16xf32>
    %c66_364 = arith.constant 66 : index
    %1249 = memref.load %arg4[%c66_364] : memref<144xf32, #tpu.memory_space<smem>>
    %1250 = vector.broadcast %1249 : f32 to vector<16x16xf32>
    %1251 = arith.mulf %1250, %1244 : vector<16x16xf32>
    %1252 = arith.addf %1234, %1251 : vector<16x16xf32>
    %c102_365 = arith.constant 102 : index
    %1253 = memref.load %arg4[%c102_365] : memref<144xf32, #tpu.memory_space<smem>>
    %1254 = vector.broadcast %1253 : f32 to vector<16x16xf32>
    %1255 = arith.mulf %1254, %1244 : vector<16x16xf32>
    %1256 = arith.addf %1238, %1255 : vector<16x16xf32>
    %c138_366 = arith.constant 138 : index
    %1257 = memref.load %arg4[%c138_366] : memref<144xf32, #tpu.memory_space<smem>>
    %1258 = vector.broadcast %1257 : f32 to vector<16x16xf32>
    %1259 = arith.mulf %1258, %1244 : vector<16x16xf32>
    %1260 = arith.addf %1242, %1259 : vector<16x16xf32>
    %c3_367 = arith.constant 3 : index
    %c1_368 = arith.constant 1 : index
    %c1_369 = arith.constant 1 : index
    %1261 = vector.load %arg8[%c3_367, %c1_368, %c1_369] : memref<4x18x18xf32, #tpu.memory_space<vmem>>, vector<1x16x16xf32>
    %1262 = vector.shape_cast %1261 : vector<1x16x16xf32> to vector<16x16xf32>
    %c31_370 = arith.constant 31 : index
    %1263 = memref.load %arg4[%c31_370] : memref<144xf32, #tpu.memory_space<smem>>
    %1264 = vector.broadcast %1263 : f32 to vector<16x16xf32>
    %1265 = arith.mulf %1264, %1262 : vector<16x16xf32>
    %1266 = arith.addf %1248, %1265 : vector<16x16xf32>
    %c67_371 = arith.constant 67 : index
    %1267 = memref.load %arg4[%c67_371] : memref<144xf32, #tpu.memory_space<smem>>
    %1268 = vector.broadcast %1267 : f32 to vector<16x16xf32>
    %1269 = arith.mulf %1268, %1262 : vector<16x16xf32>
    %1270 = arith.addf %1252, %1269 : vector<16x16xf32>
    %c103_372 = arith.constant 103 : index
    %1271 = memref.load %arg4[%c103_372] : memref<144xf32, #tpu.memory_space<smem>>
    %1272 = vector.broadcast %1271 : f32 to vector<16x16xf32>
    %1273 = arith.mulf %1272, %1262 : vector<16x16xf32>
    %1274 = arith.addf %1256, %1273 : vector<16x16xf32>
    %c139_373 = arith.constant 139 : index
    %1275 = memref.load %arg4[%c139_373] : memref<144xf32, #tpu.memory_space<smem>>
    %1276 = vector.broadcast %1275 : f32 to vector<16x16xf32>
    %1277 = arith.mulf %1276, %1262 : vector<16x16xf32>
    %1278 = arith.addf %1260, %1277 : vector<16x16xf32>
    %c3_374 = arith.constant 3 : index
    %c1_375 = arith.constant 1 : index
    %c2_376 = arith.constant 2 : index
    %1279 = vector.load %arg8[%c3_374, %c1_375, %c2_376] : memref<4x18x18xf32, #tpu.memory_space<vmem>>, vector<1x16x16xf32>
    %1280 = vector.shape_cast %1279 : vector<1x16x16xf32> to vector<16x16xf32>
    %c32_377 = arith.constant 32 : index
    %1281 = memref.load %arg4[%c32_377] : memref<144xf32, #tpu.memory_space<smem>>
    %1282 = vector.broadcast %1281 : f32 to vector<16x16xf32>
    %1283 = arith.mulf %1282, %1280 : vector<16x16xf32>
    %1284 = arith.addf %1266, %1283 : vector<16x16xf32>
    %c68_378 = arith.constant 68 : index
    %1285 = memref.load %arg4[%c68_378] : memref<144xf32, #tpu.memory_space<smem>>
    %1286 = vector.broadcast %1285 : f32 to vector<16x16xf32>
    %1287 = arith.mulf %1286, %1280 : vector<16x16xf32>
    %1288 = arith.addf %1270, %1287 : vector<16x16xf32>
    %c104_379 = arith.constant 104 : index
    %1289 = memref.load %arg4[%c104_379] : memref<144xf32, #tpu.memory_space<smem>>
    %1290 = vector.broadcast %1289 : f32 to vector<16x16xf32>
    %1291 = arith.mulf %1290, %1280 : vector<16x16xf32>
    %1292 = arith.addf %1274, %1291 : vector<16x16xf32>
    %c140_380 = arith.constant 140 : index
    %1293 = memref.load %arg4[%c140_380] : memref<144xf32, #tpu.memory_space<smem>>
    %1294 = vector.broadcast %1293 : f32 to vector<16x16xf32>
    %1295 = arith.mulf %1294, %1280 : vector<16x16xf32>
    %1296 = arith.addf %1278, %1295 : vector<16x16xf32>
    %c3_381 = arith.constant 3 : index
    %c2_382 = arith.constant 2 : index
    %c0_383 = arith.constant 0 : index
    %1297 = vector.load %arg8[%c3_381, %c2_382, %c0_383] : memref<4x18x18xf32, #tpu.memory_space<vmem>>, vector<1x16x16xf32>
    %1298 = vector.shape_cast %1297 : vector<1x16x16xf32> to vector<16x16xf32>
    %c33_384 = arith.constant 33 : index
    %1299 = memref.load %arg4[%c33_384] : memref<144xf32, #tpu.memory_space<smem>>
    %1300 = vector.broadcast %1299 : f32 to vector<16x16xf32>
    %1301 = arith.mulf %1300, %1298 : vector<16x16xf32>
    %1302 = arith.addf %1284, %1301 : vector<16x16xf32>
    %c69_385 = arith.constant 69 : index
    %1303 = memref.load %arg4[%c69_385] : memref<144xf32, #tpu.memory_space<smem>>
    %1304 = vector.broadcast %1303 : f32 to vector<16x16xf32>
    %1305 = arith.mulf %1304, %1298 : vector<16x16xf32>
    %1306 = arith.addf %1288, %1305 : vector<16x16xf32>
    %c105_386 = arith.constant 105 : index
    %1307 = memref.load %arg4[%c105_386] : memref<144xf32, #tpu.memory_space<smem>>
    %1308 = vector.broadcast %1307 : f32 to vector<16x16xf32>
    %1309 = arith.mulf %1308, %1298 : vector<16x16xf32>
    %1310 = arith.addf %1292, %1309 : vector<16x16xf32>
    %c141_387 = arith.constant 141 : index
    %1311 = memref.load %arg4[%c141_387] : memref<144xf32, #tpu.memory_space<smem>>
    %1312 = vector.broadcast %1311 : f32 to vector<16x16xf32>
    %1313 = arith.mulf %1312, %1298 : vector<16x16xf32>
    %1314 = arith.addf %1296, %1313 : vector<16x16xf32>
    %c3_388 = arith.constant 3 : index
    %c2_389 = arith.constant 2 : index
    %c1_390 = arith.constant 1 : index
    %1315 = vector.load %arg8[%c3_388, %c2_389, %c1_390] : memref<4x18x18xf32, #tpu.memory_space<vmem>>, vector<1x16x16xf32>
    %1316 = vector.shape_cast %1315 : vector<1x16x16xf32> to vector<16x16xf32>
    %c34_391 = arith.constant 34 : index
    %1317 = memref.load %arg4[%c34_391] : memref<144xf32, #tpu.memory_space<smem>>
    %1318 = vector.broadcast %1317 : f32 to vector<16x16xf32>
    %1319 = arith.mulf %1318, %1316 : vector<16x16xf32>
    %1320 = arith.addf %1302, %1319 : vector<16x16xf32>
    %c70_392 = arith.constant 70 : index
    %1321 = memref.load %arg4[%c70_392] : memref<144xf32, #tpu.memory_space<smem>>
    %1322 = vector.broadcast %1321 : f32 to vector<16x16xf32>
    %1323 = arith.mulf %1322, %1316 : vector<16x16xf32>
    %1324 = arith.addf %1306, %1323 : vector<16x16xf32>
    %c106_393 = arith.constant 106 : index
    %1325 = memref.load %arg4[%c106_393] : memref<144xf32, #tpu.memory_space<smem>>
    %1326 = vector.broadcast %1325 : f32 to vector<16x16xf32>
    %1327 = arith.mulf %1326, %1316 : vector<16x16xf32>
    %1328 = arith.addf %1310, %1327 : vector<16x16xf32>
    %c142_394 = arith.constant 142 : index
    %1329 = memref.load %arg4[%c142_394] : memref<144xf32, #tpu.memory_space<smem>>
    %1330 = vector.broadcast %1329 : f32 to vector<16x16xf32>
    %1331 = arith.mulf %1330, %1316 : vector<16x16xf32>
    %1332 = arith.addf %1314, %1331 : vector<16x16xf32>
    %c3_395 = arith.constant 3 : index
    %c2_396 = arith.constant 2 : index
    %c2_397 = arith.constant 2 : index
    %1333 = vector.load %arg8[%c3_395, %c2_396, %c2_397] : memref<4x18x18xf32, #tpu.memory_space<vmem>>, vector<1x16x16xf32>
    %1334 = vector.shape_cast %1333 : vector<1x16x16xf32> to vector<16x16xf32>
    %c35_398 = arith.constant 35 : index
    %1335 = memref.load %arg4[%c35_398] : memref<144xf32, #tpu.memory_space<smem>>
    %1336 = vector.broadcast %1335 : f32 to vector<16x16xf32>
    %1337 = arith.mulf %1336, %1334 : vector<16x16xf32>
    %1338 = arith.addf %1320, %1337 : vector<16x16xf32>
    %c71_399 = arith.constant 71 : index
    %1339 = memref.load %arg4[%c71_399] : memref<144xf32, #tpu.memory_space<smem>>
    %1340 = vector.broadcast %1339 : f32 to vector<16x16xf32>
    %1341 = arith.mulf %1340, %1334 : vector<16x16xf32>
    %1342 = arith.addf %1324, %1341 : vector<16x16xf32>
    %c107_400 = arith.constant 107 : index
    %1343 = memref.load %arg4[%c107_400] : memref<144xf32, #tpu.memory_space<smem>>
    %1344 = vector.broadcast %1343 : f32 to vector<16x16xf32>
    %1345 = arith.mulf %1344, %1334 : vector<16x16xf32>
    %1346 = arith.addf %1328, %1345 : vector<16x16xf32>
    %c143_401 = arith.constant 143 : index
    %1347 = memref.load %arg4[%c143_401] : memref<144xf32, #tpu.memory_space<smem>>
    %1348 = vector.broadcast %1347 : f32 to vector<16x16xf32>
    %1349 = arith.mulf %1348, %1334 : vector<16x16xf32>
    %1350 = arith.addf %1332, %1349 : vector<16x16xf32>
    %c0_402 = arith.constant 0 : index
    %c0_403 = arith.constant 0 : index
    %c0_404 = arith.constant 0 : index
    %c0_405 = arith.constant 0 : index
    %1351 = vector.load %arg1[%c0_402, %c0_403, %c0_404, %c0_405] : memref<1x4x16x16xf32, #tpu.memory_space<vmem>>, vector<1x1x16x16xf32>
    %1352 = vector.shape_cast %1351 : vector<1x1x16x16xf32> to vector<16x16xf32>
    %1353 = arith.addf %1338, %1352 : vector<16x16xf32>
    %c0_406 = arith.constant 0 : index
    %c0_407 = arith.constant 0 : index
    %c0_408 = arith.constant 0 : index
    %c0_409 = arith.constant 0 : index
    %1354 = vector.load %arg6[%c0_406, %c0_407, %c0_408, %c0_409] : memref<1x4x16x16xf32, #tpu.memory_space<vmem>>, vector<1x1x16x16xf32>
    %1355 = vector.shape_cast %1354 : vector<1x1x16x16xf32> to vector<16x16xf32>
    %1356 = vector.shape_cast %1353 : vector<16x16xf32> to vector<1x1x16x16xf32>
    tpu.vector_store %arg6[%c0_406, %c0_407, %c0_408, %c0_409], %1356 {strides = array<i32>} : memref<1x4x16x16xf32, #tpu.memory_space<vmem>>, vector<1x1x16x16xf32>,
    %c0_410 = arith.constant 0 : index
    %c1_411 = arith.constant 1 : index
    %c0_412 = arith.constant 0 : index
    %c0_413 = arith.constant 0 : index
    %1357 = vector.load %arg1[%c0_410, %c1_411, %c0_412, %c0_413] : memref<1x4x16x16xf32, #tpu.memory_space<vmem>>, vector<1x1x16x16xf32>
    %1358 = vector.shape_cast %1357 : vector<1x1x16x16xf32> to vector<16x16xf32>
    %1359 = arith.addf %1342, %1358 : vector<16x16xf32>
    %c0_414 = arith.constant 0 : index
    %c1_415 = arith.constant 1 : index
    %c0_416 = arith.constant 0 : index
    %c0_417 = arith.constant 0 : index
    %1360 = vector.load %arg6[%c0_414, %c1_415, %c0_416, %c0_417] : memref<1x4x16x16xf32, #tpu.memory_space<vmem>>, vector<1x1x16x16xf32>
    %1361 = vector.shape_cast %1360 : vector<1x1x16x16xf32> to vector<16x16xf32>
    %1362 = vector.shape_cast %1359 : vector<16x16xf32> to vector<1x1x16x16xf32>
    tpu.vector_store %arg6[%c0_414, %c1_415, %c0_416, %c0_417], %1362 {strides = array<i32>} : memref<1x4x16x16xf32, #tpu.memory_space<vmem>>, vector<1x1x16x16xf32>,
    %c0_418 = arith.constant 0 : index
    %c2_419 = arith.constant 2 : index
    %c0_420 = arith.constant 0 : index
    %c0_421 = arith.constant 0 : index
    %1363 = vector.load %arg1[%c0_418, %c2_419, %c0_420, %c0_421] : memref<1x4x16x16xf32, #tpu.memory_space<vmem>>, vector<1x1x16x16xf32>
    %1364 = vector.shape_cast %1363 : vector<1x1x16x16xf32> to vector<16x16xf32>
    %1365 = arith.addf %1346, %1364 : vector<16x16xf32>
    %c0_422 = arith.constant 0 : index
    %c2_423 = arith.constant 2 : index
    %c0_424 = arith.constant 0 : index
    %c0_425 = arith.constant 0 : index
    %1366 = vector.load %arg6[%c0_422, %c2_423, %c0_424, %c0_425] : memref<1x4x16x16xf32, #tpu.memory_space<vmem>>, vector<1x1x16x16xf32>
    %1367 = vector.shape_cast %1366 : vector<1x1x16x16xf32> to vector<16x16xf32>
    %1368 = vector.shape_cast %1365 : vector<16x16xf32> to vector<1x1x16x16xf32>
    tpu.vector_store %arg6[%c0_422, %c2_423, %c0_424, %c0_425], %1368 {strides = array<i32>} : memref<1x4x16x16xf32, #tpu.memory_space<vmem>>, vector<1x1x16x16xf32>,
    %c0_426 = arith.constant 0 : index
    %c3_427 = arith.constant 3 : index
    %c0_428 = arith.constant 0 : index
    %c0_429 = arith.constant 0 : index
    %1369 = vector.load %arg1[%c0_426, %c3_427, %c0_428, %c0_429] : memref<1x4x16x16xf32, #tpu.memory_space<vmem>>, vector<1x1x16x16xf32>
    %1370 = vector.shape_cast %1369 : vector<1x1x16x16xf32> to vector<16x16xf32>
    %1371 = arith.addf %1350, %1370 : vector<16x16xf32>
    %c0_430 = arith.constant 0 : index
    %c3_431 = arith.constant 3 : index
    %c0_432 = arith.constant 0 : index
    %c0_433 = arith.constant 0 : index
    %1372 = vector.load %arg6[%c0_430, %c3_431, %c0_432, %c0_433] : memref<1x4x16x16xf32, #tpu.memory_space<vmem>>, vector<1x1x16x16xf32>
    %1373 = vector.shape_cast %1372 : vector<1x1x16x16xf32> to vector<16x16xf32>
    %1374 = vector.shape_cast %1371 : vector<16x16xf32> to vector<1x1x16x16xf32>
    tpu.vector_store %arg6[%c0_430, %c3_431, %c0_432, %c0_433], %1374 {strides = array<i32>} : memref<1x4x16x16xf32, #tpu.memory_space<vmem>>, vector<1x1x16x16xf32>,
    return
  }
  func.func @transform_0(%arg0: i32) -> (i32, i32, i32, i32) {
    %c0_i32 = arith.constant 0 : i32
    %c0_i32_0 = arith.constant 0 : i32
    %c0_i32_1 = arith.constant 0 : i32
    %c0_i32_2 = arith.constant 0 : i32
    return %arg0, %c0_i32, %c0_i32_0, %c0_i32_1 : i32, i32, i32, i32
  }
  func.func @transform_1(%arg0: i32) -> i32 {
    %c0_i32 = arith.constant 0 : i32
    %c0_i32_0 = arith.constant 0 : i32
    return %c0_i32 : i32
  }
  func.func @transform_2(%arg0: i32) -> i32 {
    %c0_i32 = arith.constant 0 : i32
    %c0_i32_0 = arith.constant 0 : i32
    return %c0_i32 : i32
  }
  func.func @transform_3(%arg0: i32) -> i32 {
    %c0_i32 = arith.constant 0 : i32
    %c0_i32_0 = arith.constant 0 : i32
    return %c0_i32 : i32
  }
  func.func @transform_4(%arg0: i32) -> i32 {
    %c0_i32 = arith.constant 0 : i32
    %c0_i32_0 = arith.constant 0 : i32
    return %c0_i32 : i32
  }
  func.func @transform_5(%arg0: i32) -> (i32, i32, i32, i32) {
    %c0_i32 = arith.constant 0 : i32
    %c0_i32_0 = arith.constant 0 : i32
    %c0_i32_1 = arith.constant 0 : i32
    %c0_i32_2 = arith.constant 0 : i32
    return %arg0, %c0_i32, %c0_i32_0, %c0_i32_1 : i32, i32, i32, i32
  }
}

</mosaic_0001>

<llo_original>
// kernel: rb_forward.1
$region0: #{rb_forward.1}
  #allocation0 [shape = 'u32[]', space=smem, size = 0x4, offset = 0x4, fixed_abs, tag = 'smem constant byte address 0x4 - core index']
  #allocation1 [shape = 'u32[144,128]{1,0:T(1,128)}', space=vmem, size = 0x12000, scoped, tag = 'internal scratch']
  #allocation2 [shape = 'f32[4,18,18]{2,1,0:T(8,128)}', space=vmem, size = 0xc000, scoped, tag = 'scratch operand']
  #allocation3 [shape = 'f32[4,18,18]{2,1,0:T(8,128)}', space=vmem, size = 0xc000, scoped, tag = 'scratch operand']
  %s0 = inlined_call_operand.vmem [shape: f32[2,4,16,16], index: 0, kind: input, shape index: {}]
  %s1 = inlined_call_operand.vmem [shape: f32[144], index: 1, kind: input, shape index: {}]
  %s2 = inlined_call_operand.vmem [shape: f32[4], index: 2, kind: input, shape index: {}]
  %s3 = inlined_call_operand.vmem [shape: f32[144], index: 3, kind: input, shape index: {}]
  %s4 = inlined_call_operand.vmem [shape: f32[4], index: 4, kind: input, shape index: {}]
  %s5 = inlined_call_operand.hbm [shape: f32[2,4,16,16], index: 5, kind: output, shape index: {}]
  %s6 = sld [smem:[#allocation0]]
  $region69: #{rb_forward.1} parent=0
    _
  %s8 = ssub.s32 1, %s6
  %s9 = scalar_select 0, %s8, %s6
  $region1: #{rb_forward.1} parent=0
    #allocation4 [shape = 'u8[1024]{0}', space=smem, size = 0x400, scoped, tag = 'input window, operand 1, single buffered']
    #allocation5 [shape = 's32[2]{0}', space=sflag, size = 0x8, scoped, tag = 'scoped memory for rb_forward.1']
    #allocation6 [shape = 's32[2]{0}', space=sflag, size = 0x8, scoped, tag = 'scoped memory for rb_forward.1']
    #allocation7 [shape = 'u8[512]{0}', space=smem, size = 0x200, scoped, tag = 'input window, operand 2, single buffered']
    #allocation8 [shape = 's32[1]{0}', space=sflag, size = 0x4, scoped, tag = 'scoped memory for rb_forward.1']
    #allocation9 [shape = 'u8[1024]{0}', space=smem, size = 0x400, scoped, tag = 'input window, operand 3, single buffered']
    #allocation10 [shape = 'u8[512]{0}', space=smem, size = 0x200, scoped, tag = 'input window, operand 4, single buffered']
    #allocation11 [shape = 's32[1]{0}', space=sflag, size = 0x4, scoped, tag = 'scoped memory for rb_forward.1']
    #allocation12 [shape = 'u8[65536]{0}', space=vmem, size = 0x10000, scoped, tag = 'output window, operand 0']
    %10 = vsyncpa [#allocation6], 0
    %11 = vsyncpa [#allocation8], 0
    %12 = vsyncpa [#allocation11], 0
    %13 = vsyncpa [#allocation5], 0
    %s14 = scalar_lea.sflag [#allocation5], 1
    %15 = vsyncpa %s14, 0
    loop: start=0, step=1, limit=4
    $region2: #{rb_forward.1} parent=1 // loop_pre_header
      _
    $region3: #{rb_forward.1} parent=1 // loop_header
      %s17 = sphi 0, %s21
      %p18 = scmp.ge.s32.totalorder %s17, 4
      %s27 = sphi 0, %s29
      %s30 = sphi 0, %s27
      %s31 = sphi 0, %s30
      %s47 = sphi 0, %s31
      %s51 = sphi 0, %s51
      %s53 = sphi 0, %s51
      %s54 = sphi 0, %s53
      %s68 = sphi 0, %s54
      %s72 = sphi 0, %s72
      %s74 = sphi 0, %s72
      %s75 = sphi 0, %s74
      %s89 = sphi 0, %s75
      %s93 = sphi 0, %s93
      %s95 = sphi 0, %s93
      %s96 = sphi 0, %s95
      %s110 = sphi 0, %s96
      %s114 = sphi 0, %s114
      %s116 = sphi 0, %s114
      %s117 = sphi 0, %s116
      %s131 = sphi 0, %s117
      %s137 = sphi 0, %s139
      %s140 = sphi 0, %s137
      %s141 = sphi 0, %s140
      %s157 = sphi 0, %s141
    $region4: #{rb_forward.1} parent=1 // loop_header_branch
      %20 = sbr.rel (%p18) target = $region8
    $region5: #{rb_forward.1} parent=1 // loop_body
      %s22 = ssub.s32 %s17, 1
      %s23 = ssub.s32 %s17, 2
      %s24 = sadd.s32 %s17, 1
      %s25 = ssub.s32 %s17, %s24
      %p26 = scmp.eq.s32.totalorder %s25, 0
      %s28 = sadd.s32 %s27, 1
      %s29 = scalar_select %p26, %s27, %s28
      %p32 = pneg %p26
      %p33 = scmp.eq.s32.totalorder %s17, 1
      %p34 = por %p32, %p33
      %p35 = scmp.ne.s32.totalorder %s27, %s30
      %p36 = scmp.eq.s32.totalorder %s17, 0
      %p37 = por %p35, %p36
      %p38 = scmp.ne.s32.totalorder %s27, %s30
      %p39 = scmp.eq.s32.totalorder %s22, 1
      %p40 = por %p38, %p39
      %p41 = scmp.ne.s32.totalorder %s30, %s31
      %p42 = scmp.eq.s32.totalorder %s22, 0
      %p43 = por %p41, %p42
      %p44 = scmp.ne.s32.totalorder %s30, %s31
      %p45 = scmp.eq.s32.totalorder %s23, 1
      %p46 = por %p44, %p45
      %p48 = scmp.ne.s32.totalorder %s31, %s47
      %p49 = scmp.eq.s32.totalorder %s23, 0
      %p50 = por %p48, %p49
      %s52 = sadd.s32 %s51, 1
      %p55 = scmp.eq.s32.totalorder %s17, 1
      %p56 = scmp.ne.s32.totalorder %s51, %s53
      %p57 = scmp.eq.s32.totalorder %s17, 0
      %p58 = por %p56, %p57
      %p59 = scmp.ne.s32.totalorder %s51, %s53
      %p60 = scmp.eq.s32.totalorder %s22, 1
      %p61 = por %p59, %p60
      %p62 = scmp.ne.s32.totalorder %s53, %s54
      %p63 = scmp.eq.s32.totalorder %s22, 0
      %p64 = por %p62, %p63
      %p65 = scmp.ne.s32.totalorder %s53, %s54
      %p66 = scmp.eq.s32.totalorder %s23, 1
      %p67 = por %p65, %p66
      %p69 = scmp.ne.s32.totalorder %s54, %s68
      %p70 = scmp.eq.s32.totalorder %s23, 0
      %p71 = por %p69, %p70
      %s73 = sadd.s32 %s72, 1
      %p76 = scmp.eq.s32.totalorder %s17, 1
      %p77 = scmp.ne.s32.totalorder %s72, %s74
      %p78 = scmp.eq.s32.totalorder %s17, 0
      %p79 = por %p77, %p78
      %p80 = scmp.ne.s32.totalorder %s72, %s74
      %p81 = scmp.eq.s32.totalorder %s22, 1
      %p82 = por %p80, %p81
      %p83 = scmp.ne.s32.totalorder %s74, %s75
      %p84 = scmp.eq.s32.totalorder %s22, 0
      %p85 = por %p83, %p84
      %p86 = scmp.ne.s32.totalorder %s74, %s75
      %p87 = scmp.eq.s32.totalorder %s23, 1
      %p88 = por %p86, %p87
      %p90 = scmp.ne.s32.totalorder %s75, %s89
      %p91 = scmp.eq.s32.totalorder %s23, 0
      %p92 = por %p90, %p91
      %s94 = sadd.s32 %s93, 1
      %p97 = scmp.eq.s32.totalorder %s17, 1
      %p98 = scmp.ne.s32.totalorder %s93, %s95
      %p99 = scmp.eq.s32.totalorder %s17, 0
      %p100 = por %p98, %p99
      %p101 = scmp.ne.s32.totalorder %s93, %s95
      %p102 = scmp.eq.s32.totalorder %s22, 1
      %p103 = por %p101, %p102
      %p104 = scmp.ne.s32.totalorder %s95, %s96
      %p105 = scmp.eq.s32.totalorder %s22, 0
      %p106 = por %p104, %p105
      %p107 = scmp.ne.s32.totalorder %s95, %s96
      %p108 = scmp.eq.s32.totalorder %s23, 1
      %p109 = por %p107, %p108
      %p111 = scmp.ne.s32.totalorder %s96, %s110
      %p112 = scmp.eq.s32.totalorder %s23, 0
      %p113 = por %p111, %p112
      %s115 = sadd.s32 %s114, 1
      %p118 = scmp.eq.s32.totalorder %s17, 1
      %p119 = scmp.ne.s32.totalorder %s114, %s116
      %p120 = scmp.eq.s32.totalorder %s17, 0
      %p121 = por %p119, %p120
      %p122 = scmp.ne.s32.totalorder %s114, %s116
      %p123 = scmp.eq.s32.totalorder %s22, 1
      %p124 = por %p122, %p123
      %p125 = scmp.ne.s32.totalorder %s116, %s117
      %p126 = scmp.eq.s32.totalorder %s22, 0
      %p127 = por %p125, %p126
      %p128 = scmp.ne.s32.totalorder %s116, %s117
      %p129 = scmp.eq.s32.totalorder %s23, 1
      %p130 = por %p128, %p129
      %p132 = scmp.ne.s32.totalorder %s117, %s131
      %p133 = scmp.eq.s32.totalorder %s23, 0
      %p134 = por %p132, %p133
      %s135 = ssub.s32 %s17, %s24
      %p136 = scmp.eq.s32.totalorder %s135, 0
      %s138 = sadd.s32 %s137, 1
      %s139 = scalar_select %p136, %s137, %s138
      %p142 = pneg %p136
      %p143 = scmp.eq.s32.totalorder %s17, 1
      %p144 = por %p142, %p143
      %p145 = scmp.ne.s32.totalorder %s137, %s140
      %p146 = scmp.eq.s32.totalorder %s17, 0
      %p147 = por %p145, %p146
      %p148 = scmp.ne.s32.totalorder %s137, %s140
      %p149 = scmp.eq.s32.totalorder %s22, 1
      %p150 = por %p148, %p149
      %p151 = scmp.ne.s32.totalorder %s140, %s141
      %p152 = scmp.eq.s32.totalorder %s22, 0
      %p153 = por %p151, %p152
      %p154 = scmp.ne.s32.totalorder %s140, %s141
      %p155 = scmp.eq.s32.totalorder %s23, 1
      %p156 = por %p154, %p155
      %p158 = scmp.ne.s32.totalorder %s141, %s157
      %p159 = scmp.eq.s32.totalorder %s23, 0
      %p160 = por %p158, %p159
      %p161 = scmp.le.s32.totalorder 1, %s17
      %p162 = scmp.lt.s32.totalorder %s17, 3
      %p163 = pnand %p161, %p162
      %p164 = pneg %p163
      // Predicated region
      $region9: #{rb_forward.1} parent=5 // pred_check
        _
      $region10: #{rb_forward.1} parent=5 // pred_check_branch
        %166 = sbr.rel (%p163) target = $region12
      $region11: #{rb_forward.1} parent=5 // pred_region
        %s167 = ssub.s32 %s17, 1
        // Predicated region
        $region13: #{rb_forward.1} parent=11 // pred_check
          %p168 = pneg %p64
        $region14: #{rb_forward.1} parent=11 // pred_check_branch
          %170 = sbr.rel (%p168) target = $region16
        $region15: #{rb_forward.1} parent=11 // pred_region
          %s172 = ssub.s32 32, 32
          %173 = vsyncadd [#allocation6], %s172
          %s175 = sshll.u32 %s1, 4
          %s176 = int_to_ptr.vmem [resolvable:$true] %s175
          %178 = dma.vmem_to_smem %s176, 32, [#allocation4], [#allocation6]
        $region16: #{rb_forward.1} parent=11 // pred_fallthru
          _
        // Predicated region
        $region17: #{rb_forward.1} parent=11 // pred_check
          %p179 = pneg %p85
        $region18: #{rb_forward.1} parent=11 // pred_check_branch
          %181 = sbr.rel (%p179) target = $region20
        $region19: #{rb_forward.1} parent=11 // pred_region
          %s183 = ssub.s32 16, 16
          %184 = vsyncadd [#allocation8], %s183
          %s186 = sshll.u32 %s2, 4
          %s187 = int_to_ptr.vmem [resolvable:$true] %s186
          %189 = dma.vmem_to_smem %s187, 16, [#allocation7], [#allocation8]
        $region20: #{rb_forward.1} parent=11 // pred_fallthru
          _
        // Predicated region
        $region21: #{rb_forward.1} parent=11 // pred_check
          %p190 = pneg %p106
        $region22: #{rb_forward.1} parent=11 // pred_check_branch
          %192 = sbr.rel (%p190) target = $region24
        $region23: #{rb_forward.1} parent=11 // pred_region
          %s194 = ssub.s32 32, 32
          %195 = vsyncadd [#allocation8], %s194
          %s197 = sshll.u32 %s3, 4
          %s198 = int_to_ptr.vmem [resolvable:$true] %s197
          %200 = dma.vmem_to_smem %s198, 32, [#allocation9], [#allocation8]
        $region24: #{rb_forward.1} parent=11 // pred_fallthru
          _
        // Predicated region
        $region25: #{rb_forward.1} parent=11 // pred_check
          %p201 = pneg %p127
        $region26: #{rb_forward.1} parent=11 // pred_check_branch
          %203 = sbr.rel (%p201) target = $region28
        $region27: #{rb_forward.1} parent=11 // pred_region
          %s205 = ssub.s32 16, 16
          %206 = vsyncadd [#allocation11], %s205
          %s208 = sshll.u32 %s4, 4
          %s209 = int_to_ptr.vmem [resolvable:$true] %s208
          %211 = dma.vmem_to_smem %s209, 16, [#allocation10], [#allocation11]
        $region28: #{rb_forward.1} parent=11 // pred_fallthru
          _
      $region12: #{rb_forward.1} parent=5 // pred_fallthru
        _
      %p212 = scmp.lt.s32.totalorder %s17, 2
      // Predicated region
      $region29: #{rb_forward.1} parent=5 // pred_check
        %p213 = pneg %p212
      $region30: #{rb_forward.1} parent=5 // pred_check_branch
        %215 = sbr.rel (%p213) target = $region32
      $region31: #{rb_forward.1} parent=5 // pred_region
        // Predicated region
        $region33: #{rb_forward.1} parent=31 // pred_check
          %p216 = pneg %p37
        $region34: #{rb_forward.1} parent=31 // pred_check_branch
          %218 = sbr.rel (%p216) target = $region36
        $region35: #{rb_forward.1} parent=31 // pred_region
          %p219 = scmp.lt.s32.totalorder %s17, 1
          %s220 = scalar_select %p219, %s17, 1
          %s221 = smul.addr %s220, 8
          %s222 = smul.addr %s221, 8
          %s223 = scalar_lea.vmem %s0, %s222
        $region36: #{rb_forward.1} parent=31 // pred_fallthru
          _
      $region32: #{rb_forward.1} parent=5 // pred_fallthru
        _
      %p224 = scmp.le.s32.totalorder 1, %s17
      %p225 = scmp.lt.s32.totalorder %s17, 3
      %p226 = pnand %p224, %p225
      %p227 = pneg %p226
      // Predicated region
      $region37: #{rb_forward.1} parent=5 // pred_check
        _
      $region38: #{rb_forward.1} parent=5 // pred_check_branch
        %229 = sbr.rel (%p226) target = $region40
      $region39: #{rb_forward.1} parent=5 // pred_region
        %s230 = ssub.s32 %s17, 1
        // Predicated region
        $region41: #{rb_forward.1} parent=39 // pred_check
          %p231 = pneg %p64
        $region42: #{rb_forward.1} parent=39 // pred_check_branch
          %233 = sbr.rel (%p231) target = $region44
        $region43: #{rb_forward.1} parent=39 // pred_region
          %234 = dma.done [#allocation6], 32
        $region44: #{rb_forward.1} parent=39 // pred_fallthru
          _
        // Predicated region
        $region45: #{rb_forward.1} parent=39 // pred_check
          %p235 = pneg %p85
        $region46: #{rb_forward.1} parent=39 // pred_check_branch
          %237 = sbr.rel (%p235) target = $region48
        $region47: #{rb_forward.1} parent=39 // pred_region
          %238 = dma.done [#allocation8], 16
        $region48: #{rb_forward.1} parent=39 // pred_fallthru
          _
        // Predicated region
        $region49: #{rb_forward.1} parent=39 // pred_check
          %p239 = pneg %p106
        $region50: #{rb_forward.1} parent=39 // pred_check_branch
          %241 = sbr.rel (%p239) target = $region52
        $region51: #{rb_forward.1} parent=39 // pred_region
          %242 = dma.done [#allocation8], 32
        $region52: #{rb_forward.1} parent=39 // pred_fallthru
          _
        // Predicated region
        $region53: #{rb_forward.1} parent=39 // pred_check
          %p243 = pneg %p127
        $region54: #{rb_forward.1} parent=39 // pred_check_branch
          %245 = sbr.rel (%p243) target = $region56
        $region55: #{rb_forward.1} parent=39 // pred_region
          %246 = dma.done [#allocation11], 16
        $region56: #{rb_forward.1} parent=39 // pred_fallthru
          _
        %247 = sfence
        %p248 = scmp.lt.s32.totalorder %s22, 1
        %s249 = scalar_select %p248, %s22, 1
        %s250 = smul.addr %s249, 8
        %s251 = smul.addr %s250, 8
        %s252 = scalar_lea.vmem %s0, %s251
        %p253 = pneg %p43
        %p254 = pneg %p40
        %p255 = pneg %p64
        %p256 = pneg %p61
        %p257 = pneg %p85
        %p258 = pneg %p82
        %p259 = pneg %p106
        %p260 = pneg %p103
        %p261 = pneg %p127
        %p262 = pneg %p124
        %p263 = pneg %p153
        %p264 = pneg %p150
        %s265 = sand.u32 %s140, 1
        %s266 = scalar_lea.sflag [#allocation5], %s265
        %s267 = sand.u32 %s140, 1
        %s268 = smul.addr %s267, 64
        %s269 = scalar_lea.vmem [#allocation12], %s268
        %p270 = scmp.lt.s32.totalorder %s22, 1
        %s271 = scalar_select %p270, %s22, 1
        %s272 = smul.addr %s271, 8
        %s273 = smul.addr %s272, 8
        %s274 = scalar_lea.vmem %s0, %s273
        %vm275 = vcmask 146432
        %276 = vst.msk [vmem:[#allocation2] sm:$0xff] %vm275, 0.0
        %277 = vst.msk [vmem:[#allocation2 + $0x8] sm:$0xff] %vm275, 0.0
        %vm278 = vcmask 140288
        %279 = vst.msk [vmem:[#allocation2 + $0x10] sm:$0x3] %vm278, 0.0
        %280 = vst.msk [vmem:[#allocation2 + $0x18] sm:$0xff] %vm275, 0.0
        %281 = vst.msk [vmem:[#allocation2 + $0x20] sm:$0xff] %vm275, 0.0
        %282 = vst.msk [vmem:[#allocation2 + $0x28] sm:$0x3] %vm278, 0.0
        %283 = vst.msk [vmem:[#allocation2 + $0x30] sm:$0xff] %vm275, 0.0
        %284 = vst.msk [vmem:[#allocation2 + $0x38] sm:$0xff] %vm275, 0.0
        %285 = vst.msk [vmem:[#allocation2 + $0x40] sm:$0x3] %vm278, 0.0
        %286 = vst.msk [vmem:[#allocation2 + $0x48] sm:$0xff] %vm275, 0.0
        %287 = vst.msk [vmem:[#allocation2 + $0x50] sm:$0xff] %vm275, 0.0
        %288 = vst.msk [vmem:[#allocation2 + $0x58] sm:$0x3] %vm278, 0.0
        %289 = vst.msk [vmem:[#allocation3] sm:$0xff] %vm275, 0.0
        %290 = vst.msk [vmem:[#allocation3 + $0x8] sm:$0xff] %vm275, 0.0
        %291 = vst.msk [vmem:[#allocation3 + $0x10] sm:$0x3] %vm278, 0.0
        %292 = vst.msk [vmem:[#allocation3 + $0x18] sm:$0xff] %vm275, 0.0
        %293 = vst.msk [vmem:[#allocation3 + $0x20] sm:$0xff] %vm275, 0.0
        %294 = vst.msk [vmem:[#allocation3 + $0x28] sm:$0x3] %vm278, 0.0
        %295 = vst.msk [vmem:[#allocation3 + $0x30] sm:$0xff] %vm275, 0.0
        %296 = vst.msk [vmem:[#allocation3 + $0x38] sm:$0xff] %vm275, 0.0
        %297 = vst.msk [vmem:[#allocation3 + $0x40] sm:$0x3] %vm278, 0.0
        %298 = vst.msk [vmem:[#allocation3 + $0x48] sm:$0xff] %vm275, 0.0
        %299 = vst.msk [vmem:[#allocation3 + $0x50] sm:$0xff] %vm275, 0.0
        %300 = vst.msk [vmem:[#allocation3 + $0x58] sm:$0x3] %vm278, 0.0
        %v301 = vld [vmem:[%s274] sm:$0xff]
        %v302 = vld [vmem:[%s274 + $0x8] sm:$0xff]
        %v303 = vld [vmem:[%s274 + $0x10] sm:$0xff]
        %v304 = vld [vmem:[%s274 + $0x18] sm:$0xff]
        %v305 = vld [vmem:[%s274 + $0x20] sm:$0xff]
        %v306 = vld [vmem:[%s274 + $0x28] sm:$0xff]
        %v307 = vld [vmem:[%s274 + $0x30] sm:$0xff]
        %v308 = vld [vmem:[%s274 + $0x38] sm:$0xff]
        %317 = vrot.lane.b32.xlu0 %v301, 1
        %v318 = vpop.permute.xlu0 %317
        %319 = vrot.lane.b32.xlu0 %v302, 1
        %v320 = vpop.permute.xlu0 %319
        %321 = vrot.lane.b32.xlu0 %v303, 1
        %v322 = vpop.permute.xlu0 %321
        %323 = vrot.lane.b32.xlu0 %v304, 1
        %v324 = vpop.permute.xlu0 %323
        %325 = vrot.lane.b32.xlu0 %v305, 1
        %v326 = vpop.permute.xlu0 %325
        %327 = vrot.lane.b32.xlu0 %v306, 1
        %v328 = vpop.permute.xlu0 %327
        %329 = vrot.lane.b32.xlu0 %v307, 1
        %v330 = vpop.permute.xlu0 %329
        %331 = vrot.lane.b32.xlu0 %v308, 1
        %v332 = vpop.permute.xlu0 %331
        %vm341 = vcmask 138248
        %342 = vst.msk [vmem:[#allocation2 + $0x1] sm:$0xff] %vm341, %v318
        %343 = vst.msk [vmem:[#allocation2 + $0x9] sm:$0xff] %vm341, %v320
        %344 = vst.msk [vmem:[#allocation2 + $0x19] sm:$0xff] %vm341, %v322
        %345 = vst.msk [vmem:[#allocation2 + $0x21] sm:$0xff] %vm341, %v324
        %346 = vst.msk [vmem:[#allocation2 + $0x31] sm:$0xff] %vm341, %v326
        %347 = vst.msk [vmem:[#allocation2 + $0x39] sm:$0xff] %vm341, %v328
        %348 = vst.msk [vmem:[#allocation2 + $0x49] sm:$0xff] %vm341, %v330
        %349 = vst.msk [vmem:[#allocation2 + $0x51] sm:$0xff] %vm341, %v332
        %s350 = sld [smem:[#allocation7]]
        %v351 = vstv %s350
        %s352 = sld [smem:[#allocation7 + $0x1]]
        %v353 = vstv %s352
        %s354 = sld [smem:[#allocation7 + $0x2]]
        %v355 = vstv %s354
        %s356 = sld [smem:[#allocation7 + $0x3]]
        %v357 = vstv %s356
        %v358 = vld [vmem:[#allocation2] sm:$0xff]
        %v359 = vld [vmem:[#allocation2 + $0x8] sm:$0xff]
        %s360 = sld [smem:[#allocation4]]
        %v361 = vstv %s360
        %v362 = vmul.f32 %v361, %v358
        %v363 = vmul.f32 %v361, %v359
        %v364 = vadd.f32 %v351, %v362
        %v365 = vadd.f32 %v351, %v363
        %s366 = sld [smem:[#allocation4 + $0x24]]
        %v367 = vstv %s366
        %v368 = vmul.f32 %v367, %v358
        %v369 = vmul.f32 %v367, %v359
        %v370 = vadd.f32 %v353, %v368
        %v371 = vadd.f32 %v353, %v369
        %s372 = sld [smem:[#allocation4 + $0x48]]
        %v373 = vstv %s372
        %v374 = vmul.f32 %v373, %v358
        %v375 = vmul.f32 %v373, %v359
        %v376 = vadd.f32 %v355, %v374
        %v377 = vadd.f32 %v355, %v375
        %s378 = sld [smem:[#allocation4 + $0x6c]]
        %v379 = vstv %s378
        %v380 = vmul.f32 %v379, %v358
        %v381 = vmul.f32 %v379, %v359
        %v382 = vadd.f32 %v357, %v380
        %v383 = vadd.f32 %v357, %v381
        %s384 = sld [smem:[#allocation4 + $0x1]]
        %v385 = vstv %s384
        %v386 = vmul.f32 %v385, %v358
        %v387 = vmul.f32 %v385, %v359
        %390 = vrot.lane.b32.xlu0 %v386, 127
        %v391 = vpop.permute.xlu0 %390
        %392 = vrot.lane.b32.xlu0 %v387, 127
        %v393 = vpop.permute.xlu0 %392
        %v396 = vadd.f32 %v364, %v391
        %v397 = vadd.f32 %v365, %v393
        %s398 = sld [smem:[#allocation4 + $0x25]]
        %v399 = vstv %s398
        %v400 = vmul.f32 %v399, %v358
        %v401 = vmul.f32 %v399, %v359
        %404 = vrot.lane.b32.xlu0 %v400, 127
        %v405 = vpop.permute.xlu0 %404
        %406 = vrot.lane.b32.xlu0 %v401, 127
        %v407 = vpop.permute.xlu0 %406
        %v410 = vadd.f32 %v370, %v405
        %v411 = vadd.f32 %v371, %v407
        %s412 = sld [smem:[#allocation4 + $0x49]]
        %v413 = vstv %s412
        %v414 = vmul.f32 %v413, %v358
        %v415 = vmul.f32 %v413, %v359
        %418 = vrot.lane.b32.xlu0 %v414, 127
        %v419 = vpop.permute.xlu0 %418
        %420 = vrot.lane.b32.xlu0 %v415, 127
        %v421 = vpop.permute.xlu0 %420
        %v424 = vadd.f32 %v376, %v419
        %v425 = vadd.f32 %v377, %v421
        %s426 = sld [smem:[#allocation4 + $0x6d]]
        %v427 = vstv %s426
        %v428 = vmul.f32 %v427, %v358
        %v429 = vmul.f32 %v427, %v359
        %432 = vrot.lane.b32.xlu0 %v428, 127
        %v433 = vpop.permute.xlu0 %432
        %434 = vrot.lane.b32.xlu0 %v429, 127
        %v435 = vpop.permute.xlu0 %434
        %v438 = vadd.f32 %v382, %v433
        %v439 = vadd.f32 %v383, %v435
        %s440 = sld [smem:[#allocation4 + $0x2]]
        %v441 = vstv %s440
        %v442 = vmul.f32 %v441, %v358
        %v443 = vmul.f32 %v441, %v359
        %446 = vrot.lane.b32.xlu0 %v442, 126
        %v447 = vpop.permute.xlu0 %446
        %448 = vrot.lane.b32.xlu0 %v443, 126
        %v449 = vpop.permute.xlu0 %448
        %v452 = vadd.f32 %v396, %v447
        %v453 = vadd.f32 %v397, %v449
        %s454 = sld [smem:[#allocation4 + $0x26]]
        %v455 = vstv %s454
        %v456 = vmul.f32 %v455, %v358
        %v457 = vmul.f32 %v455, %v359
        %460 = vrot.lane.b32.xlu0 %v456, 126
        %v461 = vpop.permute.xlu0 %460
        %462 = vrot.lane.b32.xlu0 %v457, 126
        %v463 = vpop.permute.xlu0 %462
        %v466 = vadd.f32 %v410, %v461
        %v467 = vadd.f32 %v411, %v463
        %s468 = sld [smem:[#allocation4 + $0x4a]]
        %v469 = vstv %s468
        %v470 = vmul.f32 %v469, %v358
        %v471 = vmul.f32 %v469, %v359
        %474 = vrot.lane.b32.xlu0 %v470, 126
        %v475 = vpop.permute.xlu0 %474
        %476 = vrot.lane.b32.xlu0 %v471, 126
        %v477 = vpop.permute.xlu0 %476
        %v480 = vadd.f32 %v424, %v475
        %v481 = vadd.f32 %v425, %v477
        %s482 = sld [smem:[#allocation4 + $0x6e]]
        %v483 = vstv %s482
        %v484 = vmul.f32 %v483, %v358
        %v485 = vmul.f32 %v483, %v359
        %488 = vrot.lane.b32.xlu0 %v484, 126
        %v489 = vpop.permute.xlu0 %488
        %490 = vrot.lane.b32.xlu0 %v485, 126
        %v491 = vpop.permute.xlu0 %490
        %v494 = vadd.f32 %v438, %v489
        %v495 = vadd.f32 %v439, %v491
        %v496 = vld [vmem:[#allocation2 + $0x1] sm:$0xff]
        %v497 = vld [vmem:[#allocation2 + $0x9] sm:$0xff]
        %s498 = sld [smem:[#allocation4 + $0x3]]
        %v499 = vstv %s498
        %v500 = vmul.f32 %v499, %v496
        %v501 = vmul.f32 %v499, %v497
        %v502 = vadd.f32 %v452, %v500
        %v503 = vadd.f32 %v453, %v501
        %s504 = sld [smem:[#allocation4 + $0x27]]
        %v505 = vstv %s504
        %v506 = vmul.f32 %v505, %v496
        %v507 = vmul.f32 %v505, %v497
        %v508 = vadd.f32 %v466, %v506
        %v509 = vadd.f32 %v467, %v507
        %s510 = sld [smem:[#allocation4 + $0x4b]]
        %v511 = vstv %s510
        %v512 = vmul.f32 %v511, %v496
        %v513 = vmul.f32 %v511, %v497
        %v514 = vadd.f32 %v480, %v512
        %v515 = vadd.f32 %v481, %v513
        %s516 = sld [smem:[#allocation4 + $0x6f]]
        %v517 = vstv %s516
        %v518 = vmul.f32 %v517, %v496
        %v519 = vmul.f32 %v517, %v497
        %v520 = vadd.f32 %v494, %v518
        %v521 = vadd.f32 %v495, %v519
        %s522 = sld [smem:[#allocation4 + $0x4]]
        %v523 = vstv %s522
        %v524 = vmul.f32 %v523, %v496
        %v525 = vmul.f32 %v523, %v497
        %528 = vrot.lane.b32.xlu0 %v524, 127
        %v529 = vpop.permute.xlu0 %528
        %530 = vrot.lane.b32.xlu0 %v525, 127
        %v531 = vpop.permute.xlu0 %530
        %v534 = vadd.f32 %v502, %v529
        %v535 = vadd.f32 %v503, %v531
        %s536 = sld [smem:[#allocation4 + $0x28]]
        %v537 = vstv %s536
        %v538 = vmul.f32 %v537, %v496
        %v539 = vmul.f32 %v537, %v497
        %542 = vrot.lane.b32.xlu0 %v538, 127
        %v543 = vpop.permute.xlu0 %542
        %544 = vrot.lane.b32.xlu0 %v539, 127
        %v545 = vpop.permute.xlu0 %544
        %v548 = vadd.f32 %v508, %v543
        %v549 = vadd.f32 %v509, %v545
        %s550 = sld [smem:[#allocation4 + $0x4c]]
        %v551 = vstv %s550
        %v552 = vmul.f32 %v551, %v496
        %v553 = vmul.f32 %v551, %v497
        %556 = vrot.lane.b32.xlu0 %v552, 127
        %v557 = vpop.permute.xlu0 %556
        %558 = vrot.lane.b32.xlu0 %v553, 127
        %v559 = vpop.permute.xlu0 %558
        %v562 = vadd.f32 %v514, %v557
        %v563 = vadd.f32 %v515, %v559
        %s564 = sld [smem:[#allocation4 + $0x70]]
        %v565 = vstv %s564
        %v566 = vmul.f32 %v565, %v496
        %v567 = vmul.f32 %v565, %v497
        %570 = vrot.lane.b32.xlu0 %v566, 127
        %v571 = vpop.permute.xlu0 %570
        %572 = vrot.lane.b32.xlu0 %v567, 127
        %v573 = vpop.permute.xlu0 %572
        %v576 = vadd.f32 %v520, %v571
        %v577 = vadd.f32 %v521, %v573
        %s578 = sld [smem:[#allocation4 + $0x5]]
        %v579 = vstv %s578
        %v580 = vmul.f32 %v579, %v496
        %v581 = vmul.f32 %v579, %v497
        %584 = vrot.lane.b32.xlu0 %v580, 126
        %v585 = vpop.permute.xlu0 %584
        %586 = vrot.lane.b32.xlu0 %v581, 126
        %v587 = vpop.permute.xlu0 %586
        %v590 = vadd.f32 %v534, %v585
        %v591 = vadd.f32 %v535, %v587
        %s592 = sld [smem:[#allocation4 + $0x29]]
        %v593 = vstv %s592
        %v594 = vmul.f32 %v593, %v496
        %v595 = vmul.f32 %v593, %v497
        %598 = vrot.lane.b32.xlu0 %v594, 126
        %v599 = vpop.permute.xlu0 %598
        %600 = vrot.lane.b32.xlu0 %v595, 126
        %v601 = vpop.permute.xlu0 %600
        %v604 = vadd.f32 %v548, %v599
        %v605 = vadd.f32 %v549, %v601
        %s606 = sld [smem:[#allocation4 + $0x4d]]
        %v607 = vstv %s606
        %v608 = vmul.f32 %v607, %v496
        %v609 = vmul.f32 %v607, %v497
        %612 = vrot.lane.b32.xlu0 %v608, 126
        %v613 = vpop.permute.xlu0 %612
        %614 = vrot.lane.b32.xlu0 %v609, 126
        %v615 = vpop.permute.xlu0 %614
        %v618 = vadd.f32 %v562, %v613
        %v619 = vadd.f32 %v563, %v615
        %s620 = sld [smem:[#allocation4 + $0x71]]
        %v621 = vstv %s620
        %v622 = vmul.f32 %v621, %v496
        %v623 = vmul.f32 %v621, %v497
        %626 = vrot.lane.b32.xlu0 %v622, 126
        %v627 = vpop.permute.xlu0 %626
        %628 = vrot.lane.b32.xlu0 %v623, 126
        %v629 = vpop.permute.xlu0 %628
        %v632 = vadd.f32 %v576, %v627
        %v633 = vadd.f32 %v577, %v629
        %v634 = vld [vmem:[#allocation2 + $0x2] sm:$0xff]
        %v635 = vld [vmem:[#allocation2 + $0xa] sm:$0xff]
        %s636 = sld [smem:[#allocation4 + $0x6]]
        %v637 = vstv %s636
        %v638 = vmul.f32 %v637, %v634
        %v639 = vmul.f32 %v637, %v635
        %v640 = vadd.f32 %v590, %v638
        %v641 = vadd.f32 %v591, %v639
        %s642 = sld [smem:[#allocation4 + $0x2a]]
        %v643 = vstv %s642
        %v644 = vmul.f32 %v643, %v634
        %v645 = vmul.f32 %v643, %v635
        %v646 = vadd.f32 %v604, %v644
        %v647 = vadd.f32 %v605, %v645
        %s648 = sld [smem:[#allocation4 + $0x4e]]
        %v649 = vstv %s648
        %v650 = vmul.f32 %v649, %v634
        %v651 = vmul.f32 %v649, %v635
        %v652 = vadd.f32 %v618, %v650
        %v653 = vadd.f32 %v619, %v651
        %s654 = sld [smem:[#allocation4 + $0x72]]
        %v655 = vstv %s654
        %v656 = vmul.f32 %v655, %v634
        %v657 = vmul.f32 %v655, %v635
        %v658 = vadd.f32 %v632, %v656
        %v659 = vadd.f32 %v633, %v657
        %s660 = sld [smem:[#allocation4 + $0x7]]
        %v661 = vstv %s660
        %v662 = vmul.f32 %v661, %v634
        %v663 = vmul.f32 %v661, %v635
        %666 = vrot.lane.b32.xlu0 %v662, 127
        %v667 = vpop.permute.xlu0 %666
        %668 = vrot.lane.b32.xlu0 %v663, 127
        %v669 = vpop.permute.xlu0 %668
        %v672 = vadd.f32 %v640, %v667
        %v673 = vadd.f32 %v641, %v669
        %s674 = sld [smem:[#allocation4 + $0x2b]]
        %v675 = vstv %s674
        %v676 = vmul.f32 %v675, %v634
        %v677 = vmul.f32 %v675, %v635
        %680 = vrot.lane.b32.xlu0 %v676, 127
        %v681 = vpop.permute.xlu0 %680
        %682 = vrot.lane.b32.xlu0 %v677, 127
        %v683 = vpop.permute.xlu0 %682
        %v686 = vadd.f32 %v646, %v681
        %v687 = vadd.f32 %v647, %v683
        %s688 = sld [smem:[#allocation4 + $0x4f]]
        %v689 = vstv %s688
        %v690 = vmul.f32 %v689, %v634
        %v691 = vmul.f32 %v689, %v635
        %694 = vrot.lane.b32.xlu0 %v690, 127
        %v695 = vpop.permute.xlu0 %694
        %696 = vrot.lane.b32.xlu0 %v691, 127
        %v697 = vpop.permute.xlu0 %696
        %v700 = vadd.f32 %v652, %v695
        %v701 = vadd.f32 %v653, %v697
        %s702 = sld [smem:[#allocation4 + $0x73]]
        %v703 = vstv %s702
        %v704 = vmul.f32 %v703, %v634
        %v705 = vmul.f32 %v703, %v635
        %708 = vrot.lane.b32.xlu0 %v704, 127
        %v709 = vpop.permute.xlu0 %708
        %710 = vrot.lane.b32.xlu0 %v705, 127
        %v711 = vpop.permute.xlu0 %710
        %v714 = vadd.f32 %v658, %v709
        %v715 = vadd.f32 %v659, %v711
        %s716 = sld [smem:[#allocation4 + $0x8]]
        %v717 = vstv %s716
        %v718 = vmul.f32 %v717, %v634
        %v719 = vmul.f32 %v717, %v635
        %722 = vrot.lane.b32.xlu0 %v718, 126
        %v723 = vpop.permute.xlu0 %722
        %724 = vrot.lane.b32.xlu0 %v719, 126
        %v725 = vpop.permute.xlu0 %724
        %v728 = vadd.f32 %v672, %v723
        %v729 = vadd.f32 %v673, %v725
        %s730 = sld [smem:[#allocation4 + $0x2c]]
        %v731 = vstv %s730
        %v732 = vmul.f32 %v731, %v634
        %v733 = vmul.f32 %v731, %v635
        %736 = vrot.lane.b32.xlu0 %v732, 126
        %v737 = vpop.permute.xlu0 %736
        %738 = vrot.lane.b32.xlu0 %v733, 126
        %v739 = vpop.permute.xlu0 %738
        %v742 = vadd.f32 %v686, %v737
        %v743 = vadd.f32 %v687, %v739
        %s744 = sld [smem:[#allocation4 + $0x50]]
        %v745 = vstv %s744
        %v746 = vmul.f32 %v745, %v634
        %v747 = vmul.f32 %v745, %v635
        %750 = vrot.lane.b32.xlu0 %v746, 126
        %v751 = vpop.permute.xlu0 %750
        %752 = vrot.lane.b32.xlu0 %v747, 126
        %v753 = vpop.permute.xlu0 %752
        %v756 = vadd.f32 %v700, %v751
        %v757 = vadd.f32 %v701, %v753
        %s758 = sld [smem:[#allocation4 + $0x74]]
        %v759 = vstv %s758
        %v760 = vmul.f32 %v759, %v634
        %v761 = vmul.f32 %v759, %v635
        %764 = vrot.lane.b32.xlu0 %v760, 126
        %v765 = vpop.permute.xlu0 %764
        %766 = vrot.lane.b32.xlu0 %v761, 126
        %v767 = vpop.permute.xlu0 %766
        %v770 = vadd.f32 %v714, %v765
        %v771 = vadd.f32 %v715, %v767
        %s772 = scalar_lea.vmem [#allocation2], 24
        %v773 = vld [vmem:[%s772] sm:$0xff]
        %v774 = vld [vmem:[%s772 + $0x8] sm:$0xff]
        %s775 = sld [smem:[#allocation4 + $0x9]]
        %v776 = vstv %s775
        %v777 = vmul.f32 %v776, %v773
        %v778 = vmul.f32 %v776, %v774
        %v779 = vadd.f32 %v728, %v777
        %v780 = vadd.f32 %v729, %v778
        %s781 = sld [smem:[#allocation4 + $0x2d]]
        %v782 = vstv %s781
        %v783 = vmul.f32 %v782, %v773
        %v784 = vmul.f32 %v782, %v774
        %v785 = vadd.f32 %v742, %v783
        %v786 = vadd.f32 %v743, %v784
        %s787 = sld [smem:[#allocation4 + $0x51]]
        %v788 = vstv %s787
        %v789 = vmul.f32 %v788, %v773
        %v790 = vmul.f32 %v788, %v774
        %v791 = vadd.f32 %v756, %v789
        %v792 = vadd.f32 %v757, %v790
        %s793 = sld [smem:[#allocation4 + $0x75]]
        %v794 = vstv %s793
        %v795 = vmul.f32 %v794, %v773
        %v796 = vmul.f32 %v794, %v774
        %v797 = vadd.f32 %v770, %v795
        %v798 = vadd.f32 %v771, %v796
        %s799 = sld [smem:[#allocation4 + $0xa]]
        %v800 = vstv %s799
        %v801 = vmul.f32 %v800, %v773
        %v802 = vmul.f32 %v800, %v774
        %805 = vrot.lane.b32.xlu0 %v801, 127
        %v806 = vpop.permute.xlu0 %805
        %807 = vrot.lane.b32.xlu0 %v802, 127
        %v808 = vpop.permute.xlu0 %807
        %v811 = vadd.f32 %v779, %v806
        %v812 = vadd.f32 %v780, %v808
        %s813 = sld [smem:[#allocation4 + $0x2e]]
        %v814 = vstv %s813
        %v815 = vmul.f32 %v814, %v773
        %v816 = vmul.f32 %v814, %v774
        %819 = vrot.lane.b32.xlu0 %v815, 127
        %v820 = vpop.permute.xlu0 %819
        %821 = vrot.lane.b32.xlu0 %v816, 127
        %v822 = vpop.permute.xlu0 %821
        %v825 = vadd.f32 %v785, %v820
        %v826 = vadd.f32 %v786, %v822
        %s827 = sld [smem:[#allocation4 + $0x52]]
        %v828 = vstv %s827
        %v829 = vmul.f32 %v828, %v773
        %v830 = vmul.f32 %v828, %v774
        %833 = vrot.lane.b32.xlu0 %v829, 127
        %v834 = vpop.permute.xlu0 %833
        %835 = vrot.lane.b32.xlu0 %v830, 127
        %v836 = vpop.permute.xlu0 %835
        %v839 = vadd.f32 %v791, %v834
        %v840 = vadd.f32 %v792, %v836
        %s841 = sld [smem:[#allocation4 + $0x76]]
        %v842 = vstv %s841
        %v843 = vmul.f32 %v842, %v773
        %v844 = vmul.f32 %v842, %v774
        %847 = vrot.lane.b32.xlu0 %v843, 127
        %v848 = vpop.permute.xlu0 %847
        %849 = vrot.lane.b32.xlu0 %v844, 127
        %v850 = vpop.permute.xlu0 %849
        %v853 = vadd.f32 %v797, %v848
        %v854 = vadd.f32 %v798, %v850
        %s855 = sld [smem:[#allocation4 + $0xb]]
        %v856 = vstv %s855
        %v857 = vmul.f32 %v856, %v773
        %v858 = vmul.f32 %v856, %v774
        %861 = vrot.lane.b32.xlu0 %v857, 126
        %v862 = vpop.permute.xlu0 %861
        %863 = vrot.lane.b32.xlu0 %v858, 126
        %v864 = vpop.permute.xlu0 %863
        %v867 = vadd.f32 %v811, %v862
        %v868 = vadd.f32 %v812, %v864
        %s869 = sld [smem:[#allocation4 + $0x2f]]
        %v870 = vstv %s869
        %v871 = vmul.f32 %v870, %v773
        %v872 = vmul.f32 %v870, %v774
        %875 = vrot.lane.b32.xlu0 %v871, 126
        %v876 = vpop.permute.xlu0 %875
        %877 = vrot.lane.b32.xlu0 %v872, 126
        %v878 = vpop.permute.xlu0 %877
        %v881 = vadd.f32 %v825, %v876
        %v882 = vadd.f32 %v826, %v878
        %s883 = sld [smem:[#allocation4 + $0x53]]
        %v884 = vstv %s883
        %v885 = vmul.f32 %v884, %v773
        %v886 = vmul.f32 %v884, %v774
        %889 = vrot.lane.b32.xlu0 %v885, 126
        %v890 = vpop.permute.xlu0 %889
        %891 = vrot.lane.b32.xlu0 %v886, 126
        %v892 = vpop.permute.xlu0 %891
        %v895 = vadd.f32 %v839, %v890
        %v896 = vadd.f32 %v840, %v892
        %s897 = sld [smem:[#allocation4 + $0x77]]
        %v898 = vstv %s897
        %v899 = vmul.f32 %v898, %v773
        %v900 = vmul.f32 %v898, %v774
        %903 = vrot.lane.b32.xlu0 %v899, 126
        %v904 = vpop.permute.xlu0 %903
        %905 = vrot.lane.b32.xlu0 %v900, 126
        %v906 = vpop.permute.xlu0 %905
        %v909 = vadd.f32 %v853, %v904
        %v910 = vadd.f32 %v854, %v906
        %v911 = vld [vmem:[%s772 + $0x1] sm:$0xff]
        %v912 = vld [vmem:[%s772 + $0x9] sm:$0xff]
        %s913 = sld [smem:[#allocation4 + $0xc]]
        %v914 = vstv %s913
        %v915 = vmul.f32 %v914, %v911
        %v916 = vmul.f32 %v914, %v912
        %v917 = vadd.f32 %v867, %v915
        %v918 = vadd.f32 %v868, %v916
        %s919 = sld [smem:[#allocation4 + $0x30]]
        %v920 = vstv %s919
        %v921 = vmul.f32 %v920, %v911
        %v922 = vmul.f32 %v920, %v912
        %v923 = vadd.f32 %v881, %v921
        %v924 = vadd.f32 %v882, %v922
        %s925 = sld [smem:[#allocation4 + $0x54]]
        %v926 = vstv %s925
        %v927 = vmul.f32 %v926, %v911
        %v928 = vmul.f32 %v926, %v912
        %v929 = vadd.f32 %v895, %v927
        %v930 = vadd.f32 %v896, %v928
        %s931 = sld [smem:[#allocation4 + $0x78]]
        %v932 = vstv %s931
        %v933 = vmul.f32 %v932, %v911
        %v934 = vmul.f32 %v932, %v912
        %v935 = vadd.f32 %v909, %v933
        %v936 = vadd.f32 %v910, %v934
        %s937 = sld [smem:[#allocation4 + $0xd]]
        %v938 = vstv %s937
        %v939 = vmul.f32 %v938, %v911
        %v940 = vmul.f32 %v938, %v912
        %943 = vrot.lane.b32.xlu0 %v939, 127
        %v944 = vpop.permute.xlu0 %943
        %945 = vrot.lane.b32.xlu0 %v940, 127
        %v946 = vpop.permute.xlu0 %945
        %v949 = vadd.f32 %v917, %v944
        %v950 = vadd.f32 %v918, %v946
        %s951 = sld [smem:[#allocation4 + $0x31]]
        %v952 = vstv %s951
        %v953 = vmul.f32 %v952, %v911
        %v954 = vmul.f32 %v952, %v912
        %957 = vrot.lane.b32.xlu0 %v953, 127
        %v958 = vpop.permute.xlu0 %957
        %959 = vrot.lane.b32.xlu0 %v954, 127
        %v960 = vpop.permute.xlu0 %959
        %v963 = vadd.f32 %v923, %v958
        %v964 = vadd.f32 %v924, %v960
        %s965 = sld [smem:[#allocation4 + $0x55]]
        %v966 = vstv %s965
        %v967 = vmul.f32 %v966, %v911
        %v968 = vmul.f32 %v966, %v912
        %971 = vrot.lane.b32.xlu0 %v967, 127
        %v972 = vpop.permute.xlu0 %971
        %973 = vrot.lane.b32.xlu0 %v968, 127
        %v974 = vpop.permute.xlu0 %973
        %v977 = vadd.f32 %v929, %v972
        %v978 = vadd.f32 %v930, %v974
        %s979 = sld [smem:[#allocation4 + $0x79]]
        %v980 = vstv %s979
        %v981 = vmul.f32 %v980, %v911
        %v982 = vmul.f32 %v980, %v912
        %985 = vrot.lane.b32.xlu0 %v981, 127
        %v986 = vpop.permute.xlu0 %985
        %987 = vrot.lane.b32.xlu0 %v982, 127
        %v988 = vpop.permute.xlu0 %987
        %v991 = vadd.f32 %v935, %v986
        %v992 = vadd.f32 %v936, %v988
        %s993 = sld [smem:[#allocation4 + $0xe]]
        %v994 = vstv %s993
        %v995 = vmul.f32 %v994, %v911
        %v996 = vmul.f32 %v994, %v912
        %999 = vrot.lane.b32.xlu0 %v995, 126
        %v1000 = vpop.permute.xlu0 %999
        %1001 = vrot.lane.b32.xlu0 %v996, 126
        %v1002 = vpop.permute.xlu0 %1001
        %v1005 = vadd.f32 %v949, %v1000
        %v1006 = vadd.f32 %v950, %v1002
        %s1007 = sld [smem:[#allocation4 + $0x32]]
        %v1008 = vstv %s1007
        %v1009 = vmul.f32 %v1008, %v911
        %v1010 = vmul.f32 %v1008, %v912
        %1013 = vrot.lane.b32.xlu0 %v1009, 126
        %v1014 = vpop.permute.xlu0 %1013
        %1015 = vrot.lane.b32.xlu0 %v1010, 126
        %v1016 = vpop.permute.xlu0 %1015
        %v1019 = vadd.f32 %v963, %v1014
        %v1020 = vadd.f32 %v964, %v1016
        %s1021 = sld [smem:[#allocation4 + $0x56]]
        %v1022 = vstv %s1021
        %v1023 = vmul.f32 %v1022, %v911
        %v1024 = vmul.f32 %v1022, %v912
        %1027 = vrot.lane.b32.xlu0 %v1023, 126
        %v1028 = vpop.permute.xlu0 %1027
        %1029 = vrot.lane.b32.xlu0 %v1024, 126
        %v1030 = vpop.permute.xlu0 %1029
        %v1033 = vadd.f32 %v977, %v1028
        %v1034 = vadd.f32 %v978, %v1030
        %s1035 = sld [smem:[#allocation4 + $0x7a]]
        %v1036 = vstv %s1035
        %v1037 = vmul.f32 %v1036, %v911
        %v1038 = vmul.f32 %v1036, %v912
        %1041 = vrot.lane.b32.xlu0 %v1037, 126
        %v1042 = vpop.permute.xlu0 %1041
        %1043 = vrot.lane.b32.xlu0 %v1038, 126
        %v1044 = vpop.permute.xlu0 %1043
        %v1047 = vadd.f32 %v991, %v1042
        %v1048 = vadd.f32 %v992, %v1044
        %v1049 = vld [vmem:[%s772 + $0x2] sm:$0xff]
        %v1050 = vld [vmem:[%s772 + $0xa] sm:$0xff]
        %s1051 = sld [smem:[#allocation4 + $0xf]]
        %v1052 = vstv %s1051
        %v1053 = vmul.f32 %v1052, %v1049
        %v1054 = vmul.f32 %v1052, %v1050
        %v1055 = vadd.f32 %v1005, %v1053
        %v1056 = vadd.f32 %v1006, %v1054
        %s1057 = sld [smem:[#allocation4 + $0x33]]
        %v1058 = vstv %s1057
        %v1059 = vmul.f32 %v1058, %v1049
        %v1060 = vmul.f32 %v1058, %v1050
        %v1061 = vadd.f32 %v1019, %v1059
        %v1062 = vadd.f32 %v1020, %v1060
        %s1063 = sld [smem:[#allocation4 + $0x57]]
        %v1064 = vstv %s1063
        %v1065 = vmul.f32 %v1064, %v1049
        %v1066 = vmul.f32 %v1064, %v1050
        %v1067 = vadd.f32 %v1033, %v1065
        %v1068 = vadd.f32 %v1034, %v1066
        %s1069 = sld [smem:[#allocation4 + $0x7b]]
        %v1070 = vstv %s1069
        %v1071 = vmul.f32 %v1070, %v1049
        %v1072 = vmul.f32 %v1070, %v1050
        %v1073 = vadd.f32 %v1047, %v1071
        %v1074 = vadd.f32 %v1048, %v1072
        %s1075 = sld [smem:[#allocation4 + $0x10]]
        %v1076 = vstv %s1075
        %v1077 = vmul.f32 %v1076, %v1049
        %v1078 = vmul.f32 %v1076, %v1050
        %1081 = vrot.lane.b32.xlu0 %v1077, 127
        %v1082 = vpop.permute.xlu0 %1081
        %1083 = vrot.lane.b32.xlu0 %v1078, 127
        %v1084 = vpop.permute.xlu0 %1083
        %v1087 = vadd.f32 %v1055, %v1082
        %v1088 = vadd.f32 %v1056, %v1084
        %s1089 = sld [smem:[#allocation4 + $0x34]]
        %v1090 = vstv %s1089
        %v1091 = vmul.f32 %v1090, %v1049
        %v1092 = vmul.f32 %v1090, %v1050
        %1095 = vrot.lane.b32.xlu0 %v1091, 127
        %v1096 = vpop.permute.xlu0 %1095
        %1097 = vrot.lane.b32.xlu0 %v1092, 127
        %v1098 = vpop.permute.xlu0 %1097
        %v1101 = vadd.f32 %v1061, %v1096
        %v1102 = vadd.f32 %v1062, %v1098
        %s1103 = sld [smem:[#allocation4 + $0x58]]
        %v1104 = vstv %s1103
        %v1105 = vmul.f32 %v1104, %v1049
        %v1106 = vmul.f32 %v1104, %v1050
        %1109 = vrot.lane.b32.xlu0 %v1105, 127
        %v1110 = vpop.permute.xlu0 %1109
        %1111 = vrot.lane.b32.xlu0 %v1106, 127
        %v1112 = vpop.permute.xlu0 %1111
        %v1115 = vadd.f32 %v1067, %v1110
        %v1116 = vadd.f32 %v1068, %v1112
        %s1117 = sld [smem:[#allocation4 + $0x7c]]
        %v1118 = vstv %s1117
        %v1119 = vmul.f32 %v1118, %v1049
        %v1120 = vmul.f32 %v1118, %v1050
        %1123 = vrot.lane.b32.xlu0 %v1119, 127
        %v1124 = vpop.permute.xlu0 %1123
        %1125 = vrot.lane.b32.xlu0 %v1120, 127
        %v1126 = vpop.permute.xlu0 %1125
        %v1129 = vadd.f32 %v1073, %v1124
        %v1130 = vadd.f32 %v1074, %v1126
        %s1131 = sld [smem:[#allocation4 + $0x11]]
        %v1132 = vstv %s1131
        %v1133 = vmul.f32 %v1132, %v1049
        %v1134 = vmul.f32 %v1132, %v1050
        %1137 = vrot.lane.b32.xlu0 %v1133, 126
        %v1138 = vpop.permute.xlu0 %1137
        %1139 = vrot.lane.b32.xlu0 %v1134, 126
        %v1140 = vpop.permute.xlu0 %1139
        %v1143 = vadd.f32 %v1087, %v1138
        %v1144 = vadd.f32 %v1088, %v1140
        %s1145 = sld [smem:[#allocation4 + $0x35]]
        %v1146 = vstv %s1145
        %v1147 = vmul.f32 %v1146, %v1049
        %v1148 = vmul.f32 %v1146, %v1050
        %1151 = vrot.lane.b32.xlu0 %v1147, 126
        %v1152 = vpop.permute.xlu0 %1151
        %1153 = vrot.lane.b32.xlu0 %v1148, 126
        %v1154 = vpop.permute.xlu0 %1153
        %v1157 = vadd.f32 %v1101, %v1152
        %v1158 = vadd.f32 %v1102, %v1154
        %s1159 = sld [smem:[#allocation4 + $0x59]]
        %v1160 = vstv %s1159
        %v1161 = vmul.f32 %v1160, %v1049
        %v1162 = vmul.f32 %v1160, %v1050
        %1165 = vrot.lane.b32.xlu0 %v1161, 126
        %v1166 = vpop.permute.xlu0 %1165
        %1167 = vrot.lane.b32.xlu0 %v1162, 126
        %v1168 = vpop.permute.xlu0 %1167
        %v1171 = vadd.f32 %v1115, %v1166
        %v1172 = vadd.f32 %v1116, %v1168
        %s1173 = sld [smem:[#allocation4 + $0x7d]]
        %v1174 = vstv %s1173
        %v1175 = vmul.f32 %v1174, %v1049
        %v1176 = vmul.f32 %v1174, %v1050
        %1179 = vrot.lane.b32.xlu0 %v1175, 126
        %v1180 = vpop.permute.xlu0 %1179
        %1181 = vrot.lane.b32.xlu0 %v1176, 126
        %v1182 = vpop.permute.xlu0 %1181
        %v1185 = vadd.f32 %v1129, %v1180
        %v1186 = vadd.f32 %v1130, %v1182
        %s1187 = scalar_lea.vmem [#allocation2], 48
        %v1188 = vld [vmem:[%s1187] sm:$0xff]
        %v1189 = vld [vmem:[%s1187 + $0x8] sm:$0xff]
        %s1190 = sld [smem:[#allocation4 + $0x12]]
        %v1191 = vstv %s1190
        %v1192 = vmul.f32 %v1191, %v1188
        %v1193 = vmul.f32 %v1191, %v1189
        %v1194 = vadd.f32 %v1143, %v1192
        %v1195 = vadd.f32 %v1144, %v1193
        %s1196 = sld [smem:[#allocation4 + $0x36]]
        %v1197 = vstv %s1196
        %v1198 = vmul.f32 %v1197, %v1188
        %v1199 = vmul.f32 %v1197, %v1189
        %v1200 = vadd.f32 %v1157, %v1198
        %v1201 = vadd.f32 %v1158, %v1199
        %s1202 = sld [smem:[#allocation4 + $0x5a]]
        %v1203 = vstv %s1202
        %v1204 = vmul.f32 %v1203, %v1188
        %v1205 = vmul.f32 %v1203, %v1189
        %v1206 = vadd.f32 %v1171, %v1204
        %v1207 = vadd.f32 %v1172, %v1205
        %s1208 = sld [smem:[#allocation4 + $0x7e]]
        %v1209 = vstv %s1208
        %v1210 = vmul.f32 %v1209, %v1188
        %v1211 = vmul.f32 %v1209, %v1189
        %v1212 = vadd.f32 %v1185, %v1210
        %v1213 = vadd.f32 %v1186, %v1211
        %s1214 = sld [smem:[#allocation4 + $0x13]]
        %v1215 = vstv %s1214
        %v1216 = vmul.f32 %v1215, %v1188
        %v1217 = vmul.f32 %v1215, %v1189
        %1220 = vrot.lane.b32.xlu0 %v1216, 127
        %v1221 = vpop.permute.xlu0 %1220
        %1222 = vrot.lane.b32.xlu0 %v1217, 127
        %v1223 = vpop.permute.xlu0 %1222
        %v1226 = vadd.f32 %v1194, %v1221
        %v1227 = vadd.f32 %v1195, %v1223
        %s1228 = sld [smem:[#allocation4 + $0x37]]
        %v1229 = vstv %s1228
        %v1230 = vmul.f32 %v1229, %v1188
        %v1231 = vmul.f32 %v1229, %v1189
        %1234 = vrot.lane.b32.xlu0 %v1230, 127
        %v1235 = vpop.permute.xlu0 %1234
        %1236 = vrot.lane.b32.xlu0 %v1231, 127
        %v1237 = vpop.permute.xlu0 %1236
        %v1240 = vadd.f32 %v1200, %v1235
        %v1241 = vadd.f32 %v1201, %v1237
        %s1242 = sld [smem:[#allocation4 + $0x5b]]
        %v1243 = vstv %s1242
        %v1244 = vmul.f32 %v1243, %v1188
        %v1245 = vmul.f32 %v1243, %v1189
        %1248 = vrot.lane.b32.xlu0 %v1244, 127
        %v1249 = vpop.permute.xlu0 %1248
        %1250 = vrot.lane.b32.xlu0 %v1245, 127
        %v1251 = vpop.permute.xlu0 %1250
        %v1254 = vadd.f32 %v1206, %v1249
        %v1255 = vadd.f32 %v1207, %v1251
        %s1256 = sld [smem:[#allocation4 + $0x7f]]
        %v1257 = vstv %s1256
        %v1258 = vmul.f32 %v1257, %v1188
        %v1259 = vmul.f32 %v1257, %v1189
        %1262 = vrot.lane.b32.xlu0 %v1258, 127
        %v1263 = vpop.permute.xlu0 %1262
        %1264 = vrot.lane.b32.xlu0 %v1259, 127
        %v1265 = vpop.permute.xlu0 %1264
        %v1268 = vadd.f32 %v1212, %v1263
        %v1269 = vadd.f32 %v1213, %v1265
        %s1270 = sld [smem:[#allocation4 + $0x14]]
        %v1271 = vstv %s1270
        %v1272 = vmul.f32 %v1271, %v1188
        %v1273 = vmul.f32 %v1271, %v1189
        %1276 = vrot.lane.b32.xlu0 %v1272, 126
        %v1277 = vpop.permute.xlu0 %1276
        %1278 = vrot.lane.b32.xlu0 %v1273, 126
        %v1279 = vpop.permute.xlu0 %1278
        %v1282 = vadd.f32 %v1226, %v1277
        %v1283 = vadd.f32 %v1227, %v1279
        %s1284 = sld [smem:[#allocation4 + $0x38]]
        %v1285 = vstv %s1284
        %v1286 = vmul.f32 %v1285, %v1188
        %v1287 = vmul.f32 %v1285, %v1189
        %1290 = vrot.lane.b32.xlu0 %v1286, 126
        %v1291 = vpop.permute.xlu0 %1290
        %1292 = vrot.lane.b32.xlu0 %v1287, 126
        %v1293 = vpop.permute.xlu0 %1292
        %v1296 = vadd.f32 %v1240, %v1291
        %v1297 = vadd.f32 %v1241, %v1293
        %s1298 = sld [smem:[#allocation4 + $0x5c]]
        %v1299 = vstv %s1298
        %v1300 = vmul.f32 %v1299, %v1188
        %v1301 = vmul.f32 %v1299, %v1189
        %1304 = vrot.lane.b32.xlu0 %v1300, 126
        %v1305 = vpop.permute.xlu0 %1304
        %1306 = vrot.lane.b32.xlu0 %v1301, 126
        %v1307 = vpop.permute.xlu0 %1306
        %v1310 = vadd.f32 %v1254, %v1305
        %v1311 = vadd.f32 %v1255, %v1307
        %s1312 = sld [smem:[#allocation4 + $0x80]]
        %v1313 = vstv %s1312
        %v1314 = vmul.f32 %v1313, %v1188
        %v1315 = vmul.f32 %v1313, %v1189
        %1318 = vrot.lane.b32.xlu0 %v1314, 126
        %v1319 = vpop.permute.xlu0 %1318
        %1320 = vrot.lane.b32.xlu0 %v1315, 126
        %v1321 = vpop.permute.xlu0 %1320
        %v1324 = vadd.f32 %v1268, %v1319
        %v1325 = vadd.f32 %v1269, %v1321
        %v1326 = vld [vmem:[%s1187 + $0x1] sm:$0xff]
        %v1327 = vld [vmem:[%s1187 + $0x9] sm:$0xff]
        %s1328 = sld [smem:[#allocation4 + $0x15]]
        %v1329 = vstv %s1328
        %v1330 = vmul.f32 %v1329, %v1326
        %v1331 = vmul.f32 %v1329, %v1327
        %v1332 = vadd.f32 %v1282, %v1330
        %v1333 = vadd.f32 %v1283, %v1331
        %s1334 = sld [smem:[#allocation4 + $0x39]]
        %v1335 = vstv %s1334
        %v1336 = vmul.f32 %v1335, %v1326
        %v1337 = vmul.f32 %v1335, %v1327
        %v1338 = vadd.f32 %v1296, %v1336
        %v1339 = vadd.f32 %v1297, %v1337
        %s1340 = sld [smem:[#allocation4 + $0x5d]]
        %v1341 = vstv %s1340
        %v1342 = vmul.f32 %v1341, %v1326
        %v1343 = vmul.f32 %v1341, %v1327
        %v1344 = vadd.f32 %v1310, %v1342
        %v1345 = vadd.f32 %v1311, %v1343
        %s1346 = sld [smem:[#allocation4 + $0x81]]
        %v1347 = vstv %s1346
        %v1348 = vmul.f32 %v1347, %v1326
        %v1349 = vmul.f32 %v1347, %v1327
        %v1350 = vadd.f32 %v1324, %v1348
        %v1351 = vadd.f32 %v1325, %v1349
        %s1352 = sld [smem:[#allocation4 + $0x16]]
        %v1353 = vstv %s1352
        %v1354 = vmul.f32 %v1353, %v1326
        %v1355 = vmul.f32 %v1353, %v1327
        %1358 = vrot.lane.b32.xlu0 %v1354, 127
        %v1359 = vpop.permute.xlu0 %1358
        %1360 = vrot.lane.b32.xlu0 %v1355, 127
        %v1361 = vpop.permute.xlu0 %1360
        %v1364 = vadd.f32 %v1332, %v1359
        %v1365 = vadd.f32 %v1333, %v1361
        %s1366 = sld [smem:[#allocation4 + $0x3a]]
        %v1367 = vstv %s1366
        %v1368 = vmul.f32 %v1367, %v1326
        %v1369 = vmul.f32 %v1367, %v1327
        %1372 = vrot.lane.b32.xlu0 %v1368, 127
        %v1373 = vpop.permute.xlu0 %1372
        %1374 = vrot.lane.b32.xlu0 %v1369, 127
        %v1375 = vpop.permute.xlu0 %1374
        %v1378 = vadd.f32 %v1338, %v1373
        %v1379 = vadd.f32 %v1339, %v1375
        %s1380 = sld [smem:[#allocation4 + $0x5e]]
        %v1381 = vstv %s1380
        %v1382 = vmul.f32 %v1381, %v1326
        %v1383 = vmul.f32 %v1381, %v1327
        %1386 = vrot.lane.b32.xlu0 %v1382, 127
        %v1387 = vpop.permute.xlu0 %1386
        %1388 = vrot.lane.b32.xlu0 %v1383, 127
        %v1389 = vpop.permute.xlu0 %1388
        %v1392 = vadd.f32 %v1344, %v1387
        %v1393 = vadd.f32 %v1345, %v1389
        %s1394 = sld [smem:[#allocation4 + $0x82]]
        %v1395 = vstv %s1394
        %v1396 = vmul.f32 %v1395, %v1326
        %v1397 = vmul.f32 %v1395, %v1327
        %1400 = vrot.lane.b32.xlu0 %v1396, 127
        %v1401 = vpop.permute.xlu0 %1400
        %1402 = vrot.lane.b32.xlu0 %v1397, 127
        %v1403 = vpop.permute.xlu0 %1402
        %v1406 = vadd.f32 %v1350, %v1401
        %v1407 = vadd.f32 %v1351, %v1403
        %s1408 = sld [smem:[#allocation4 + $0x17]]
        %v1409 = vstv %s1408
        %v1410 = vmul.f32 %v1409, %v1326
        %v1411 = vmul.f32 %v1409, %v1327
        %1414 = vrot.lane.b32.xlu0 %v1410, 126
        %v1415 = vpop.permute.xlu0 %1414
        %1416 = vrot.lane.b32.xlu0 %v1411, 126
        %v1417 = vpop.permute.xlu0 %1416
        %v1420 = vadd.f32 %v1364, %v1415
        %v1421 = vadd.f32 %v1365, %v1417
        %s1422 = sld [smem:[#allocation4 + $0x3b]]
        %v1423 = vstv %s1422
        %v1424 = vmul.f32 %v1423, %v1326
        %v1425 = vmul.f32 %v1423, %v1327
        %1428 = vrot.lane.b32.xlu0 %v1424, 126
        %v1429 = vpop.permute.xlu0 %1428
        %1430 = vrot.lane.b32.xlu0 %v1425, 126
        %v1431 = vpop.permute.xlu0 %1430
        %v1434 = vadd.f32 %v1378, %v1429
        %v1435 = vadd.f32 %v1379, %v1431
        %s1436 = sld [smem:[#allocation4 + $0x5f]]
        %v1437 = vstv %s1436
        %v1438 = vmul.f32 %v1437, %v1326
        %v1439 = vmul.f32 %v1437, %v1327
        %1442 = vrot.lane.b32.xlu0 %v1438, 126
        %v1443 = vpop.permute.xlu0 %1442
        %1444 = vrot.lane.b32.xlu0 %v1439, 126
        %v1445 = vpop.permute.xlu0 %1444
        %v1448 = vadd.f32 %v1392, %v1443
        %v1449 = vadd.f32 %v1393, %v1445
        %s1450 = sld [smem:[#allocation4 + $0x83]]
        %v1451 = vstv %s1450
        %v1452 = vmul.f32 %v1451, %v1326
        %v1453 = vmul.f32 %v1451, %v1327
        %1456 = vrot.lane.b32.xlu0 %v1452, 126
        %v1457 = vpop.permute.xlu0 %1456
        %1458 = vrot.lane.b32.xlu0 %v1453, 126
        %v1459 = vpop.permute.xlu0 %1458
        %v1462 = vadd.f32 %v1406, %v1457
        %v1463 = vadd.f32 %v1407, %v1459
        %v1464 = vld [vmem:[%s1187 + $0x2] sm:$0xff]
        %v1465 = vld [vmem:[%s1187 + $0xa] sm:$0xff]
        %s1466 = sld [smem:[#allocation4 + $0x18]]
        %v1467 = vstv %s1466
        %v1468 = vmul.f32 %v1467, %v1464
        %v1469 = vmul.f32 %v1467, %v1465
        %v1470 = vadd.f32 %v1420, %v1468
        %v1471 = vadd.f32 %v1421, %v1469
        %s1472 = sld [smem:[#allocation4 + $0x3c]]
        %v1473 = vstv %s1472
        %v1474 = vmul.f32 %v1473, %v1464
        %v1475 = vmul.f32 %v1473, %v1465
        %v1476 = vadd.f32 %v1434, %v1474
        %v1477 = vadd.f32 %v1435, %v1475
        %s1478 = sld [smem:[#allocation4 + $0x60]]
        %v1479 = vstv %s1478
        %v1480 = vmul.f32 %v1479, %v1464
        %v1481 = vmul.f32 %v1479, %v1465
        %v1482 = vadd.f32 %v1448, %v1480
        %v1483 = vadd.f32 %v1449, %v1481
        %s1484 = sld [smem:[#allocation4 + $0x84]]
        %v1485 = vstv %s1484
        %v1486 = vmul.f32 %v1485, %v1464
        %v1487 = vmul.f32 %v1485, %v1465
        %v1488 = vadd.f32 %v1462, %v1486
        %v1489 = vadd.f32 %v1463, %v1487
        %s1490 = sld [smem:[#allocation4 + $0x19]]
        %v1491 = vstv %s1490
        %v1492 = vmul.f32 %v1491, %v1464
        %v1493 = vmul.f32 %v1491, %v1465
        %1496 = vrot.lane.b32.xlu0 %v1492, 127
        %v1497 = vpop.permute.xlu0 %1496
        %1498 = vrot.lane.b32.xlu0 %v1493, 127
        %v1499 = vpop.permute.xlu0 %1498
        %v1502 = vadd.f32 %v1470, %v1497
        %v1503 = vadd.f32 %v1471, %v1499
        %s1504 = sld [smem:[#allocation4 + $0x3d]]
        %v1505 = vstv %s1504
        %v1506 = vmul.f32 %v1505, %v1464
        %v1507 = vmul.f32 %v1505, %v1465
        %1510 = vrot.lane.b32.xlu0 %v1506, 127
        %v1511 = vpop.permute.xlu0 %1510
        %1512 = vrot.lane.b32.xlu0 %v1507, 127
        %v1513 = vpop.permute.xlu0 %1512
        %v1516 = vadd.f32 %v1476, %v1511
        %v1517 = vadd.f32 %v1477, %v1513
        %s1518 = sld [smem:[#allocation4 + $0x61]]
        %v1519 = vstv %s1518
        %v1520 = vmul.f32 %v1519, %v1464
        %v1521 = vmul.f32 %v1519, %v1465
        %1524 = vrot.lane.b32.xlu0 %v1520, 127
        %v1525 = vpop.permute.xlu0 %1524
        %1526 = vrot.lane.b32.xlu0 %v1521, 127
        %v1527 = vpop.permute.xlu0 %1526
        %v1530 = vadd.f32 %v1482, %v1525
        %v1531 = vadd.f32 %v1483, %v1527
        %s1532 = sld [smem:[#allocation4 + $0x85]]
        %v1533 = vstv %s1532
        %v1534 = vmul.f32 %v1533, %v1464
        %v1535 = vmul.f32 %v1533, %v1465
        %1538 = vrot.lane.b32.xlu0 %v1534, 127
        %v1539 = vpop.permute.xlu0 %1538
        %1540 = vrot.lane.b32.xlu0 %v1535, 127
        %v1541 = vpop.permute.xlu0 %1540
        %v1544 = vadd.f32 %v1488, %v1539
        %v1545 = vadd.f32 %v1489, %v1541
        %s1546 = sld [smem:[#allocation4 + $0x1a]]
        %v1547 = vstv %s1546
        %v1548 = vmul.f32 %v1547, %v1464
        %v1549 = vmul.f32 %v1547, %v1465
        %1552 = vrot.lane.b32.xlu0 %v1548, 126
        %v1553 = vpop.permute.xlu0 %1552
        %1554 = vrot.lane.b32.xlu0 %v1549, 126
        %v1555 = vpop.permute.xlu0 %1554
        %v1558 = vadd.f32 %v1502, %v1553
        %v1559 = vadd.f32 %v1503, %v1555
        %s1560 = sld [smem:[#allocation4 + $0x3e]]
        %v1561 = vstv %s1560
        %v1562 = vmul.f32 %v1561, %v1464
        %v1563 = vmul.f32 %v1561, %v1465
        %1566 = vrot.lane.b32.xlu0 %v1562, 126
        %v1567 = vpop.permute.xlu0 %1566
        %1568 = vrot.lane.b32.xlu0 %v1563, 126
        %v1569 = vpop.permute.xlu0 %1568
        %v1572 = vadd.f32 %v1516, %v1567
        %v1573 = vadd.f32 %v1517, %v1569
        %s1574 = sld [smem:[#allocation4 + $0x62]]
        %v1575 = vstv %s1574
        %v1576 = vmul.f32 %v1575, %v1464
        %v1577 = vmul.f32 %v1575, %v1465
        %1580 = vrot.lane.b32.xlu0 %v1576, 126
        %v1581 = vpop.permute.xlu0 %1580
        %1582 = vrot.lane.b32.xlu0 %v1577, 126
        %v1583 = vpop.permute.xlu0 %1582
        %v1586 = vadd.f32 %v1530, %v1581
        %v1587 = vadd.f32 %v1531, %v1583
        %s1588 = sld [smem:[#allocation4 + $0x86]]
        %v1589 = vstv %s1588
        %v1590 = vmul.f32 %v1589, %v1464
        %v1591 = vmul.f32 %v1589, %v1465
        %1594 = vrot.lane.b32.xlu0 %v1590, 126
        %v1595 = vpop.permute.xlu0 %1594
        %1596 = vrot.lane.b32.xlu0 %v1591, 126
        %v1597 = vpop.permute.xlu0 %1596
        %v1600 = vadd.f32 %v1544, %v1595
        %v1601 = vadd.f32 %v1545, %v1597
        %s1602 = scalar_lea.vmem [#allocation2], 72
        %v1603 = vld [vmem:[%s1602] sm:$0xff]
        %v1604 = vld [vmem:[%s1602 + $0x8] sm:$0xff]
        %s1605 = sld [smem:[#allocation4 + $0x1b]]
        %v1606 = vstv %s1605
        %v1607 = vmul.f32 %v1606, %v1603
        %v1608 = vmul.f32 %v1606, %v1604
        %v1609 = vadd.f32 %v1558, %v1607
        %v1610 = vadd.f32 %v1559, %v1608
        %s1611 = sld [smem:[#allocation4 + $0x3f]]
        %v1612 = vstv %s1611
        %v1613 = vmul.f32 %v1612, %v1603
        %v1614 = vmul.f32 %v1612, %v1604
        %v1615 = vadd.f32 %v1572, %v1613
        %v1616 = vadd.f32 %v1573, %v1614
        %s1617 = sld [smem:[#allocation4 + $0x63]]
        %v1618 = vstv %s1617
        %v1619 = vmul.f32 %v1618, %v1603
        %v1620 = vmul.f32 %v1618, %v1604
        %v1621 = vadd.f32 %v1586, %v1619
        %v1622 = vadd.f32 %v1587, %v1620
        %s1623 = sld [smem:[#allocation4 + $0x87]]
        %v1624 = vstv %s1623
        %v1625 = vmul.f32 %v1624, %v1603
        %v1626 = vmul.f32 %v1624, %v1604
        %v1627 = vadd.f32 %v1600, %v1625
        %v1628 = vadd.f32 %v1601, %v1626
        %s1629 = sld [smem:[#allocation4 + $0x1c]]
        %v1630 = vstv %s1629
        %v1631 = vmul.f32 %v1630, %v1603
        %v1632 = vmul.f32 %v1630, %v1604
        %1635 = vrot.lane.b32.xlu0 %v1631, 127
        %v1636 = vpop.permute.xlu0 %1635
        %1637 = vrot.lane.b32.xlu0 %v1632, 127
        %v1638 = vpop.permute.xlu0 %1637
        %v1641 = vadd.f32 %v1609, %v1636
        %v1642 = vadd.f32 %v1610, %v1638
        %s1643 = sld [smem:[#allocation4 + $0x40]]
        %v1644 = vstv %s1643
        %v1645 = vmul.f32 %v1644, %v1603
        %v1646 = vmul.f32 %v1644, %v1604
        %1649 = vrot.lane.b32.xlu0 %v1645, 127
        %v1650 = vpop.permute.xlu0 %1649
        %1651 = vrot.lane.b32.xlu0 %v1646, 127
        %v1652 = vpop.permute.xlu0 %1651
        %v1655 = vadd.f32 %v1615, %v1650
        %v1656 = vadd.f32 %v1616, %v1652
        %s1657 = sld [smem:[#allocation4 + $0x64]]
        %v1658 = vstv %s1657
        %v1659 = vmul.f32 %v1658, %v1603
        %v1660 = vmul.f32 %v1658, %v1604
        %1663 = vrot.lane.b32.xlu0 %v1659, 127
        %v1664 = vpop.permute.xlu0 %1663
        %1665 = vrot.lane.b32.xlu0 %v1660, 127
        %v1666 = vpop.permute.xlu0 %1665
        %v1669 = vadd.f32 %v1621, %v1664
        %v1670 = vadd.f32 %v1622, %v1666
        %s1671 = sld [smem:[#allocation4 + $0x88]]
        %v1672 = vstv %s1671
        %v1673 = vmul.f32 %v1672, %v1603
        %v1674 = vmul.f32 %v1672, %v1604
        %1677 = vrot.lane.b32.xlu0 %v1673, 127
        %v1678 = vpop.permute.xlu0 %1677
        %1679 = vrot.lane.b32.xlu0 %v1674, 127
        %v1680 = vpop.permute.xlu0 %1679
        %v1683 = vadd.f32 %v1627, %v1678
        %v1684 = vadd.f32 %v1628, %v1680
        %s1685 = sld [smem:[#allocation4 + $0x1d]]
        %v1686 = vstv %s1685
        %v1687 = vmul.f32 %v1686, %v1603
        %v1688 = vmul.f32 %v1686, %v1604
        %1691 = vrot.lane.b32.xlu0 %v1687, 126
        %v1692 = vpop.permute.xlu0 %1691
        %1693 = vrot.lane.b32.xlu0 %v1688, 126
        %v1694 = vpop.permute.xlu0 %1693
        %v1697 = vadd.f32 %v1641, %v1692
        %v1698 = vadd.f32 %v1642, %v1694
        %s1699 = sld [smem:[#allocation4 + $0x41]]
        %v1700 = vstv %s1699
        %v1701 = vmul.f32 %v1700, %v1603
        %v1702 = vmul.f32 %v1700, %v1604
        %1705 = vrot.lane.b32.xlu0 %v1701, 126
        %v1706 = vpop.permute.xlu0 %1705
        %1707 = vrot.lane.b32.xlu0 %v1702, 126
        %v1708 = vpop.permute.xlu0 %1707
        %v1711 = vadd.f32 %v1655, %v1706
        %v1712 = vadd.f32 %v1656, %v1708
        %s1713 = sld [smem:[#allocation4 + $0x65]]
        %v1714 = vstv %s1713
        %v1715 = vmul.f32 %v1714, %v1603
        %v1716 = vmul.f32 %v1714, %v1604
        %1719 = vrot.lane.b32.xlu0 %v1715, 126
        %v1720 = vpop.permute.xlu0 %1719
        %1721 = vrot.lane.b32.xlu0 %v1716, 126
        %v1722 = vpop.permute.xlu0 %1721
        %v1725 = vadd.f32 %v1669, %v1720
        %v1726 = vadd.f32 %v1670, %v1722
        %s1727 = sld [smem:[#allocation4 + $0x89]]
        %v1728 = vstv %s1727
        %v1729 = vmul.f32 %v1728, %v1603
        %v1730 = vmul.f32 %v1728, %v1604
        %1733 = vrot.lane.b32.xlu0 %v1729, 126
        %v1734 = vpop.permute.xlu0 %1733
        %1735 = vrot.lane.b32.xlu0 %v1730, 126
        %v1736 = vpop.permute.xlu0 %1735
        %v1739 = vadd.f32 %v1683, %v1734
        %v1740 = vadd.f32 %v1684, %v1736
        %v1741 = vld [vmem:[%s1602 + $0x1] sm:$0xff]
        %v1742 = vld [vmem:[%s1602 + $0x9] sm:$0xff]
        %s1743 = sld [smem:[#allocation4 + $0x1e]]
        %v1744 = vstv %s1743
        %v1745 = vmul.f32 %v1744, %v1741
        %v1746 = vmul.f32 %v1744, %v1742
        %v1747 = vadd.f32 %v1697, %v1745
        %v1748 = vadd.f32 %v1698, %v1746
        %s1749 = sld [smem:[#allocation4 + $0x42]]
        %v1750 = vstv %s1749
        %v1751 = vmul.f32 %v1750, %v1741
        %v1752 = vmul.f32 %v1750, %v1742
        %v1753 = vadd.f32 %v1711, %v1751
        %v1754 = vadd.f32 %v1712, %v1752
        %s1755 = sld [smem:[#allocation4 + $0x66]]
        %v1756 = vstv %s1755
        %v1757 = vmul.f32 %v1756, %v1741
        %v1758 = vmul.f32 %v1756, %v1742
        %v1759 = vadd.f32 %v1725, %v1757
        %v1760 = vadd.f32 %v1726, %v1758
        %s1761 = sld [smem:[#allocation4 + $0x8a]]
        %v1762 = vstv %s1761
        %v1763 = vmul.f32 %v1762, %v1741
        %v1764 = vmul.f32 %v1762, %v1742
        %v1765 = vadd.f32 %v1739, %v1763
        %v1766 = vadd.f32 %v1740, %v1764
        %s1767 = sld [smem:[#allocation4 + $0x1f]]
        %v1768 = vstv %s1767
        %v1769 = vmul.f32 %v1768, %v1741
        %v1770 = vmul.f32 %v1768, %v1742
        %1773 = vrot.lane.b32.xlu0 %v1769, 127
        %v1774 = vpop.permute.xlu0 %1773
        %1775 = vrot.lane.b32.xlu0 %v1770, 127
        %v1776 = vpop.permute.xlu0 %1775
        %v1779 = vadd.f32 %v1747, %v1774
        %v1780 = vadd.f32 %v1748, %v1776
        %s1781 = sld [smem:[#allocation4 + $0x43]]
        %v1782 = vstv %s1781
        %v1783 = vmul.f32 %v1782, %v1741
        %v1784 = vmul.f32 %v1782, %v1742
        %1787 = vrot.lane.b32.xlu0 %v1783, 127
        %v1788 = vpop.permute.xlu0 %1787
        %1789 = vrot.lane.b32.xlu0 %v1784, 127
        %v1790 = vpop.permute.xlu0 %1789
        %v1793 = vadd.f32 %v1753, %v1788
        %v1794 = vadd.f32 %v1754, %v1790
        %s1795 = sld [smem:[#allocation4 + $0x67]]
        %v1796 = vstv %s1795
        %v1797 = vmul.f32 %v1796, %v1741
        %v1798 = vmul.f32 %v1796, %v1742
        %1801 = vrot.lane.b32.xlu0 %v1797, 127
        %v1802 = vpop.permute.xlu0 %1801
        %1803 = vrot.lane.b32.xlu0 %v1798, 127
        %v1804 = vpop.permute.xlu0 %1803
        %v1807 = vadd.f32 %v1759, %v1802
        %v1808 = vadd.f32 %v1760, %v1804
        %s1809 = sld [smem:[#allocation4 + $0x8b]]
        %v1810 = vstv %s1809
        %v1811 = vmul.f32 %v1810, %v1741
        %v1812 = vmul.f32 %v1810, %v1742
        %1815 = vrot.lane.b32.xlu0 %v1811, 127
        %v1816 = vpop.permute.xlu0 %1815
        %1817 = vrot.lane.b32.xlu0 %v1812, 127
        %v1818 = vpop.permute.xlu0 %1817
        %v1821 = vadd.f32 %v1765, %v1816
        %v1822 = vadd.f32 %v1766, %v1818
        %s1823 = sld [smem:[#allocation4 + $0x20]]
        %v1824 = vstv %s1823
        %v1825 = vmul.f32 %v1824, %v1741
        %v1826 = vmul.f32 %v1824, %v1742
        %1829 = vrot.lane.b32.xlu0 %v1825, 126
        %v1830 = vpop.permute.xlu0 %1829
        %1831 = vrot.lane.b32.xlu0 %v1826, 126
        %v1832 = vpop.permute.xlu0 %1831
        %v1835 = vadd.f32 %v1779, %v1830
        %v1836 = vadd.f32 %v1780, %v1832
        %s1837 = sld [smem:[#allocation4 + $0x44]]
        %v1838 = vstv %s1837
        %v1839 = vmul.f32 %v1838, %v1741
        %v1840 = vmul.f32 %v1838, %v1742
        %1843 = vrot.lane.b32.xlu0 %v1839, 126
        %v1844 = vpop.permute.xlu0 %1843
        %1845 = vrot.lane.b32.xlu0 %v1840, 126
        %v1846 = vpop.permute.xlu0 %1845
        %v1849 = vadd.f32 %v1793, %v1844
        %v1850 = vadd.f32 %v1794, %v1846
        %s1851 = sld [smem:[#allocation4 + $0x68]]
        %v1852 = vstv %s1851
        %v1853 = vmul.f32 %v1852, %v1741
        %v1854 = vmul.f32 %v1852, %v1742
        %1857 = vrot.lane.b32.xlu0 %v1853, 126
        %v1858 = vpop.permute.xlu0 %1857
        %1859 = vrot.lane.b32.xlu0 %v1854, 126
        %v1860 = vpop.permute.xlu0 %1859
        %v1863 = vadd.f32 %v1807, %v1858
        %v1864 = vadd.f32 %v1808, %v1860
        %s1865 = sld [smem:[#allocation4 + $0x8c]]
        %v1866 = vstv %s1865
        %v1867 = vmul.f32 %v1866, %v1741
        %v1868 = vmul.f32 %v1866, %v1742
        %1871 = vrot.lane.b32.xlu0 %v1867, 126
        %v1872 = vpop.permute.xlu0 %1871
        %1873 = vrot.lane.b32.xlu0 %v1868, 126
        %v1874 = vpop.permute.xlu0 %1873
        %v1877 = vadd.f32 %v1821, %v1872
        %v1878 = vadd.f32 %v1822, %v1874
        %v1879 = vld [vmem:[%s1602 + $0x2] sm:$0xff]
        %v1880 = vld [vmem:[%s1602 + $0xa] sm:$0xff]
        %s1881 = sld [smem:[#allocation4 + $0x21]]
        %v1882 = vstv %s1881
        %v1883 = vmul.f32 %v1882, %v1879
        %v1884 = vmul.f32 %v1882, %v1880
        %v1885 = vadd.f32 %v1835, %v1883
        %v1886 = vadd.f32 %v1836, %v1884
        %s1887 = sld [smem:[#allocation4 + $0x45]]
        %v1888 = vstv %s1887
        %v1889 = vmul.f32 %v1888, %v1879
        %v1890 = vmul.f32 %v1888, %v1880
        %v1891 = vadd.f32 %v1849, %v1889
        %v1892 = vadd.f32 %v1850, %v1890
        %s1893 = sld [smem:[#allocation4 + $0x69]]
        %v1894 = vstv %s1893
        %v1895 = vmul.f32 %v1894, %v1879
        %v1896 = vmul.f32 %v1894, %v1880
        %v1897 = vadd.f32 %v1863, %v1895
        %v1898 = vadd.f32 %v1864, %v1896
        %s1899 = sld [smem:[#allocation4 + $0x8d]]
        %v1900 = vstv %s1899
        %v1901 = vmul.f32 %v1900, %v1879
        %v1902 = vmul.f32 %v1900, %v1880
        %v1903 = vadd.f32 %v1877, %v1901
        %v1904 = vadd.f32 %v1878, %v1902
        %s1905 = sld [smem:[#allocation4 + $0x22]]
        %v1906 = vstv %s1905
        %v1907 = vmul.f32 %v1906, %v1879
        %v1908 = vmul.f32 %v1906, %v1880
        %1911 = vrot.lane.b32.xlu0 %v1907, 127
        %v1912 = vpop.permute.xlu0 %1911
        %1913 = vrot.lane.b32.xlu0 %v1908, 127
        %v1914 = vpop.permute.xlu0 %1913
        %v1917 = vadd.f32 %v1885, %v1912
        %v1918 = vadd.f32 %v1886, %v1914
        %s1919 = sld [smem:[#allocation4 + $0x46]]
        %v1920 = vstv %s1919
        %v1921 = vmul.f32 %v1920, %v1879
        %v1922 = vmul.f32 %v1920, %v1880
        %1925 = vrot.lane.b32.xlu0 %v1921, 127
        %v1926 = vpop.permute.xlu0 %1925
        %1927 = vrot.lane.b32.xlu0 %v1922, 127
        %v1928 = vpop.permute.xlu0 %1927
        %v1931 = vadd.f32 %v1891, %v1926
        %v1932 = vadd.f32 %v1892, %v1928
        %s1933 = sld [smem:[#allocation4 + $0x6a]]
        %v1934 = vstv %s1933
        %v1935 = vmul.f32 %v1934, %v1879
        %v1936 = vmul.f32 %v1934, %v1880
        %1939 = vrot.lane.b32.xlu0 %v1935, 127
        %v1940 = vpop.permute.xlu0 %1939
        %1941 = vrot.lane.b32.xlu0 %v1936, 127
        %v1942 = vpop.permute.xlu0 %1941
        %v1945 = vadd.f32 %v1897, %v1940
        %v1946 = vadd.f32 %v1898, %v1942
        %s1947 = sld [smem:[#allocation4 + $0x8e]]
        %v1948 = vstv %s1947
        %v1949 = vmul.f32 %v1948, %v1879
        %v1950 = vmul.f32 %v1948, %v1880
        %1953 = vrot.lane.b32.xlu0 %v1949, 127
        %v1954 = vpop.permute.xlu0 %1953
        %1955 = vrot.lane.b32.xlu0 %v1950, 127
        %v1956 = vpop.permute.xlu0 %1955
        %v1959 = vadd.f32 %v1903, %v1954
        %v1960 = vadd.f32 %v1904, %v1956
        %s1961 = sld [smem:[#allocation4 + $0x23]]
        %v1962 = vstv %s1961
        %v1963 = vmul.f32 %v1962, %v1879
        %v1964 = vmul.f32 %v1962, %v1880
        %1967 = vrot.lane.b32.xlu0 %v1963, 126
        %v1968 = vpop.permute.xlu0 %1967
        %1969 = vrot.lane.b32.xlu0 %v1964, 126
        %v1970 = vpop.permute.xlu0 %1969
        %v1973 = vadd.f32 %v1917, %v1968
        %v1974 = vadd.f32 %v1918, %v1970
        %s1975 = sld [smem:[#allocation4 + $0x47]]
        %v1976 = vstv %s1975
        %v1977 = vmul.f32 %v1976, %v1879
        %v1978 = vmul.f32 %v1976, %v1880
        %1981 = vrot.lane.b32.xlu0 %v1977, 126
        %v1982 = vpop.permute.xlu0 %1981
        %1983 = vrot.lane.b32.xlu0 %v1978, 126
        %v1984 = vpop.permute.xlu0 %1983
        %v1987 = vadd.f32 %v1931, %v1982
        %v1988 = vadd.f32 %v1932, %v1984
        %s1989 = sld [smem:[#allocation4 + $0x6b]]
        %v1990 = vstv %s1989
        %v1991 = vmul.f32 %v1990, %v1879
        %v1992 = vmul.f32 %v1990, %v1880
        %1995 = vrot.lane.b32.xlu0 %v1991, 126
        %v1996 = vpop.permute.xlu0 %1995
        %1997 = vrot.lane.b32.xlu0 %v1992, 126
        %v1998 = vpop.permute.xlu0 %1997
        %v2001 = vadd.f32 %v1945, %v1996
        %v2002 = vadd.f32 %v1946, %v1998
        %s2003 = sld [smem:[#allocation4 + $0x8f]]
        %v2004 = vstv %s2003
        %v2005 = vmul.f32 %v2004, %v1879
        %v2006 = vmul.f32 %v2004, %v1880
        %2009 = vrot.lane.b32.xlu0 %v2005, 126
        %v2010 = vpop.permute.xlu0 %2009
        %2011 = vrot.lane.b32.xlu0 %v2006, 126
        %v2012 = vpop.permute.xlu0 %2011
        %v2015 = vadd.f32 %v1959, %v2010
        %v2016 = vadd.f32 %v1960, %v2012
        %vm2017 = vcmp.ge.f32.partialorder %v1973, 0.0
        %vm2018 = vcmp.ge.f32.partialorder %v1974, 0.0
        %v2019 = vmul.f32 %v1973, 0.1
        %v2020 = vmul.f32 %v1974, 0.1
        %v2021 = vsel %vm2017, %v1973, %v2019
        %v2022 = vsel %vm2018, %v1974, %v2020
        %2025 = vrot.lane.b32.xlu0 %v2021, 1
        %v2026 = vpop.permute.xlu0 %2025
        %2027 = vrot.lane.b32.xlu0 %v2022, 1
        %v2028 = vpop.permute.xlu0 %2027
        %2031 = vst.msk [vmem:[#allocation3 + $0x1] sm:$0xff] %vm341, %v2026
        %2032 = vst.msk [vmem:[#allocation3 + $0x9] sm:$0xff] %vm341, %v2028
        %vm2033 = vcmp.ge.f32.partialorder %v1987, 0.0
        %vm2034 = vcmp.ge.f32.partialorder %v1988, 0.0
        %v2035 = vmul.f32 %v1987, 0.1
        %v2036 = vmul.f32 %v1988, 0.1
        %v2037 = vsel %vm2033, %v1987, %v2035
        %v2038 = vsel %vm2034, %v1988, %v2036
        %2041 = vrot.lane.b32.xlu0 %v2037, 1
        %v2042 = vpop.permute.xlu0 %2041
        %2043 = vrot.lane.b32.xlu0 %v2038, 1
        %v2044 = vpop.permute.xlu0 %2043
        %s2047 = scalar_lea.vmem [#allocation3], 24
        %2048 = vst.msk [vmem:[%s2047 + $0x1] sm:$0xff] %vm341, %v2042
        %2049 = vst.msk [vmem:[%s2047 + $0x9] sm:$0xff] %vm341, %v2044
        %vm2050 = vcmp.ge.f32.partialorder %v2001, 0.0
        %vm2051 = vcmp.ge.f32.partialorder %v2002, 0.0
        %v2052 = vmul.f32 %v2001, 0.1
        %v2053 = vmul.f32 %v2002, 0.1
        %v2054 = vsel %vm2050, %v2001, %v2052
        %v2055 = vsel %vm2051, %v2002, %v2053
        %2058 = vrot.lane.b32.xlu0 %v2054, 1
        %v2059 = vpop.permute.xlu0 %2058
        %2060 = vrot.lane.b32.xlu0 %v2055, 1
        %v2061 = vpop.permute.xlu0 %2060
        %s2064 = scalar_lea.vmem [#allocation3], 48
        %2065 = vst.msk [vmem:[%s2064 + $0x1] sm:$0xff] %vm341, %v2059
        %2066 = vst.msk [vmem:[%s2064 + $0x9] sm:$0xff] %vm341, %v2061
        %vm2067 = vcmp.ge.f32.partialorder %v2015, 0.0
        %vm2068 = vcmp.ge.f32.partialorder %v2016, 0.0
        %v2069 = vmul.f32 %v2015, 0.1
        %v2070 = vmul.f32 %v2016, 0.1
        %v2071 = vsel %vm2067, %v2015, %v2069
        %v2072 = vsel %vm2068, %v2016, %v2070
        %2075 = vrot.lane.b32.xlu0 %v2071, 1
        %v2076 = vpop.permute.xlu0 %2075
        %2077 = vrot.lane.b32.xlu0 %v2072, 1
        %v2078 = vpop.permute.xlu0 %2077
        %s2081 = scalar_lea.vmem [#allocation3], 72
        %2082 = vst.msk [vmem:[%s2081 + $0x1] sm:$0xff] %vm341, %v2076
        %2083 = vst.msk [vmem:[%s2081 + $0x9] sm:$0xff] %vm341, %v2078
        %s2084 = sld [smem:[#allocation10]]
        %v2085 = vstv %s2084
        %s2086 = sld [smem:[#allocation10 + $0x1]]
        %v2087 = vstv %s2086
        %s2088 = sld [smem:[#allocation10 + $0x2]]
        %v2089 = vstv %s2088
        %s2090 = sld [smem:[#allocation10 + $0x3]]
        %v2091 = vstv %s2090
        %v2092 = vld [vmem:[#allocation3] sm:$0xff]
        %v2093 = vld [vmem:[#allocation3 + $0x8] sm:$0xff]
        %s2094 = sld [smem:[#allocation9]]
        %v2095 = vstv %s2094
        %v2096 = vmul.f32 %v2095, %v2092
        %v2097 = vmul.f32 %v2095, %v2093
        %v2098 = vadd.f32 %v2085, %v2096
        %v2099 = vadd.f32 %v2085, %v2097
        %s2100 = sld [smem:[#allocation9 + $0x24]]
        %v2101 = vstv %s2100
        %v2102 = vmul.f32 %v2101, %v2092
        %v2103 = vmul.f32 %v2101, %v2093
        %v2104 = vadd.f32 %v2087, %v2102
        %v2105 = vadd.f32 %v2087, %v2103
        %s2106 = sld [smem:[#allocation9 + $0x48]]
        %v2107 = vstv %s2106
        %v2108 = vmul.f32 %v2107, %v2092
        %v2109 = vmul.f32 %v2107, %v2093
        %v2110 = vadd.f32 %v2089, %v2108
        %v2111 = vadd.f32 %v2089, %v2109
        %s2112 = sld [smem:[#allocation9 + $0x6c]]
        %v2113 = vstv %s2112
        %v2114 = vmul.f32 %v2113, %v2092
        %v2115 = vmul.f32 %v2113, %v2093
        %v2116 = vadd.f32 %v2091, %v2114
        %v2117 = vadd.f32 %v2091, %v2115
        %s2118 = sld [smem:[#allocation9 + $0x1]]
        %v2119 = vstv %s2118
        %v2120 = vmul.f32 %v2119, %v2092
        %v2121 = vmul.f32 %v2119, %v2093
        %2124 = vrot.lane.b32.xlu0 %v2120, 127
        %v2125 = vpop.permute.xlu0 %2124
        %2126 = vrot.lane.b32.xlu0 %v2121, 127
        %v2127 = vpop.permute.xlu0 %2126
        %v2130 = vadd.f32 %v2098, %v2125
        %v2131 = vadd.f32 %v2099, %v2127
        %s2132 = sld [smem:[#allocation9 + $0x25]]
        %v2133 = vstv %s2132
        %v2134 = vmul.f32 %v2133, %v2092
        %v2135 = vmul.f32 %v2133, %v2093
        %2138 = vrot.lane.b32.xlu0 %v2134, 127
        %v2139 = vpop.permute.xlu0 %2138
        %2140 = vrot.lane.b32.xlu0 %v2135, 127
        %v2141 = vpop.permute.xlu0 %2140
        %v2144 = vadd.f32 %v2104, %v2139
        %v2145 = vadd.f32 %v2105, %v2141
        %s2146 = sld [smem:[#allocation9 + $0x49]]
        %v2147 = vstv %s2146
        %v2148 = vmul.f32 %v2147, %v2092
        %v2149 = vmul.f32 %v2147, %v2093
        %2152 = vrot.lane.b32.xlu0 %v2148, 127
        %v2153 = vpop.permute.xlu0 %2152
        %2154 = vrot.lane.b32.xlu0 %v2149, 127
        %v2155 = vpop.permute.xlu0 %2154
        %v2158 = vadd.f32 %v2110, %v2153
        %v2159 = vadd.f32 %v2111, %v2155
        %s2160 = sld [smem:[#allocation9 + $0x6d]]
        %v2161 = vstv %s2160
        %v2162 = vmul.f32 %v2161, %v2092
        %v2163 = vmul.f32 %v2161, %v2093
        %2166 = vrot.lane.b32.xlu0 %v2162, 127
        %v2167 = vpop.permute.xlu0 %2166
        %2168 = vrot.lane.b32.xlu0 %v2163, 127
        %v2169 = vpop.permute.xlu0 %2168
        %v2172 = vadd.f32 %v2116, %v2167
        %v2173 = vadd.f32 %v2117, %v2169
        %s2174 = sld [smem:[#allocation9 + $0x2]]
        %v2175 = vstv %s2174
        %v2176 = vmul.f32 %v2175, %v2092
        %v2177 = vmul.f32 %v2175, %v2093
        %2180 = vrot.lane.b32.xlu0 %v2176, 126
        %v2181 = vpop.permute.xlu0 %2180
        %2182 = vrot.lane.b32.xlu0 %v2177, 126
        %v2183 = vpop.permute.xlu0 %2182
        %v2186 = vadd.f32 %v2130, %v2181
        %v2187 = vadd.f32 %v2131, %v2183
        %s2188 = sld [smem:[#allocation9 + $0x26]]
        %v2189 = vstv %s2188
        %v2190 = vmul.f32 %v2189, %v2092
        %v2191 = vmul.f32 %v2189, %v2093
        %2194 = vrot.lane.b32.xlu0 %v2190, 126
        %v2195 = vpop.permute.xlu0 %2194
        %2196 = vrot.lane.b32.xlu0 %v2191, 126
        %v2197 = vpop.permute.xlu0 %2196
        %v2200 = vadd.f32 %v2144, %v2195
        %v2201 = vadd.f32 %v2145, %v2197
        %s2202 = sld [smem:[#allocation9 + $0x4a]]
        %v2203 = vstv %s2202
        %v2204 = vmul.f32 %v2203, %v2092
        %v2205 = vmul.f32 %v2203, %v2093
        %2208 = vrot.lane.b32.xlu0 %v2204, 126
        %v2209 = vpop.permute.xlu0 %2208
        %2210 = vrot.lane.b32.xlu0 %v2205, 126
        %v2211 = vpop.permute.xlu0 %2210
        %v2214 = vadd.f32 %v2158, %v2209
        %v2215 = vadd.f32 %v2159, %v2211
        %s2216 = sld [smem:[#allocation9 + $0x6e]]
        %v2217 = vstv %s2216
        %v2218 = vmul.f32 %v2217, %v2092
        %v2219 = vmul.f32 %v2217, %v2093
        %2222 = vrot.lane.b32.xlu0 %v2218, 126
        %v2223 = vpop.permute.xlu0 %2222
        %2224 = vrot.lane.b32.xlu0 %v2219, 126
        %v2225 = vpop.permute.xlu0 %2224
        %v2228 = vadd.f32 %v2172, %v2223
        %v2229 = vadd.f32 %v2173, %v2225
        %v2230 = vld [vmem:[#allocation3 + $0x1] sm:$0xff]
        %v2231 = vld [vmem:[#allocation3 + $0x9] sm:$0xff]
        %s2232 = sld [smem:[#allocation9 + $0x3]]
        %v2233 = vstv %s2232
        %v2234 = vmul.f32 %v2233, %v2230
        %v2235 = vmul.f32 %v2233, %v2231
        %v2236 = vadd.f32 %v2186, %v2234
        %v2237 = vadd.f32 %v2187, %v2235
        %s2238 = sld [smem:[#allocation9 + $0x27]]
        %v2239 = vstv %s2238
        %v2240 = vmul.f32 %v2239, %v2230
        %v2241 = vmul.f32 %v2239, %v2231
        %v2242 = vadd.f32 %v2200, %v2240
        %v2243 = vadd.f32 %v2201, %v2241
        %s2244 = sld [smem:[#allocation9 + $0x4b]]
        %v2245 = vstv %s2244
        %v2246 = vmul.f32 %v2245, %v2230
        %v2247 = vmul.f32 %v2245, %v2231
        %v2248 = vadd.f32 %v2214, %v2246
        %v2249 = vadd.f32 %v2215, %v2247
        %s2250 = sld [smem:[#allocation9 + $0x6f]]
        %v2251 = vstv %s2250
        %v2252 = vmul.f32 %v2251, %v2230
        %v2253 = vmul.f32 %v2251, %v2231
        %v2254 = vadd.f32 %v2228, %v2252
        %v2255 = vadd.f32 %v2229, %v2253
        %s2256 = sld [smem:[#allocation9 + $0x4]]
        %v2257 = vstv %s2256
        %v2258 = vmul.f32 %v2257, %v2230
        %v2259 = vmul.f32 %v2257, %v2231
        %2262 = vrot.lane.b32.xlu0 %v2258, 127
        %v2263 = vpop.permute.xlu0 %2262
        %2264 = vrot.lane.b32.xlu0 %v2259, 127
        %v2265 = vpop.permute.xlu0 %2264
        %v2268 = vadd.f32 %v2236, %v2263
        %v2269 = vadd.f32 %v2237, %v2265
        %s2270 = sld [smem:[#allocation9 + $0x28]]
        %v2271 = vstv %s2270
        %v2272 = vmul.f32 %v2271, %v2230
        %v2273 = vmul.f32 %v2271, %v2231
        %2276 = vrot.lane.b32.xlu0 %v2272, 127
        %v2277 = vpop.permute.xlu0 %2276
        %2278 = vrot.lane.b32.xlu0 %v2273, 127
        %v2279 = vpop.permute.xlu0 %2278
        %v2282 = vadd.f32 %v2242, %v2277
        %v2283 = vadd.f32 %v2243, %v2279
        %s2284 = sld [smem:[#allocation9 + $0x4c]]
        %v2285 = vstv %s2284
        %v2286 = vmul.f32 %v2285, %v2230
        %v2287 = vmul.f32 %v2285, %v2231
        %2290 = vrot.lane.b32.xlu0 %v2286, 127
        %v2291 = vpop.permute.xlu0 %2290
        %2292 = vrot.lane.b32.xlu0 %v2287, 127
        %v2293 = vpop.permute.xlu0 %2292
        %v2296 = vadd.f32 %v2248, %v2291
        %v2297 = vadd.f32 %v2249, %v2293
        %s2298 = sld [smem:[#allocation9 + $0x70]]
        %v2299 = vstv %s2298
        %v2300 = vmul.f32 %v2299, %v2230
        %v2301 = vmul.f32 %v2299, %v2231
        %2304 = vrot.lane.b32.xlu0 %v2300, 127
        %v2305 = vpop.permute.xlu0 %2304
        %2306 = vrot.lane.b32.xlu0 %v2301, 127
        %v2307 = vpop.permute.xlu0 %2306
        %v2310 = vadd.f32 %v2254, %v2305
        %v2311 = vadd.f32 %v2255, %v2307
        %s2312 = sld [smem:[#allocation9 + $0x5]]
        %v2313 = vstv %s2312
        %v2314 = vmul.f32 %v2313, %v2230
        %v2315 = vmul.f32 %v2313, %v2231
        %2318 = vrot.lane.b32.xlu0 %v2314, 126
        %v2319 = vpop.permute.xlu0 %2318
        %2320 = vrot.lane.b32.xlu0 %v2315, 126
        %v2321 = vpop.permute.xlu0 %2320
        %v2324 = vadd.f32 %v2268, %v2319
        %v2325 = vadd.f32 %v2269, %v2321
        %s2326 = sld [smem:[#allocation9 + $0x29]]
        %v2327 = vstv %s2326
        %v2328 = vmul.f32 %v2327, %v2230
        %v2329 = vmul.f32 %v2327, %v2231
        %2332 = vrot.lane.b32.xlu0 %v2328, 126
        %v2333 = vpop.permute.xlu0 %2332
        %2334 = vrot.lane.b32.xlu0 %v2329, 126
        %v2335 = vpop.permute.xlu0 %2334
        %v2338 = vadd.f32 %v2282, %v2333
        %v2339 = vadd.f32 %v2283, %v2335
        %s2340 = sld [smem:[#allocation9 + $0x4d]]
        %v2341 = vstv %s2340
        %v2342 = vmul.f32 %v2341, %v2230
        %v2343 = vmul.f32 %v2341, %v2231
        %2346 = vrot.lane.b32.xlu0 %v2342, 126
        %v2347 = vpop.permute.xlu0 %2346
        %2348 = vrot.lane.b32.xlu0 %v2343, 126
        %v2349 = vpop.permute.xlu0 %2348
        %v2352 = vadd.f32 %v2296, %v2347
        %v2353 = vadd.f32 %v2297, %v2349
        %s2354 = sld [smem:[#allocation9 + $0x71]]
        %v2355 = vstv %s2354
        %v2356 = vmul.f32 %v2355, %v2230
        %v2357 = vmul.f32 %v2355, %v2231
        %2360 = vrot.lane.b32.xlu0 %v2356, 126
        %v2361 = vpop.permute.xlu0 %2360
        %2362 = vrot.lane.b32.xlu0 %v2357, 126
        %v2363 = vpop.permute.xlu0 %2362
        %v2366 = vadd.f32 %v2310, %v2361
        %v2367 = vadd.f32 %v2311, %v2363
        %v2368 = vld [vmem:[#allocation3 + $0x2] sm:$0xff]
        %v2369 = vld [vmem:[#allocation3 + $0xa] sm:$0xff]
        %s2370 = sld [smem:[#allocation9 + $0x6]]
        %v2371 = vstv %s2370
        %v2372 = vmul.f32 %v2371, %v2368
        %v2373 = vmul.f32 %v2371, %v2369
        %v2374 = vadd.f32 %v2324, %v2372
        %v2375 = vadd.f32 %v2325, %v2373
        %s2376 = sld [smem:[#allocation9 + $0x2a]]
        %v2377 = vstv %s2376
        %v2378 = vmul.f32 %v2377, %v2368
        %v2379 = vmul.f32 %v2377, %v2369
        %v2380 = vadd.f32 %v2338, %v2378
        %v2381 = vadd.f32 %v2339, %v2379
        %s2382 = sld [smem:[#allocation9 + $0x4e]]
        %v2383 = vstv %s2382
        %v2384 = vmul.f32 %v2383, %v2368
        %v2385 = vmul.f32 %v2383, %v2369
        %v2386 = vadd.f32 %v2352, %v2384
        %v2387 = vadd.f32 %v2353, %v2385
        %s2388 = sld [smem:[#allocation9 + $0x72]]
        %v2389 = vstv %s2388
        %v2390 = vmul.f32 %v2389, %v2368
        %v2391 = vmul.f32 %v2389, %v2369
        %v2392 = vadd.f32 %v2366, %v2390
        %v2393 = vadd.f32 %v2367, %v2391
        %s2394 = sld [smem:[#allocation9 + $0x7]]
        %v2395 = vstv %s2394
        %v2396 = vmul.f32 %v2395, %v2368
        %v2397 = vmul.f32 %v2395, %v2369
        %2400 = vrot.lane.b32.xlu0 %v2396, 127
        %v2401 = vpop.permute.xlu0 %2400
        %2402 = vrot.lane.b32.xlu0 %v2397, 127
        %v2403 = vpop.permute.xlu0 %2402
        %v2406 = vadd.f32 %v2374, %v2401
        %v2407 = vadd.f32 %v2375, %v2403
        %s2408 = sld [smem:[#allocation9 + $0x2b]]
        %v2409 = vstv %s2408
        %v2410 = vmul.f32 %v2409, %v2368
        %v2411 = vmul.f32 %v2409, %v2369
        %2414 = vrot.lane.b32.xlu0 %v2410, 127
        %v2415 = vpop.permute.xlu0 %2414
        %2416 = vrot.lane.b32.xlu0 %v2411, 127
        %v2417 = vpop.permute.xlu0 %2416
        %v2420 = vadd.f32 %v2380, %v2415
        %v2421 = vadd.f32 %v2381, %v2417
        %s2422 = sld [smem:[#allocation9 + $0x4f]]
        %v2423 = vstv %s2422
        %v2424 = vmul.f32 %v2423, %v2368
        %v2425 = vmul.f32 %v2423, %v2369
        %2428 = vrot.lane.b32.xlu0 %v2424, 127
        %v2429 = vpop.permute.xlu0 %2428
        %2430 = vrot.lane.b32.xlu0 %v2425, 127
        %v2431 = vpop.permute.xlu0 %2430
        %v2434 = vadd.f32 %v2386, %v2429
        %v2435 = vadd.f32 %v2387, %v2431
        %s2436 = sld [smem:[#allocation9 + $0x73]]
        %v2437 = vstv %s2436
        %v2438 = vmul.f32 %v2437, %v2368
        %v2439 = vmul.f32 %v2437, %v2369
        %2442 = vrot.lane.b32.xlu0 %v2438, 127
        %v2443 = vpop.permute.xlu0 %2442
        %2444 = vrot.lane.b32.xlu0 %v2439, 127
        %v2445 = vpop.permute.xlu0 %2444
        %v2448 = vadd.f32 %v2392, %v2443
        %v2449 = vadd.f32 %v2393, %v2445
        %s2450 = sld [smem:[#allocation9 + $0x8]]
        %v2451 = vstv %s2450
        %v2452 = vmul.f32 %v2451, %v2368
        %v2453 = vmul.f32 %v2451, %v2369
        %2456 = vrot.lane.b32.xlu0 %v2452, 126
        %v2457 = vpop.permute.xlu0 %2456
        %2458 = vrot.lane.b32.xlu0 %v2453, 126
        %v2459 = vpop.permute.xlu0 %2458
        %v2462 = vadd.f32 %v2406, %v2457
        %v2463 = vadd.f32 %v2407, %v2459
        %s2464 = sld [smem:[#allocation9 + $0x2c]]
        %v2465 = vstv %s2464
        %v2466 = vmul.f32 %v2465, %v2368
        %v2467 = vmul.f32 %v2465, %v2369
        %2470 = vrot.lane.b32.xlu0 %v2466, 126
        %v2471 = vpop.permute.xlu0 %2470
        %2472 = vrot.lane.b32.xlu0 %v2467, 126
        %v2473 = vpop.permute.xlu0 %2472
        %v2476 = vadd.f32 %v2420, %v2471
        %v2477 = vadd.f32 %v2421, %v2473
        %s2478 = sld [smem:[#allocation9 + $0x50]]
        %v2479 = vstv %s2478
        %v2480 = vmul.f32 %v2479, %v2368
        %v2481 = vmul.f32 %v2479, %v2369
        %2484 = vrot.lane.b32.xlu0 %v2480, 126
        %v2485 = vpop.permute.xlu0 %2484
        %2486 = vrot.lane.b32.xlu0 %v2481, 126
        %v2487 = vpop.permute.xlu0 %2486
        %v2490 = vadd.f32 %v2434, %v2485
        %v2491 = vadd.f32 %v2435, %v2487
        %s2492 = sld [smem:[#allocation9 + $0x74]]
        %v2493 = vstv %s2492
        %v2494 = vmul.f32 %v2493, %v2368
        %v2495 = vmul.f32 %v2493, %v2369
        %2498 = vrot.lane.b32.xlu0 %v2494, 126
        %v2499 = vpop.permute.xlu0 %2498
        %2500 = vrot.lane.b32.xlu0 %v2495, 126
        %v2501 = vpop.permute.xlu0 %2500
        %v2504 = vadd.f32 %v2448, %v2499
        %v2505 = vadd.f32 %v2449, %v2501
        %v2506 = vld [vmem:[%s2047] sm:$0xff]
        %v2507 = vld [vmem:[%s2047 + $0x8] sm:$0xff]
        %s2508 = sld [smem:[#allocation9 + $0x9]]
        %v2509 = vstv %s2508
        %v2510 = vmul.f32 %v2509, %v2506
        %v2511 = vmul.f32 %v2509, %v2507
        %v2512 = vadd.f32 %v2462, %v2510
        %v2513 = vadd.f32 %v2463, %v2511
        %s2514 = sld [smem:[#allocation9 + $0x2d]]
        %v2515 = vstv %s2514
        %v2516 = vmul.f32 %v2515, %v2506
        %v2517 = vmul.f32 %v2515, %v2507
        %v2518 = vadd.f32 %v2476, %v2516
        %v2519 = vadd.f32 %v2477, %v2517
        %s2520 = sld [smem:[#allocation9 + $0x51]]
        %v2521 = vstv %s2520
        %v2522 = vmul.f32 %v2521, %v2506
        %v2523 = vmul.f32 %v2521, %v2507
        %v2524 = vadd.f32 %v2490, %v2522
        %v2525 = vadd.f32 %v2491, %v2523
        %s2526 = sld [smem:[#allocation9 + $0x75]]
        %v2527 = vstv %s2526
        %v2528 = vmul.f32 %v2527, %v2506
        %v2529 = vmul.f32 %v2527, %v2507
        %v2530 = vadd.f32 %v2504, %v2528
        %v2531 = vadd.f32 %v2505, %v2529
        %s2532 = sld [smem:[#allocation9 + $0xa]]
        %v2533 = vstv %s2532
        %v2534 = vmul.f32 %v2533, %v2506
        %v2535 = vmul.f32 %v2533, %v2507
        %2538 = vrot.lane.b32.xlu0 %v2534, 127
        %v2539 = vpop.permute.xlu0 %2538
        %2540 = vrot.lane.b32.xlu0 %v2535, 127
        %v2541 = vpop.permute.xlu0 %2540
        %v2544 = vadd.f32 %v2512, %v2539
        %v2545 = vadd.f32 %v2513, %v2541
        %s2546 = sld [smem:[#allocation9 + $0x2e]]
        %v2547 = vstv %s2546
        %v2548 = vmul.f32 %v2547, %v2506
        %v2549 = vmul.f32 %v2547, %v2507
        %2552 = vrot.lane.b32.xlu0 %v2548, 127
        %v2553 = vpop.permute.xlu0 %2552
        %2554 = vrot.lane.b32.xlu0 %v2549, 127
        %v2555 = vpop.permute.xlu0 %2554
        %v2558 = vadd.f32 %v2518, %v2553
        %v2559 = vadd.f32 %v2519, %v2555
        %s2560 = sld [smem:[#allocation9 + $0x52]]
        %v2561 = vstv %s2560
        %v2562 = vmul.f32 %v2561, %v2506
        %v2563 = vmul.f32 %v2561, %v2507
        %2566 = vrot.lane.b32.xlu0 %v2562, 127
        %v2567 = vpop.permute.xlu0 %2566
        %2568 = vrot.lane.b32.xlu0 %v2563, 127
        %v2569 = vpop.permute.xlu0 %2568
        %v2572 = vadd.f32 %v2524, %v2567
        %v2573 = vadd.f32 %v2525, %v2569
        %s2574 = sld [smem:[#allocation9 + $0x76]]
        %v2575 = vstv %s2574
        %v2576 = vmul.f32 %v2575, %v2506
        %v2577 = vmul.f32 %v2575, %v2507
        %2580 = vrot.lane.b32.xlu0 %v2576, 127
        %v2581 = vpop.permute.xlu0 %2580
        %2582 = vrot.lane.b32.xlu0 %v2577, 127
        %v2583 = vpop.permute.xlu0 %2582
        %v2586 = vadd.f32 %v2530, %v2581
        %v2587 = vadd.f32 %v2531, %v2583
        %s2588 = sld [smem:[#allocation9 + $0xb]]
        %v2589 = vstv %s2588
        %v2590 = vmul.f32 %v2589, %v2506
        %v2591 = vmul.f32 %v2589, %v2507
        %2594 = vrot.lane.b32.xlu0 %v2590, 126
        %v2595 = vpop.permute.xlu0 %2594
        %2596 = vrot.lane.b32.xlu0 %v2591, 126
        %v2597 = vpop.permute.xlu0 %2596
        %v2600 = vadd.f32 %v2544, %v2595
        %v2601 = vadd.f32 %v2545, %v2597
        %s2602 = sld [smem:[#allocation9 + $0x2f]]
        %v2603 = vstv %s2602
        %v2604 = vmul.f32 %v2603, %v2506
        %v2605 = vmul.f32 %v2603, %v2507
        %2608 = vrot.lane.b32.xlu0 %v2604, 126
        %v2609 = vpop.permute.xlu0 %2608
        %2610 = vrot.lane.b32.xlu0 %v2605, 126
        %v2611 = vpop.permute.xlu0 %2610
        %v2614 = vadd.f32 %v2558, %v2609
        %v2615 = vadd.f32 %v2559, %v2611
        %s2616 = sld [smem:[#allocation9 + $0x53]]
        %v2617 = vstv %s2616
        %v2618 = vmul.f32 %v2617, %v2506
        %v2619 = vmul.f32 %v2617, %v2507
        %2622 = vrot.lane.b32.xlu0 %v2618, 126
        %v2623 = vpop.permute.xlu0 %2622
        %2624 = vrot.lane.b32.xlu0 %v2619, 126
        %v2625 = vpop.permute.xlu0 %2624
        %v2628 = vadd.f32 %v2572, %v2623
        %v2629 = vadd.f32 %v2573, %v2625
        %s2630 = sld [smem:[#allocation9 + $0x77]]
        %v2631 = vstv %s2630
        %v2632 = vmul.f32 %v2631, %v2506
        %v2633 = vmul.f32 %v2631, %v2507
        %2636 = vrot.lane.b32.xlu0 %v2632, 126
        %v2637 = vpop.permute.xlu0 %2636
        %2638 = vrot.lane.b32.xlu0 %v2633, 126
        %v2639 = vpop.permute.xlu0 %2638
        %v2642 = vadd.f32 %v2586, %v2637
        %v2643 = vadd.f32 %v2587, %v2639
        %v2644 = vld [vmem:[%s2047 + $0x1] sm:$0xff]
        %v2645 = vld [vmem:[%s2047 + $0x9] sm:$0xff]
        %s2646 = sld [smem:[#allocation9 + $0xc]]
        %v2647 = vstv %s2646
        %v2648 = vmul.f32 %v2647, %v2644
        %v2649 = vmul.f32 %v2647, %v2645
        %v2650 = vadd.f32 %v2600, %v2648
        %v2651 = vadd.f32 %v2601, %v2649
        %s2652 = sld [smem:[#allocation9 + $0x30]]
        %v2653 = vstv %s2652
        %v2654 = vmul.f32 %v2653, %v2644
        %v2655 = vmul.f32 %v2653, %v2645
        %v2656 = vadd.f32 %v2614, %v2654
        %v2657 = vadd.f32 %v2615, %v2655
        %s2658 = sld [smem:[#allocation9 + $0x54]]
        %v2659 = vstv %s2658
        %v2660 = vmul.f32 %v2659, %v2644
        %v2661 = vmul.f32 %v2659, %v2645
        %v2662 = vadd.f32 %v2628, %v2660
        %v2663 = vadd.f32 %v2629, %v2661
        %s2664 = sld [smem:[#allocation9 + $0x78]]
        %v2665 = vstv %s2664
        %v2666 = vmul.f32 %v2665, %v2644
        %v2667 = vmul.f32 %v2665, %v2645
        %v2668 = vadd.f32 %v2642, %v2666
        %v2669 = vadd.f32 %v2643, %v2667
        %s2670 = sld [smem:[#allocation9 + $0xd]]
        %v2671 = vstv %s2670
        %v2672 = vmul.f32 %v2671, %v2644
        %v2673 = vmul.f32 %v2671, %v2645
        %2676 = vrot.lane.b32.xlu0 %v2672, 127
        %v2677 = vpop.permute.xlu0 %2676
        %2678 = vrot.lane.b32.xlu0 %v2673, 127
        %v2679 = vpop.permute.xlu0 %2678
        %v2682 = vadd.f32 %v2650, %v2677
        %v2683 = vadd.f32 %v2651, %v2679
        %s2684 = sld [smem:[#allocation9 + $0x31]]
        %v2685 = vstv %s2684
        %v2686 = vmul.f32 %v2685, %v2644
        %v2687 = vmul.f32 %v2685, %v2645
        %2690 = vrot.lane.b32.xlu0 %v2686, 127
        %v2691 = vpop.permute.xlu0 %2690
        %2692 = vrot.lane.b32.xlu0 %v2687, 127
        %v2693 = vpop.permute.xlu0 %2692
        %v2696 = vadd.f32 %v2656, %v2691
        %v2697 = vadd.f32 %v2657, %v2693
        %s2698 = sld [smem:[#allocation9 + $0x55]]
        %v2699 = vstv %s2698
        %v2700 = vmul.f32 %v2699, %v2644
        %v2701 = vmul.f32 %v2699, %v2645
        %2704 = vrot.lane.b32.xlu0 %v2700, 127
        %v2705 = vpop.permute.xlu0 %2704
        %2706 = vrot.lane.b32.xlu0 %v2701, 127
        %v2707 = vpop.permute.xlu0 %2706
        %v2710 = vadd.f32 %v2662, %v2705
        %v2711 = vadd.f32 %v2663, %v2707
        %s2712 = sld [smem:[#allocation9 + $0x79]]
        %v2713 = vstv %s2712
        %v2714 = vmul.f32 %v2713, %v2644
        %v2715 = vmul.f32 %v2713, %v2645
        %2718 = vrot.lane.b32.xlu0 %v2714, 127
        %v2719 = vpop.permute.xlu0 %2718
        %2720 = vrot.lane.b32.xlu0 %v2715, 127
        %v2721 = vpop.permute.xlu0 %2720
        %v2724 = vadd.f32 %v2668, %v2719
        %v2725 = vadd.f32 %v2669, %v2721
        %s2726 = sld [smem:[#allocation9 + $0xe]]
        %v2727 = vstv %s2726
        %v2728 = vmul.f32 %v2727, %v2644
        %v2729 = vmul.f32 %v2727, %v2645
        %2732 = vrot.lane.b32.xlu0 %v2728, 126
        %v2733 = vpop.permute.xlu0 %2732
        %2734 = vrot.lane.b32.xlu0 %v2729, 126
        %v2735 = vpop.permute.xlu0 %2734
        %v2738 = vadd.f32 %v2682, %v2733
        %v2739 = vadd.f32 %v2683, %v2735
        %s2740 = sld [smem:[#allocation9 + $0x32]]
        %v2741 = vstv %s2740
        %v2742 = vmul.f32 %v2741, %v2644
        %v2743 = vmul.f32 %v2741, %v2645
        %2746 = vrot.lane.b32.xlu0 %v2742, 126
        %v2747 = vpop.permute.xlu0 %2746
        %2748 = vrot.lane.b32.xlu0 %v2743, 126
        %v2749 = vpop.permute.xlu0 %2748
        %v2752 = vadd.f32 %v2696, %v2747
        %v2753 = vadd.f32 %v2697, %v2749
        %s2754 = sld [smem:[#allocation9 + $0x56]]
        %v2755 = vstv %s2754
        %v2756 = vmul.f32 %v2755, %v2644
        %v2757 = vmul.f32 %v2755, %v2645
        %2760 = vrot.lane.b32.xlu0 %v2756, 126
        %v2761 = vpop.permute.xlu0 %2760
        %2762 = vrot.lane.b32.xlu0 %v2757, 126
        %v2763 = vpop.permute.xlu0 %2762
        %v2766 = vadd.f32 %v2710, %v2761
        %v2767 = vadd.f32 %v2711, %v2763
        %s2768 = sld [smem:[#allocation9 + $0x7a]]
        %v2769 = vstv %s2768
        %v2770 = vmul.f32 %v2769, %v2644
        %v2771 = vmul.f32 %v2769, %v2645
        %2774 = vrot.lane.b32.xlu0 %v2770, 126
        %v2775 = vpop.permute.xlu0 %2774
        %2776 = vrot.lane.b32.xlu0 %v2771, 126
        %v2777 = vpop.permute.xlu0 %2776
        %v2780 = vadd.f32 %v2724, %v2775
        %v2781 = vadd.f32 %v2725, %v2777
        %v2782 = vld [vmem:[%s2047 + $0x2] sm:$0xff]
        %v2783 = vld [vmem:[%s2047 + $0xa] sm:$0xff]
        %s2784 = sld [smem:[#allocation9 + $0xf]]
        %v2785 = vstv %s2784
        %v2786 = vmul.f32 %v2785, %v2782
        %v2787 = vmul.f32 %v2785, %v2783
        %v2788 = vadd.f32 %v2738, %v2786
        %v2789 = vadd.f32 %v2739, %v2787
        %s2790 = sld [smem:[#allocation9 + $0x33]]
        %v2791 = vstv %s2790
        %v2792 = vmul.f32 %v2791, %v2782
        %v2793 = vmul.f32 %v2791, %v2783
        %v2794 = vadd.f32 %v2752, %v2792
        %v2795 = vadd.f32 %v2753, %v2793
        %s2796 = sld [smem:[#allocation9 + $0x57]]
        %v2797 = vstv %s2796
        %v2798 = vmul.f32 %v2797, %v2782
        %v2799 = vmul.f32 %v2797, %v2783
        %v2800 = vadd.f32 %v2766, %v2798
        %v2801 = vadd.f32 %v2767, %v2799
        %s2802 = sld [smem:[#allocation9 + $0x7b]]
        %v2803 = vstv %s2802
        %v2804 = vmul.f32 %v2803, %v2782
        %v2805 = vmul.f32 %v2803, %v2783
        %v2806 = vadd.f32 %v2780, %v2804
        %v2807 = vadd.f32 %v2781, %v2805
        %s2808 = sld [smem:[#allocation9 + $0x10]]
        %v2809 = vstv %s2808
        %v2810 = vmul.f32 %v2809, %v2782
        %v2811 = vmul.f32 %v2809, %v2783
        %2814 = vrot.lane.b32.xlu0 %v2810, 127
        %v2815 = vpop.permute.xlu0 %2814
        %2816 = vrot.lane.b32.xlu0 %v2811, 127
        %v2817 = vpop.permute.xlu0 %2816
        %v2820 = vadd.f32 %v2788, %v2815
        %v2821 = vadd.f32 %v2789, %v2817
        %s2822 = sld [smem:[#allocation9 + $0x34]]
        %v2823 = vstv %s2822
        %v2824 = vmul.f32 %v2823, %v2782
        %v2825 = vmul.f32 %v2823, %v2783
        %2828 = vrot.lane.b32.xlu0 %v2824, 127
        %v2829 = vpop.permute.xlu0 %2828
        %2830 = vrot.lane.b32.xlu0 %v2825, 127
        %v2831 = vpop.permute.xlu0 %2830
        %v2834 = vadd.f32 %v2794, %v2829
        %v2835 = vadd.f32 %v2795, %v2831
        %s2836 = sld [smem:[#allocation9 + $0x58]]
        %v2837 = vstv %s2836
        %v2838 = vmul.f32 %v2837, %v2782
        %v2839 = vmul.f32 %v2837, %v2783
        %2842 = vrot.lane.b32.xlu0 %v2838, 127
        %v2843 = vpop.permute.xlu0 %2842
        %2844 = vrot.lane.b32.xlu0 %v2839, 127
        %v2845 = vpop.permute.xlu0 %2844
        %v2848 = vadd.f32 %v2800, %v2843
        %v2849 = vadd.f32 %v2801, %v2845
        %s2850 = sld [smem:[#allocation9 + $0x7c]]
        %v2851 = vstv %s2850
        %v2852 = vmul.f32 %v2851, %v2782
        %v2853 = vmul.f32 %v2851, %v2783
        %2856 = vrot.lane.b32.xlu0 %v2852, 127
        %v2857 = vpop.permute.xlu0 %2856
        %2858 = vrot.lane.b32.xlu0 %v2853, 127
        %v2859 = vpop.permute.xlu0 %2858
        %v2862 = vadd.f32 %v2806, %v2857
        %v2863 = vadd.f32 %v2807, %v2859
        %s2864 = sld [smem:[#allocation9 + $0x11]]
        %v2865 = vstv %s2864
        %v2866 = vmul.f32 %v2865, %v2782
        %v2867 = vmul.f32 %v2865, %v2783
        %2870 = vrot.lane.b32.xlu0 %v2866, 126
        %v2871 = vpop.permute.xlu0 %2870
        %2872 = vrot.lane.b32.xlu0 %v2867, 126
        %v2873 = vpop.permute.xlu0 %2872
        %v2876 = vadd.f32 %v2820, %v2871
        %v2877 = vadd.f32 %v2821, %v2873
        %s2878 = sld [smem:[#allocation9 + $0x35]]
        %v2879 = vstv %s2878
        %v2880 = vmul.f32 %v2879, %v2782
        %v2881 = vmul.f32 %v2879, %v2783
        %2884 = vrot.lane.b32.xlu0 %v2880, 126
        %v2885 = vpop.permute.xlu0 %2884
        %2886 = vrot.lane.b32.xlu0 %v2881, 126
        %v2887 = vpop.permute.xlu0 %2886
        %v2890 = vadd.f32 %v2834, %v2885
        %v2891 = vadd.f32 %v2835, %v2887
        %s2892 = sld [smem:[#allocation9 + $0x59]]
        %v2893 = vstv %s2892
        %v2894 = vmul.f32 %v2893, %v2782
        %v2895 = vmul.f32 %v2893, %v2783
        %2898 = vrot.lane.b32.xlu0 %v2894, 126
        %v2899 = vpop.permute.xlu0 %2898
        %2900 = vrot.lane.b32.xlu0 %v2895, 126
        %v2901 = vpop.permute.xlu0 %2900
        %v2904 = vadd.f32 %v2848, %v2899
        %v2905 = vadd.f32 %v2849, %v2901
        %s2906 = sld [smem:[#allocation9 + $0x7d]]
        %v2907 = vstv %s2906
        %v2908 = vmul.f32 %v2907, %v2782
        %v2909 = vmul.f32 %v2907, %v2783
        %2912 = vrot.lane.b32.xlu0 %v2908, 126
        %v2913 = vpop.permute.xlu0 %2912
        %2914 = vrot.lane.b32.xlu0 %v2909, 126
        %v2915 = vpop.permute.xlu0 %2914
        %v2918 = vadd.f32 %v2862, %v2913
        %v2919 = vadd.f32 %v2863, %v2915
        %v2920 = vld [vmem:[%s2064] sm:$0xff]
        %v2921 = vld [vmem:[%s2064 + $0x8] sm:$0xff]
        %s2922 = sld [smem:[#allocation9 + $0x12]]
        %v2923 = vstv %s2922
        %v2924 = vmul.f32 %v2923, %v2920
        %v2925 = vmul.f32 %v2923, %v2921
        %v2926 = vadd.f32 %v2876, %v2924
        %v2927 = vadd.f32 %v2877, %v2925
        %s2928 = sld [smem:[#allocation9 + $0x36]]
        %v2929 = vstv %s2928
        %v2930 = vmul.f32 %v2929, %v2920
        %v2931 = vmul.f32 %v2929, %v2921
        %v2932 = vadd.f32 %v2890, %v2930
        %v2933 = vadd.f32 %v2891, %v2931
        %s2934 = sld [smem:[#allocation9 + $0x5a]]
        %v2935 = vstv %s2934
        %v2936 = vmul.f32 %v2935, %v2920
        %v2937 = vmul.f32 %v2935, %v2921
        %v2938 = vadd.f32 %v2904, %v2936
        %v2939 = vadd.f32 %v2905, %v2937
        %s2940 = sld [smem:[#allocation9 + $0x7e]]
        %v2941 = vstv %s2940
        %v2942 = vmul.f32 %v2941, %v2920
        %v2943 = vmul.f32 %v2941, %v2921
        %v2944 = vadd.f32 %v2918, %v2942
        %v2945 = vadd.f32 %v2919, %v2943
        %s2946 = sld [smem:[#allocation9 + $0x13]]
        %v2947 = vstv %s2946
        %v2948 = vmul.f32 %v2947, %v2920
        %v2949 = vmul.f32 %v2947, %v2921
        %2952 = vrot.lane.b32.xlu0 %v2948, 127
        %v2953 = vpop.permute.xlu0 %2952
        %2954 = vrot.lane.b32.xlu0 %v2949, 127
        %v2955 = vpop.permute.xlu0 %2954
        %v2958 = vadd.f32 %v2926, %v2953
        %v2959 = vadd.f32 %v2927, %v2955
        %s2960 = sld [smem:[#allocation9 + $0x37]]
        %v2961 = vstv %s2960
        %v2962 = vmul.f32 %v2961, %v2920
        %v2963 = vmul.f32 %v2961, %v2921
        %2966 = vrot.lane.b32.xlu0 %v2962, 127
        %v2967 = vpop.permute.xlu0 %2966
        %2968 = vrot.lane.b32.xlu0 %v2963, 127
        %v2969 = vpop.permute.xlu0 %2968
        %v2972 = vadd.f32 %v2932, %v2967
        %v2973 = vadd.f32 %v2933, %v2969
        %s2974 = sld [smem:[#allocation9 + $0x5b]]
        %v2975 = vstv %s2974
        %v2976 = vmul.f32 %v2975, %v2920
        %v2977 = vmul.f32 %v2975, %v2921
        %2980 = vrot.lane.b32.xlu0 %v2976, 127
        %v2981 = vpop.permute.xlu0 %2980
        %2982 = vrot.lane.b32.xlu0 %v2977, 127
        %v2983 = vpop.permute.xlu0 %2982
        %v2986 = vadd.f32 %v2938, %v2981
        %v2987 = vadd.f32 %v2939, %v2983
        %s2988 = sld [smem:[#allocation9 + $0x7f]]
        %v2989 = vstv %s2988
        %v2990 = vmul.f32 %v2989, %v2920
        %v2991 = vmul.f32 %v2989, %v2921
        %2994 = vrot.lane.b32.xlu0 %v2990, 127
        %v2995 = vpop.permute.xlu0 %2994
        %2996 = vrot.lane.b32.xlu0 %v2991, 127
        %v2997 = vpop.permute.xlu0 %2996
        %v3000 = vadd.f32 %v2944, %v2995
        %v3001 = vadd.f32 %v2945, %v2997
        %s3002 = sld [smem:[#allocation9 + $0x14]]
        %v3003 = vstv %s3002
        %v3004 = vmul.f32 %v3003, %v2920
        %v3005 = vmul.f32 %v3003, %v2921
        %3008 = vrot.lane.b32.xlu0 %v3004, 126
        %v3009 = vpop.permute.xlu0 %3008
        %3010 = vrot.lane.b32.xlu0 %v3005, 126
        %v3011 = vpop.permute.xlu0 %3010
        %v3014 = vadd.f32 %v2958, %v3009
        %v3015 = vadd.f32 %v2959, %v3011
        %s3016 = sld [smem:[#allocation9 + $0x38]]
        %v3017 = vstv %s3016
        %v3018 = vmul.f32 %v3017, %v2920
        %v3019 = vmul.f32 %v3017, %v2921
        %3022 = vrot.lane.b32.xlu0 %v3018, 126
        %v3023 = vpop.permute.xlu0 %3022
        %3024 = vrot.lane.b32.xlu0 %v3019, 126
        %v3025 = vpop.permute.xlu0 %3024
        %v3028 = vadd.f32 %v2972, %v3023
        %v3029 = vadd.f32 %v2973, %v3025
        %s3030 = sld [smem:[#allocation9 + $0x5c]]
        %v3031 = vstv %s3030
        %v3032 = vmul.f32 %v3031, %v2920
        %v3033 = vmul.f32 %v3031, %v2921
        %3036 = vrot.lane.b32.xlu0 %v3032, 126
        %v3037 = vpop.permute.xlu0 %3036
        %3038 = vrot.lane.b32.xlu0 %v3033, 126
        %v3039 = vpop.permute.xlu0 %3038
        %v3042 = vadd.f32 %v2986, %v3037
        %v3043 = vadd.f32 %v2987, %v3039
        %s3044 = sld [smem:[#allocation9 + $0x80]]
        %v3045 = vstv %s3044
        %v3046 = vmul.f32 %v3045, %v2920
        %v3047 = vmul.f32 %v3045, %v2921
        %3050 = vrot.lane.b32.xlu0 %v3046, 126
        %v3051 = vpop.permute.xlu0 %3050
        %3052 = vrot.lane.b32.xlu0 %v3047, 126
        %v3053 = vpop.permute.xlu0 %3052
        %v3056 = vadd.f32 %v3000, %v3051
        %v3057 = vadd.f32 %v3001, %v3053
        %v3058 = vld [vmem:[%s2064 + $0x1] sm:$0xff]
        %v3059 = vld [vmem:[%s2064 + $0x9] sm:$0xff]
        %s3060 = sld [smem:[#allocation9 + $0x15]]
        %v3061 = vstv %s3060
        %v3062 = vmul.f32 %v3061, %v3058
        %v3063 = vmul.f32 %v3061, %v3059
        %v3064 = vadd.f32 %v3014, %v3062
        %v3065 = vadd.f32 %v3015, %v3063
        %s3066 = sld [smem:[#allocation9 + $0x39]]
        %v3067 = vstv %s3066
        %v3068 = vmul.f32 %v3067, %v3058
        %v3069 = vmul.f32 %v3067, %v3059
        %v3070 = vadd.f32 %v3028, %v3068
        %v3071 = vadd.f32 %v3029, %v3069
        %s3072 = sld [smem:[#allocation9 + $0x5d]]
        %v3073 = vstv %s3072
        %v3074 = vmul.f32 %v3073, %v3058
        %v3075 = vmul.f32 %v3073, %v3059
        %v3076 = vadd.f32 %v3042, %v3074
        %v3077 = vadd.f32 %v3043, %v3075
        %s3078 = sld [smem:[#allocation9 + $0x81]]
        %v3079 = vstv %s3078
        %v3080 = vmul.f32 %v3079, %v3058
        %v3081 = vmul.f32 %v3079, %v3059
        %v3082 = vadd.f32 %v3056, %v3080
        %v3083 = vadd.f32 %v3057, %v3081
        %s3084 = sld [smem:[#allocation9 + $0x16]]
        %v3085 = vstv %s3084
        %v3086 = vmul.f32 %v3085, %v3058
        %v3087 = vmul.f32 %v3085, %v3059
        %3090 = vrot.lane.b32.xlu0 %v3086, 127
        %v3091 = vpop.permute.xlu0 %3090
        %3092 = vrot.lane.b32.xlu0 %v3087, 127
        %v3093 = vpop.permute.xlu0 %3092
        %v3096 = vadd.f32 %v3064, %v3091
        %v3097 = vadd.f32 %v3065, %v3093
        %s3098 = sld [smem:[#allocation9 + $0x3a]]
        %v3099 = vstv %s3098
        %v3100 = vmul.f32 %v3099, %v3058
        %v3101 = vmul.f32 %v3099, %v3059
        %3104 = vrot.lane.b32.xlu0 %v3100, 127
        %v3105 = vpop.permute.xlu0 %3104
        %3106 = vrot.lane.b32.xlu0 %v3101, 127
        %v3107 = vpop.permute.xlu0 %3106
        %v3110 = vadd.f32 %v3070, %v3105
        %v3111 = vadd.f32 %v3071, %v3107
        %s3112 = sld [smem:[#allocation9 + $0x5e]]
        %v3113 = vstv %s3112
        %v3114 = vmul.f32 %v3113, %v3058
        %v3115 = vmul.f32 %v3113, %v3059
        %3118 = vrot.lane.b32.xlu0 %v3114, 127
        %v3119 = vpop.permute.xlu0 %3118
        %3120 = vrot.lane.b32.xlu0 %v3115, 127
        %v3121 = vpop.permute.xlu0 %3120
        %v3124 = vadd.f32 %v3076, %v3119
        %v3125 = vadd.f32 %v3077, %v3121
        %s3126 = sld [smem:[#allocation9 + $0x82]]
        %v3127 = vstv %s3126
        %v3128 = vmul.f32 %v3127, %v3058
        %v3129 = vmul.f32 %v3127, %v3059
        %3132 = vrot.lane.b32.xlu0 %v3128, 127
        %v3133 = vpop.permute.xlu0 %3132
        %3134 = vrot.lane.b32.xlu0 %v3129, 127
        %v3135 = vpop.permute.xlu0 %3134
        %v3138 = vadd.f32 %v3082, %v3133
        %v3139 = vadd.f32 %v3083, %v3135
        %s3140 = sld [smem:[#allocation9 + $0x17]]
        %v3141 = vstv %s3140
        %v3142 = vmul.f32 %v3141, %v3058
        %v3143 = vmul.f32 %v3141, %v3059
        %3146 = vrot.lane.b32.xlu0 %v3142, 126
        %v3147 = vpop.permute.xlu0 %3146
        %3148 = vrot.lane.b32.xlu0 %v3143, 126
        %v3149 = vpop.permute.xlu0 %3148
        %v3152 = vadd.f32 %v3096, %v3147
        %v3153 = vadd.f32 %v3097, %v3149
        %s3154 = sld [smem:[#allocation9 + $0x3b]]
        %v3155 = vstv %s3154
        %v3156 = vmul.f32 %v3155, %v3058
        %v3157 = vmul.f32 %v3155, %v3059
        %3160 = vrot.lane.b32.xlu0 %v3156, 126
        %v3161 = vpop.permute.xlu0 %3160
        %3162 = vrot.lane.b32.xlu0 %v3157, 126
        %v3163 = vpop.permute.xlu0 %3162
        %v3166 = vadd.f32 %v3110, %v3161
        %v3167 = vadd.f32 %v3111, %v3163
        %s3168 = sld [smem:[#allocation9 + $0x5f]]
        %v3169 = vstv %s3168
        %v3170 = vmul.f32 %v3169, %v3058
        %v3171 = vmul.f32 %v3169, %v3059
        %3174 = vrot.lane.b32.xlu0 %v3170, 126
        %v3175 = vpop.permute.xlu0 %3174
        %3176 = vrot.lane.b32.xlu0 %v3171, 126
        %v3177 = vpop.permute.xlu0 %3176
        %v3180 = vadd.f32 %v3124, %v3175
        %v3181 = vadd.f32 %v3125, %v3177
        %s3182 = sld [smem:[#allocation9 + $0x83]]
        %v3183 = vstv %s3182
        %v3184 = vmul.f32 %v3183, %v3058
        %v3185 = vmul.f32 %v3183, %v3059
        %3188 = vrot.lane.b32.xlu0 %v3184, 126
        %v3189 = vpop.permute.xlu0 %3188
        %3190 = vrot.lane.b32.xlu0 %v3185, 126
        %v3191 = vpop.permute.xlu0 %3190
        %v3194 = vadd.f32 %v3138, %v3189
        %v3195 = vadd.f32 %v3139, %v3191
        %v3196 = vld [vmem:[%s2064 + $0x2] sm:$0xff]
        %v3197 = vld [vmem:[%s2064 + $0xa] sm:$0xff]
        %s3198 = sld [smem:[#allocation9 + $0x18]]
        %v3199 = vstv %s3198
        %v3200 = vmul.f32 %v3199, %v3196
        %v3201 = vmul.f32 %v3199, %v3197
        %v3202 = vadd.f32 %v3152, %v3200
        %v3203 = vadd.f32 %v3153, %v3201
        %s3204 = sld [smem:[#allocation9 + $0x3c]]
        %v3205 = vstv %s3204
        %v3206 = vmul.f32 %v3205, %v3196
        %v3207 = vmul.f32 %v3205, %v3197
        %v3208 = vadd.f32 %v3166, %v3206
        %v3209 = vadd.f32 %v3167, %v3207
        %s3210 = sld [smem:[#allocation9 + $0x60]]
        %v3211 = vstv %s3210
        %v3212 = vmul.f32 %v3211, %v3196
        %v3213 = vmul.f32 %v3211, %v3197
        %v3214 = vadd.f32 %v3180, %v3212
        %v3215 = vadd.f32 %v3181, %v3213
        %s3216 = sld [smem:[#allocation9 + $0x84]]
        %v3217 = vstv %s3216
        %v3218 = vmul.f32 %v3217, %v3196
        %v3219 = vmul.f32 %v3217, %v3197
        %v3220 = vadd.f32 %v3194, %v3218
        %v3221 = vadd.f32 %v3195, %v3219
        %s3222 = sld [smem:[#allocation9 + $0x19]]
        %v3223 = vstv %s3222
        %v3224 = vmul.f32 %v3223, %v3196
        %v3225 = vmul.f32 %v3223, %v3197
        %3228 = vrot.lane.b32.xlu0 %v3224, 127
        %v3229 = vpop.permute.xlu0 %3228
        %3230 = vrot.lane.b32.xlu0 %v3225, 127
        %v3231 = vpop.permute.xlu0 %3230
        %v3234 = vadd.f32 %v3202, %v3229
        %v3235 = vadd.f32 %v3203, %v3231
        %s3236 = sld [smem:[#allocation9 + $0x3d]]
        %v3237 = vstv %s3236
        %v3238 = vmul.f32 %v3237, %v3196
        %v3239 = vmul.f32 %v3237, %v3197
        %3242 = vrot.lane.b32.xlu0 %v3238, 127
        %v3243 = vpop.permute.xlu0 %3242
        %3244 = vrot.lane.b32.xlu0 %v3239, 127
        %v3245 = vpop.permute.xlu0 %3244
        %v3248 = vadd.f32 %v3208, %v3243
        %v3249 = vadd.f32 %v3209, %v3245
        %s3250 = sld [smem:[#allocation9 + $0x61]]
        %v3251 = vstv %s3250
        %v3252 = vmul.f32 %v3251, %v3196
        %v3253 = vmul.f32 %v3251, %v3197
        %3256 = vrot.lane.b32.xlu0 %v3252, 127
        %v3257 = vpop.permute.xlu0 %3256
        %3258 = vrot.lane.b32.xlu0 %v3253, 127
        %v3259 = vpop.permute.xlu0 %3258
        %v3262 = vadd.f32 %v3214, %v3257
        %v3263 = vadd.f32 %v3215, %v3259
        %s3264 = sld [smem:[#allocation9 + $0x85]]
        %v3265 = vstv %s3264
        %v3266 = vmul.f32 %v3265, %v3196
        %v3267 = vmul.f32 %v3265, %v3197
        %3270 = vrot.lane.b32.xlu0 %v3266, 127
        %v3271 = vpop.permute.xlu0 %3270
        %3272 = vrot.lane.b32.xlu0 %v3267, 127
        %v3273 = vpop.permute.xlu0 %3272
        %v3276 = vadd.f32 %v3220, %v3271
        %v3277 = vadd.f32 %v3221, %v3273
        %s3278 = sld [smem:[#allocation9 + $0x1a]]
        %v3279 = vstv %s3278
        %v3280 = vmul.f32 %v3279, %v3196
        %v3281 = vmul.f32 %v3279, %v3197
        %3284 = vrot.lane.b32.xlu0 %v3280, 126
        %v3285 = vpop.permute.xlu0 %3284
        %3286 = vrot.lane.b32.xlu0 %v3281, 126
        %v3287 = vpop.permute.xlu0 %3286
        %v3290 = vadd.f32 %v3234, %v3285
        %v3291 = vadd.f32 %v3235, %v3287
        %s3292 = sld [smem:[#allocation9 + $0x3e]]
        %v3293 = vstv %s3292
        %v3294 = vmul.f32 %v3293, %v3196
        %v3295 = vmul.f32 %v3293, %v3197
        %3298 = vrot.lane.b32.xlu0 %v3294, 126
        %v3299 = vpop.permute.xlu0 %3298
        %3300 = vrot.lane.b32.xlu0 %v3295, 126
        %v3301 = vpop.permute.xlu0 %3300
        %v3304 = vadd.f32 %v3248, %v3299
        %v3305 = vadd.f32 %v3249, %v3301
        %s3306 = sld [smem:[#allocation9 + $0x62]]
        %v3307 = vstv %s3306
        %v3308 = vmul.f32 %v3307, %v3196
        %v3309 = vmul.f32 %v3307, %v3197
        %3312 = vrot.lane.b32.xlu0 %v3308, 126
        %v3313 = vpop.permute.xlu0 %3312
        %3314 = vrot.lane.b32.xlu0 %v3309, 126
        %v3315 = vpop.permute.xlu0 %3314
        %v3318 = vadd.f32 %v3262, %v3313
        %v3319 = vadd.f32 %v3263, %v3315
        %s3320 = sld [smem:[#allocation9 + $0x86]]
        %v3321 = vstv %s3320
        %v3322 = vmul.f32 %v3321, %v3196
        %v3323 = vmul.f32 %v3321, %v3197
        %3326 = vrot.lane.b32.xlu0 %v3322, 126
        %v3327 = vpop.permute.xlu0 %3326
        %3328 = vrot.lane.b32.xlu0 %v3323, 126
        %v3329 = vpop.permute.xlu0 %3328
        %v3332 = vadd.f32 %v3276, %v3327
        %v3333 = vadd.f32 %v3277, %v3329
        %v3334 = vld [vmem:[%s2081] sm:$0xff]
        %v3335 = vld [vmem:[%s2081 + $0x8] sm:$0xff]
        %s3336 = sld [smem:[#allocation9 + $0x1b]]
        %v3337 = vstv %s3336
        %v3338 = vmul.f32 %v3337, %v3334
        %v3339 = vmul.f32 %v3337, %v3335
        %v3340 = vadd.f32 %v3290, %v3338
        %v3341 = vadd.f32 %v3291, %v3339
        %s3342 = sld [smem:[#allocation9 + $0x3f]]
        %v3343 = vstv %s3342
        %v3344 = vmul.f32 %v3343, %v3334
        %v3345 = vmul.f32 %v3343, %v3335
        %v3346 = vadd.f32 %v3304, %v3344
        %v3347 = vadd.f32 %v3305, %v3345
        %s3348 = sld [smem:[#allocation9 + $0x63]]
        %v3349 = vstv %s3348
        %v3350 = vmul.f32 %v3349, %v3334
        %v3351 = vmul.f32 %v3349, %v3335
        %v3352 = vadd.f32 %v3318, %v3350
        %v3353 = vadd.f32 %v3319, %v3351
        %s3354 = sld [smem:[#allocation9 + $0x87]]
        %v3355 = vstv %s3354
        %v3356 = vmul.f32 %v3355, %v3334
        %v3357 = vmul.f32 %v3355, %v3335
        %v3358 = vadd.f32 %v3332, %v3356
        %v3359 = vadd.f32 %v3333, %v3357
        %s3360 = sld [smem:[#allocation9 + $0x1c]]
        %v3361 = vstv %s3360
        %v3362 = vmul.f32 %v3361, %v3334
        %v3363 = vmul.f32 %v3361, %v3335
        %3366 = vrot.lane.b32.xlu0 %v3362, 127
        %v3367 = vpop.permute.xlu0 %3366
        %3368 = vrot.lane.b32.xlu0 %v3363, 127
        %v3369 = vpop.permute.xlu0 %3368
        %v3372 = vadd.f32 %v3340, %v3367
        %v3373 = vadd.f32 %v3341, %v3369
        %s3374 = sld [smem:[#allocation9 + $0x40]]
        %v3375 = vstv %s3374
        %v3376 = vmul.f32 %v3375, %v3334
        %v3377 = vmul.f32 %v3375, %v3335
        %3380 = vrot.lane.b32.xlu0 %v3376, 127
        %v3381 = vpop.permute.xlu0 %3380
        %3382 = vrot.lane.b32.xlu0 %v3377, 127
        %v3383 = vpop.permute.xlu0 %3382
        %v3386 = vadd.f32 %v3346, %v3381
        %v3387 = vadd.f32 %v3347, %v3383
        %s3388 = sld [smem:[#allocation9 + $0x64]]
        %v3389 = vstv %s3388
        %v3390 = vmul.f32 %v3389, %v3334
        %v3391 = vmul.f32 %v3389, %v3335
        %3394 = vrot.lane.b32.xlu0 %v3390, 127
        %v3395 = vpop.permute.xlu0 %3394
        %3396 = vrot.lane.b32.xlu0 %v3391, 127
        %v3397 = vpop.permute.xlu0 %3396
        %v3400 = vadd.f32 %v3352, %v3395
        %v3401 = vadd.f32 %v3353, %v3397
        %s3402 = sld [smem:[#allocation9 + $0x88]]
        %v3403 = vstv %s3402
        %v3404 = vmul.f32 %v3403, %v3334
        %v3405 = vmul.f32 %v3403, %v3335
        %3408 = vrot.lane.b32.xlu0 %v3404, 127
        %v3409 = vpop.permute.xlu0 %3408
        %3410 = vrot.lane.b32.xlu0 %v3405, 127
        %v3411 = vpop.permute.xlu0 %3410
        %v3414 = vadd.f32 %v3358, %v3409
        %v3415 = vadd.f32 %v3359, %v3411
        %s3416 = sld [smem:[#allocation9 + $0x1d]]
        %v3417 = vstv %s3416
        %v3418 = vmul.f32 %v3417, %v3334
        %v3419 = vmul.f32 %v3417, %v3335
        %3422 = vrot.lane.b32.xlu0 %v3418, 126
        %v3423 = vpop.permute.xlu0 %3422
        %3424 = vrot.lane.b32.xlu0 %v3419, 126
        %v3425 = vpop.permute.xlu0 %3424
        %v3428 = vadd.f32 %v3372, %v3423
        %v3429 = vadd.f32 %v3373, %v3425
        %s3430 = sld [smem:[#allocation9 + $0x41]]
        %v3431 = vstv %s3430
        %v3432 = vmul.f32 %v3431, %v3334
        %v3433 = vmul.f32 %v3431, %v3335
        %3436 = vrot.lane.b32.xlu0 %v3432, 126
        %v3437 = vpop.permute.xlu0 %3436
        %3438 = vrot.lane.b32.xlu0 %v3433, 126
        %v3439 = vpop.permute.xlu0 %3438
        %v3442 = vadd.f32 %v3386, %v3437
        %v3443 = vadd.f32 %v3387, %v3439
        %s3444 = sld [smem:[#allocation9 + $0x65]]
        %v3445 = vstv %s3444
        %v3446 = vmul.f32 %v3445, %v3334
        %v3447 = vmul.f32 %v3445, %v3335
        %3450 = vrot.lane.b32.xlu0 %v3446, 126
        %v3451 = vpop.permute.xlu0 %3450
        %3452 = vrot.lane.b32.xlu0 %v3447, 126
        %v3453 = vpop.permute.xlu0 %3452
        %v3456 = vadd.f32 %v3400, %v3451
        %v3457 = vadd.f32 %v3401, %v3453
        %s3458 = sld [smem:[#allocation9 + $0x89]]
        %v3459 = vstv %s3458
        %v3460 = vmul.f32 %v3459, %v3334
        %v3461 = vmul.f32 %v3459, %v3335
        %3464 = vrot.lane.b32.xlu0 %v3460, 126
        %v3465 = vpop.permute.xlu0 %3464
        %3466 = vrot.lane.b32.xlu0 %v3461, 126
        %v3467 = vpop.permute.xlu0 %3466
        %v3470 = vadd.f32 %v3414, %v3465
        %v3471 = vadd.f32 %v3415, %v3467
        %v3472 = vld [vmem:[%s2081 + $0x1] sm:$0xff]
        %v3473 = vld [vmem:[%s2081 + $0x9] sm:$0xff]
        %s3474 = sld [smem:[#allocation9 + $0x1e]]
        %v3475 = vstv %s3474
        %v3476 = vmul.f32 %v3475, %v3472
        %v3477 = vmul.f32 %v3475, %v3473
        %v3478 = vadd.f32 %v3428, %v3476
        %v3479 = vadd.f32 %v3429, %v3477
        %s3480 = sld [smem:[#allocation9 + $0x42]]
        %v3481 = vstv %s3480
        %v3482 = vmul.f32 %v3481, %v3472
        %v3483 = vmul.f32 %v3481, %v3473
        %v3484 = vadd.f32 %v3442, %v3482
        %v3485 = vadd.f32 %v3443, %v3483
        %s3486 = sld [smem:[#allocation9 + $0x66]]
        %v3487 = vstv %s3486
        %v3488 = vmul.f32 %v3487, %v3472
        %v3489 = vmul.f32 %v3487, %v3473
        %v3490 = vadd.f32 %v3456, %v3488
        %v3491 = vadd.f32 %v3457, %v3489
        %s3492 = sld [smem:[#allocation9 + $0x8a]]
        %v3493 = vstv %s3492
        %v3494 = vmul.f32 %v3493, %v3472
        %v3495 = vmul.f32 %v3493, %v3473
        %v3496 = vadd.f32 %v3470, %v3494
        %v3497 = vadd.f32 %v3471, %v3495
        %s3498 = sld [smem:[#allocation9 + $0x1f]]
        %v3499 = vstv %s3498
        %v3500 = vmul.f32 %v3499, %v3472
        %v3501 = vmul.f32 %v3499, %v3473
        %3504 = vrot.lane.b32.xlu0 %v3500, 127
        %v3505 = vpop.permute.xlu0 %3504
        %3506 = vrot.lane.b32.xlu0 %v3501, 127
        %v3507 = vpop.permute.xlu0 %3506
        %v3510 = vadd.f32 %v3478, %v3505
        %v3511 = vadd.f32 %v3479, %v3507
        %s3512 = sld [smem:[#allocation9 + $0x43]]
        %v3513 = vstv %s3512
        %v3514 = vmul.f32 %v3513, %v3472
        %v3515 = vmul.f32 %v3513, %v3473
        %3518 = vrot.lane.b32.xlu0 %v3514, 127
        %v3519 = vpop.permute.xlu0 %3518
        %3520 = vrot.lane.b32.xlu0 %v3515, 127
        %v3521 = vpop.permute.xlu0 %3520
        %v3524 = vadd.f32 %v3484, %v3519
        %v3525 = vadd.f32 %v3485, %v3521
        %s3526 = sld [smem:[#allocation9 + $0x67]]
        %v3527 = vstv %s3526
        %v3528 = vmul.f32 %v3527, %v3472
        %v3529 = vmul.f32 %v3527, %v3473
        %3532 = vrot.lane.b32.xlu0 %v3528, 127
        %v3533 = vpop.permute.xlu0 %3532
        %3534 = vrot.lane.b32.xlu0 %v3529, 127
        %v3535 = vpop.permute.xlu0 %3534
        %v3538 = vadd.f32 %v3490, %v3533
        %v3539 = vadd.f32 %v3491, %v3535
        %s3540 = sld [smem:[#allocation9 + $0x8b]]
        %v3541 = vstv %s3540
        %v3542 = vmul.f32 %v3541, %v3472
        %v3543 = vmul.f32 %v3541, %v3473
        %3546 = vrot.lane.b32.xlu0 %v3542, 127
        %v3547 = vpop.permute.xlu0 %3546
        %3548 = vrot.lane.b32.xlu0 %v3543, 127
        %v3549 = vpop.permute.xlu0 %3548
        %v3552 = vadd.f32 %v3496, %v3547
        %v3553 = vadd.f32 %v3497, %v3549
        %s3554 = sld [smem:[#allocation9 + $0x20]]
        %v3555 = vstv %s3554
        %v3556 = vmul.f32 %v3555, %v3472
        %v3557 = vmul.f32 %v3555, %v3473
        %3560 = vrot.lane.b32.xlu0 %v3556, 126
        %v3561 = vpop.permute.xlu0 %3560
        %3562 = vrot.lane.b32.xlu0 %v3557, 126
        %v3563 = vpop.permute.xlu0 %3562
        %v3566 = vadd.f32 %v3510, %v3561
        %v3567 = vadd.f32 %v3511, %v3563
        %s3568 = sld [smem:[#allocation9 + $0x44]]
        %v3569 = vstv %s3568
        %v3570 = vmul.f32 %v3569, %v3472
        %v3571 = vmul.f32 %v3569, %v3473
        %3574 = vrot.lane.b32.xlu0 %v3570, 126
        %v3575 = vpop.permute.xlu0 %3574
        %3576 = vrot.lane.b32.xlu0 %v3571, 126
        %v3577 = vpop.permute.xlu0 %3576
        %v3580 = vadd.f32 %v3524, %v3575
        %v3581 = vadd.f32 %v3525, %v3577
        %s3582 = sld [smem:[#allocation9 + $0x68]]
        %v3583 = vstv %s3582
        %v3584 = vmul.f32 %v3583, %v3472
        %v3585 = vmul.f32 %v3583, %v3473
        %3588 = vrot.lane.b32.xlu0 %v3584, 126
        %v3589 = vpop.permute.xlu0 %3588
        %3590 = vrot.lane.b32.xlu0 %v3585, 126
        %v3591 = vpop.permute.xlu0 %3590
        %v3594 = vadd.f32 %v3538, %v3589
        %v3595 = vadd.f32 %v3539, %v3591
        %s3596 = sld [smem:[#allocation9 + $0x8c]]
        %v3597 = vstv %s3596
        %v3598 = vmul.f32 %v3597, %v3472
        %v3599 = vmul.f32 %v3597, %v3473
        %3602 = vrot.lane.b32.xlu0 %v3598, 126
        %v3603 = vpop.permute.xlu0 %3602
        %3604 = vrot.lane.b32.xlu0 %v3599, 126
        %v3605 = vpop.permute.xlu0 %3604
        %v3608 = vadd.f32 %v3552, %v3603
        %v3609 = vadd.f32 %v3553, %v3605
        %v3610 = vld [vmem:[%s2081 + $0x2] sm:$0xff]
        %v3611 = vld [vmem:[%s2081 + $0xa] sm:$0xff]
        %s3612 = sld [smem:[#allocation9 + $0x21]]
        %v3613 = vstv %s3612
        %v3614 = vmul.f32 %v3613, %v3610
        %v3615 = vmul.f32 %v3613, %v3611
        %v3616 = vadd.f32 %v3566, %v3614
        %v3617 = vadd.f32 %v3567, %v3615
        %s3618 = sld [smem:[#allocation9 + $0x45]]
        %v3619 = vstv %s3618
        %v3620 = vmul.f32 %v3619, %v3610
        %v3621 = vmul.f32 %v3619, %v3611
        %v3622 = vadd.f32 %v3580, %v3620
        %v3623 = vadd.f32 %v3581, %v3621
        %s3624 = sld [smem:[#allocation9 + $0x69]]
        %v3625 = vstv %s3624
        %v3626 = vmul.f32 %v3625, %v3610
        %v3627 = vmul.f32 %v3625, %v3611
        %v3628 = vadd.f32 %v3594, %v3626
        %v3629 = vadd.f32 %v3595, %v3627
        %s3630 = sld [smem:[#allocation9 + $0x8d]]
        %v3631 = vstv %s3630
        %v3632 = vmul.f32 %v3631, %v3610
        %v3633 = vmul.f32 %v3631, %v3611
        %v3634 = vadd.f32 %v3608, %v3632
        %v3635 = vadd.f32 %v3609, %v3633
        %s3636 = sld [smem:[#allocation9 + $0x22]]
        %v3637 = vstv %s3636
        %v3638 = vmul.f32 %v3637, %v3610
        %v3639 = vmul.f32 %v3637, %v3611
        %3642 = vrot.lane.b32.xlu0 %v3638, 127
        %v3643 = vpop.permute.xlu0 %3642
        %3644 = vrot.lane.b32.xlu0 %v3639, 127
        %v3645 = vpop.permute.xlu0 %3644
        %v3648 = vadd.f32 %v3616, %v3643
        %v3649 = vadd.f32 %v3617, %v3645
        %s3650 = sld [smem:[#allocation9 + $0x46]]
        %v3651 = vstv %s3650
        %v3652 = vmul.f32 %v3651, %v3610
        %v3653 = vmul.f32 %v3651, %v3611
        %3656 = vrot.lane.b32.xlu0 %v3652, 127
        %v3657 = vpop.permute.xlu0 %3656
        %3658 = vrot.lane.b32.xlu0 %v3653, 127
        %v3659 = vpop.permute.xlu0 %3658
        %v3662 = vadd.f32 %v3622, %v3657
        %v3663 = vadd.f32 %v3623, %v3659
        %s3664 = sld [smem:[#allocation9 + $0x6a]]
        %v3665 = vstv %s3664
        %v3666 = vmul.f32 %v3665, %v3610
        %v3667 = vmul.f32 %v3665, %v3611
        %3670 = vrot.lane.b32.xlu0 %v3666, 127
        %v3671 = vpop.permute.xlu0 %3670
        %3672 = vrot.lane.b32.xlu0 %v3667, 127
        %v3673 = vpop.permute.xlu0 %3672
        %v3676 = vadd.f32 %v3628, %v3671
        %v3677 = vadd.f32 %v3629, %v3673
        %s3678 = sld [smem:[#allocation9 + $0x8e]]
        %v3679 = vstv %s3678
        %v3680 = vmul.f32 %v3679, %v3610
        %v3681 = vmul.f32 %v3679, %v3611
        %3684 = vrot.lane.b32.xlu0 %v3680, 127
        %v3685 = vpop.permute.xlu0 %3684
        %3686 = vrot.lane.b32.xlu0 %v3681, 127
        %v3687 = vpop.permute.xlu0 %3686
        %v3690 = vadd.f32 %v3634, %v3685
        %v3691 = vadd.f32 %v3635, %v3687
        %s3692 = sld [smem:[#allocation9 + $0x23]]
        %v3693 = vstv %s3692
        %v3694 = vmul.f32 %v3693, %v3610
        %v3695 = vmul.f32 %v3693, %v3611
        %3698 = vrot.lane.b32.xlu0 %v3694, 126
        %v3699 = vpop.permute.xlu0 %3698
        %3700 = vrot.lane.b32.xlu0 %v3695, 126
        %v3701 = vpop.permute.xlu0 %3700
        %v3704 = vadd.f32 %v3648, %v3699
        %v3705 = vadd.f32 %v3649, %v3701
        %s3706 = sld [smem:[#allocation9 + $0x47]]
        %v3707 = vstv %s3706
        %v3708 = vmul.f32 %v3707, %v3610
        %v3709 = vmul.f32 %v3707, %v3611
        %3712 = vrot.lane.b32.xlu0 %v3708, 126
        %v3713 = vpop.permute.xlu0 %3712
        %3714 = vrot.lane.b32.xlu0 %v3709, 126
        %v3715 = vpop.permute.xlu0 %3714
        %v3718 = vadd.f32 %v3662, %v3713
        %v3719 = vadd.f32 %v3663, %v3715
        %s3720 = sld [smem:[#allocation9 + $0x6b]]
        %v3721 = vstv %s3720
        %v3722 = vmul.f32 %v3721, %v3610
        %v3723 = vmul.f32 %v3721, %v3611
        %3726 = vrot.lane.b32.xlu0 %v3722, 126
        %v3727 = vpop.permute.xlu0 %3726
        %3728 = vrot.lane.b32.xlu0 %v3723, 126
        %v3729 = vpop.permute.xlu0 %3728
        %v3732 = vadd.f32 %v3676, %v3727
        %v3733 = vadd.f32 %v3677, %v3729
        %s3734 = sld [smem:[#allocation9 + $0x8f]]
        %v3735 = vstv %s3734
        %v3736 = vmul.f32 %v3735, %v3610
        %v3737 = vmul.f32 %v3735, %v3611
        %3740 = vrot.lane.b32.xlu0 %v3736, 126
        %v3741 = vpop.permute.xlu0 %3740
        %3742 = vrot.lane.b32.xlu0 %v3737, 126
        %v3743 = vpop.permute.xlu0 %3742
        %v3746 = vadd.f32 %v3690, %v3741
        %v3747 = vadd.f32 %v3691, %v3743
        %v3748 = vld [vmem:[%s274] sm:$0xff]
        %v3749 = vld [vmem:[%s274 + $0x8] sm:$0xff]
        %v3750 = vadd.f32 %v3704, %v3748
        %v3751 = vadd.f32 %v3705, %v3749
        %vm3752 = vcmask 130048
        %3753 = vst.msk [vmem:[%s269] sm:$0xff] %vm3752, %v3750
        %3754 = vst.msk [vmem:[%s269 + $0x8] sm:$0xff] %vm3752, %v3751
        %s3755 = scalar_lea.vmem %s274, 16
        %v3756 = vld [vmem:[%s3755] sm:$0xff]
        %v3757 = vld [vmem:[%s3755 + $0x8] sm:$0xff]
        %v3758 = vadd.f32 %v3718, %v3756
        %v3759 = vadd.f32 %v3719, %v3757
        %s3760 = scalar_lea.vmem %s269, 16 [#allocation12]
        %3761 = vst.msk [vmem:[%s3760] sm:$0xff] %vm3752, %v3758
        %3762 = vst.msk [vmem:[%s3760 + $0x8] sm:$0xff] %vm3752, %v3759
        %s3763 = scalar_lea.vmem %s274, 32
        %v3764 = vld [vmem:[%s3763] sm:$0xff]
        %v3765 = vld [vmem:[%s3763 + $0x8] sm:$0xff]
        %v3766 = vadd.f32 %v3732, %v3764
        %v3767 = vadd.f32 %v3733, %v3765
        %s3768 = scalar_lea.vmem %s269, 32 [#allocation12]
        %3769 = vst.msk [vmem:[%s3768] sm:$0xff] %vm3752, %v3766
        %3770 = vst.msk [vmem:[%s3768 + $0x8] sm:$0xff] %vm3752, %v3767
        %s3771 = scalar_lea.vmem %s274, 48
        %v3772 = vld [vmem:[%s3771] sm:$0xff]
        %v3773 = vld [vmem:[%s3771 + $0x8] sm:$0xff]
        %v3774 = vadd.f32 %v3746, %v3772
        %v3775 = vadd.f32 %v3747, %v3773
        %s3776 = scalar_lea.vmem %s269, 48 [#allocation12]
        %3777 = vst.msk [vmem:[%s3776] sm:$0xff] %vm3752, %v3774
        %3778 = vst.msk [vmem:[%s3776 + $0x8] sm:$0xff] %vm3752, %v3775
        %s3779 = sand.u32 %s140, 1
        %s3780 = scalar_lea.sflag [#allocation5], %s3779
        %s3781 = sand.u32 %s140, 1
        %s3782 = smul.addr %s3781, 64
        %s3783 = scalar_lea.vmem [#allocation12], %s3782
        // Predicated region
        $region57: #{rb_forward.1} parent=39 // pred_check
          %p3784 = pneg %p150
        $region58: #{rb_forward.1} parent=39 // pred_check_branch
          %3786 = sbr.rel (%p3784) target = $region60
        $region59: #{rb_forward.1} parent=39 // pred_region
          %s3788 = ssub.s32 1024, 1024
          %3789 = vsyncadd %s3780, %s3788
          %s3790 = smul.addr %s22, 8
          %s3791 = smul.addr %s3790, 128
          %s3792 = scalar_lea.hbm %s5, %s3791
          %s3793 = sshll.u32 %s3783, 4
          %s3794 = int_to_ptr.vmem [resolvable:$true] %s3793
          %3799 = dma.vmem_to_hbm [thread:$0]  %s3794, 1024, %s3792, %s3780, 128, 128, 8
        $region60: #{rb_forward.1} parent=39 // pred_fallthru
          _
      $region40: #{rb_forward.1} parent=5 // pred_fallthru
        _
      %p3800 = scmp.le.s32.totalorder 2, %s17
      // Predicated region
      $region61: #{rb_forward.1} parent=5 // pred_check
        %p3801 = pneg %p3800
      $region62: #{rb_forward.1} parent=5 // pred_check_branch
        %3803 = sbr.rel (%p3801) target = $region64
      $region63: #{rb_forward.1} parent=5 // pred_region
        %s3804 = ssub.s32 %s17, 2
        // Predicated region
        $region65: #{rb_forward.1} parent=63 // pred_check
          %p3805 = pneg %p156
        $region66: #{rb_forward.1} parent=63 // pred_check_branch
          %3807 = sbr.rel (%p3805) target = $region68
        $region67: #{rb_forward.1} parent=63 // pred_region
          %s3808 = sand.u32 %s141, 1
          %s3809 = scalar_lea.sflag [#allocation5], %s3808
          %s3810 = sand.u32 %s141, 1
          %s3811 = smul.addr %s3810, 64
          %s3812 = scalar_lea.vmem [#allocation12], %s3811
          %3813 = dma.done %s3809, 1024
        $region68: #{rb_forward.1} parent=63 // pred_fallthru
          _
      $region64: #{rb_forward.1} parent=5 // pred_fallthru
        _
    $region6: #{rb_forward.1} parent=1 // loop_footer
      %s21 = sadd.s32 1, %s17
    $region7: #{rb_forward.1} parent=1 // loop_footer_branch
      %16 = sbr.rel target = $region3
    $region8: #{rb_forward.1} parent=1 // loop_exit
      _
    %3814 = vsyncpa [#allocation5], 1
    %s3815 = scalar_lea.sflag [#allocation5], 1
    %3816 = vsyncpa %s3815, 1
    %3817 = vsyncpa [#allocation6], 1
    %s3818 = scalar_lea.sflag [#allocation6], 1
    %3819 = vsyncpa %s3818, 1
    %3820 = vsyncpa [#allocation8], 1
    %3821 = vsyncpa [#allocation11], 1

</llo_original>
